<compile_context>
chip_gen: v7x
topology: tpu7x:2x2x1
jax: 0.10.0
libtpu: 0.0.40
codegen_flags: <defaults>
</compile_context>

<pallas_src>
import math

import jax
import jax.numpy as jnp
from jax import lax
from jax.experimental import pallas as pl
from jax.experimental.pallas import tpu as pltpu


def _fused_conv_kernel(xq_ref, w1_ref, b1_ref, w2p_ref, b2_ref, out_ref, acol_ref):
    """Fused Conv2dSubsampling forward for one batch element.

    xq_ref:   (1, 4, 4, Dq, 1, Tq) f32   4x4 phase-split padded input
                                          xq[0,dp,tp,iq,0,jq] = x[4*jq+tp (time), 4*iq+dp (dim)]
    w1_ref:   (9, 1, C, 1) f32           conv1 weights, [kh*3+kw, 0, c, 0]
    b1_ref:   (1, C, 1) f32
    w2p_ref:  (K, C*D2) bf16             conv2 weights, im2col rows x interleaved columns
    b2_ref:   (1, C*D2) f32              bias repeated per (c*D2 + d) column
    out_ref:  (1, T2, C*D2) f32          final PyTorch layout, single lane-dense store
    acol_ref: (K, T2) bf16 VMEM scratch  conv2 im2col (lhs of the single matmul)
    """
    dq = xq_ref.shape[3]
    tq = xq_ref.shape[5]
    d1h, t1h = dq - 1, tq - 1            # parity-plane extents: D2+1, T2+1
    c = w1_ref.shape[2]
    t2 = out_ref.shape[1]

    # ---- stage 1: conv1 + bias + Hardtanh on the VPU, one stride-2 parity plane at a
    # time.  plane[ih, ci, jh] = hardtanh(conv1)[ci, 2*ih + pd, 2*jh + pt]
    for pd in range(2):                  # dim parity of the conv1 output
        for pt in range(2):              # time parity of the conv1 output
            acc = jnp.zeros((d1h, c, t1h), dtype=jnp.float32)
            for kh in range(3):
                for kw in range(3):
                    dsel = 2 * pd + kh   # input dim  offset within a stride-4 phase
                    tsel = 2 * pt + kw   # input time offset within a stride-4 phase
                    tap = xq_ref[0, dsel % 4, tsel % 4,
                                 dsel // 4:dsel // 4 + d1h, :,
                                 tsel // 4:tsel // 4 + t1h]        # (D1h, 1, T1h)
                    # (D1h, 1, T1h) * (1, C, 1) -> (D1h, C, T1h): size-1 broadcasts (VPU)
                    acc = acc + tap * w1_ref[kh * 3 + kw]
            acc = jnp.clip(acc + b1_ref[...], 0.0, 20.0)           # fused Hardtanh(0, 20)
            acc = acc.astype(acol_ref.dtype)                       # bf16 for the MXU

            # Scatter the plane into the conv2 im2col scratch (contiguous bf16 copies):
            #   acol[((kw2*2 + pd)*D1h + ih)*C + ci, q] = h1[ci, 2*ih + pd, 2*q + kw2]
            for kw2 in range(pt, 3, 2):  # conv2 time taps with kw2 % 2 == pt
                base = (kw2 * 2 + pd) * d1h * c
                j0 = kw2 // 2
                for ih in range(d1h):
                    acol_ref[base + ih * c:base + ih * c + c, :] = acc[ih, :, j0:j0 + t2]

    # ---- stage 2: conv2 + bias + Hardtanh as ONE MXU matmul, stored lane-dense ------
    # (K, T2)^T @ (K, C*D2) with fp32 accumulation; the column order of w2p already
    # encodes PyTorch's (c*D2 + d) feature interleave, so this IS the final layout.
    res = lax.dot_general(acol_ref[...], w2p_ref[...],
                          (((0,), (0,)), ((), ())),
                          preferred_element_type=jnp.float32)      # (T2, C*D2)
    out_ref[0] = jnp.clip(res + b2_ref[...], 0.0, 20.0).astype(out_ref.dtype)


def conv2d_extractor_forward(inputs, input_lengths, w1, b1, w2, b2):
    """Forward of Conv2dExtractor (Conv2dSubsampling conv stack, hardtanh activation).

    inputs: (B, T, D) f32, input_lengths: (B,) int
    w1: (C, 1, 3, 3), b1: (C,), w2: (C, C, 3, 3), b2: (C,)
    Returns (outputs (B, T2, C*D2) f32, output_lengths (B,) int32).
    """
    B, T, D = inputs.shape
    C = w1.shape[0]

    D1 = (D - 3) // 2 + 1
    T1 = (T - 3) // 2 + 1
    D2 = (D1 - 3) // 2 + 1
    T2 = (T1 - 3) // 2 + 1
    D1h, T1h = D2 + 1, T2 + 1            # conv1 parity-plane extents consumed by conv2
    Dq, Tq = D1h + 1, T1h + 1            # quarter-phase extents of the padded input
    N = C * D2                           # output feature dim (PyTorch c*D2 + d order)
    K = 3 * 2 * D1h * C                  # conv2 contraction: (kw2, dim parity, ih, c_in)

    # ---- input: pad + 4x4 phase split (one input-sized XLA transpose) ----------------
    # xq[b, dp, tp, iq, 0, jq] = inputs_padded[b, 4*jq + tp, 4*iq + dp]
    x_pad = jnp.pad(inputs.astype(jnp.float32),
                    ((0, 0), (0, 4 * Tq - T), (0, 4 * Dq - D)))
    xq = x_pad.reshape(B, Tq, 4, Dq, 4).transpose(0, 4, 2, 3, 1)
    xq = xq.reshape(B, 4, 4, Dq, 1, Tq)

    # ---- conv1 weights: w1m[kh*3+kw, 0, c, 0] = w1[c, 0, kh, kw] ---------------------
    w1m = jnp.transpose(w1[:, 0], (1, 2, 0)).reshape(9, 1, C, 1).astype(jnp.float32)
    b1m = b1.reshape(1, C, 1).astype(jnp.float32)

    # ---- conv2 weights, with the output interleave folded into the column order -----
    # w2p[((kw2*2 + pd)*D1h + ih)*C + ci, co*D2 + d] = w2[co, ci, kh2, kw2]
    #   where kh2 = (2*ih + pd) - 2*d; entries with kh2 outside [0, 2] are zero
    #   (including the unused ih = D2, pd = 1 "padding" rows).
    w2p6 = jnp.zeros((3, 2, D1h, C, C, D2), dtype=jnp.float32)
    eye_d = jnp.eye(D2, dtype=jnp.float32)
    for kh2 in range(3):
        for kw2 in range(3):
            wt = jnp.transpose(w2[:, :, kh2, kw2]).astype(jnp.float32)    # (ci, co)
            blk = wt[None, :, :, None] * eye_d[:, None, None, :]          # (d', ci, co, d)
            w2p6 = w2p6.at[kw2, kh2 % 2, kh2 // 2:kh2 // 2 + D2].add(blk)
    w2p = w2p6.reshape(K, N).astype(jnp.bfloat16)
    b2r = jnp.repeat(b2.astype(jnp.float32), D2).reshape(1, N)            # bias per column

    y = pl.pallas_call(
        _fused_conv_kernel,
        out_shape=jax.ShapeDtypeStruct((B, T2, N), jnp.float32),
        grid=(B,),
        in_specs=[
            pl.BlockSpec((1, 4, 4, Dq, 1, Tq), lambda b: (b, 0, 0, 0, 0, 0)),
            pl.BlockSpec((9, 1, C, 1), lambda b: (0, 0, 0, 0)),
            pl.BlockSpec((1, C, 1), lambda b: (0, 0, 0)),
            pl.BlockSpec((K, N), lambda b: (0, 0)),
            pl.BlockSpec((1, N), lambda b: (0, 0)),
        ],
        out_specs=pl.BlockSpec((1, T2, N), lambda b: (b, 0, 0)),
        scratch_shapes=[pltpu.VMEM((K, T2), jnp.bfloat16)],
        compiler_params=pltpu.CompilerParams(
            dimension_semantics=("parallel",),
            vmem_limit_bytes=32 * 1024 * 1024),
    )(xq, w1m, b1m, w2p, b2r)

    lengths = input_lengths.astype(jnp.int32)
    lengths = (lengths - 3) // 2 + 1
    lengths = (lengths - 3) // 2 + 1
    return y, lengths


def _reference_forward(inputs, input_lengths, w1, b1, w2, b2):
    """Plain-JAX fp32 reference matching the PyTorch module."""
    x = jnp.transpose(inputs, (0, 2, 1))[:, None, :, :]                   # (B, 1, D, T)
    y = lax.conv_general_dilated(x, w1, (2, 2), "VALID",
                                 dimension_numbers=("NCHW", "OIHW", "NCHW"))
    y = jnp.clip(y + b1[None, :, None, None], 0.0, 20.0)
    y = lax.conv_general_dilated(y, w2, (2, 2), "VALID",
                                 dimension_numbers=("NCHW", "OIHW", "NCHW"))
    y = jnp.clip(y + b2[None, :, None, None], 0.0, 20.0)
    b, c, d2, t2 = y.shape
    y = jnp.transpose(y, (0, 3, 1, 2)).reshape(b, t2, c * d2)
    l = input_lengths.astype(jnp.int32)
    l = (l - 3) // 2 + 1
    l = (l - 3) // 2 + 1
    return y, l


if __name__ == "__main__":
    key = jax.random.PRNGKey(0)
    kx, kw1, kb1, kw2, kb2 = jax.random.split(key, 5)

    # Small shapes: B=2, time=37, input_dim=20, out_channels=32
    # -> D1=9, T1=18, D2=4, T2=8, output feature dim C*D2 = 128 (lane-dense).
    B, T, D, C = 2, 37, 20, 32
    x = jax.random.normal(kx, (B, T, D), dtype=jnp.float32)
    w1 = 0.3 * jax.random.normal(kw1, (C, 1, 3, 3), dtype=jnp.float32)
    b1 = 0.1 * jax.random.normal(kb1, (C,), dtype=jnp.float32)
    w2 = (1.0 / math.sqrt(9 * C)) * jax.random.normal(kw2, (C, C, 3, 3), dtype=jnp.float32)
    b2 = 0.1 * jax.random.normal(kb2, (C,), dtype=jnp.float32)
    lengths = jnp.array([T, 30], dtype=jnp.int32)

    fwd = jax.jit(conv2d_extractor_forward)
    out, out_len = fwd(x, lengths, w1, b1, w2, b2)
    (out, out_len) = jax.block_until_ready((out, out_len))

    ref_out, ref_len = _reference_forward(x, lengths, w1, b1, w2, b2)
    assert out.shape == ref_out.shape, (out.shape, ref_out.shape)
    assert out.shape == (B, 8, C * 4), out.shape
    max_err = float(jnp.max(jnp.abs(out - ref_out)))
    assert max_err < 0.1, f"max abs error too large: {max_err}"
    assert bool(jnp.all(out_len == ref_len)), (out_len, ref_len)
    print("KERNEL_OK")
</pallas_src>

<mosaic_0001>
module attributes {stable_mosaic.version = 11 : i64} {
  func.func @_fused_conv_kernel(%arg0: i32, %arg1: memref<1x4x4x6x1x10xf32, #tpu.memory_space<vmem>>, %arg2: memref<9x1x32x1xf32, #tpu.memory_space<vmem>>, %arg3: memref<1x32x1xf32, #tpu.memory_space<vmem>>, %arg4: memref<960x128xbf16, #tpu.memory_space<vmem>>, %arg5: memref<1x128xf32, #tpu.memory_space<vmem>>, %arg6: memref<1x8x128xf32, #tpu.memory_space<vmem>>, %arg7: memref<960x8xbf16, #tpu.memory_space<vmem>>) attributes {dimension_semantics = [#tpu.dimension_semantics<parallel>], iteration_bounds = array<i64: 2>, scalar_prefetch = 0 : i64, scratch_operands = 1 : i64, tpu.core_type = #tpu.core_type<tc>, window_params = [{transform_indices = @transform_0, window_bounds = array<i64: 1, 4, 4, 6, 1, 10>}, {pipeline_mode = #tpu.pipeline_mode<synchronous>, transform_indices = @transform_1, window_bounds = array<i64: 9, 1, 32, 1>}, {pipeline_mode = #tpu.pipeline_mode<synchronous>, transform_indices = @transform_2, window_bounds = array<i64: 1, 32, 1>}, {pipeline_mode = #tpu.pipeline_mode<synchronous>, transform_indices = @transform_3, window_bounds = array<i64: 960, 128>}, {pipeline_mode = #tpu.pipeline_mode<synchronous>, transform_indices = @transform_4, window_bounds = array<i64: 1, 128>}, {transform_indices = @transform_5, window_bounds = array<i64: 1, 8, 128>}]} {
    %cst = arith.constant 0.000000e+00 : f32
    %0 = vector.broadcast %cst : f32 to vector<5x32x9xf32>
    %c0 = arith.constant 0 : index
    %c0_0 = arith.constant 0 : index
    %c0_1 = arith.constant 0 : index
    %c0_2 = arith.constant 0 : index
    %c0_3 = arith.constant 0 : index
    %c0_4 = arith.constant 0 : index
    %1 = vector.load %arg1[%c0, %c0_0, %c0_1, %c0_2, %c0_3, %c0_4] : memref<1x4x4x6x1x10xf32, #tpu.memory_space<vmem>>, vector<1x1x1x5x1x9xf32>
    %2 = vector.shape_cast %1 : vector<1x1x1x5x1x9xf32> to vector<5x1x9xf32>
    %c0_5 = arith.constant 0 : index
    %c0_6 = arith.constant 0 : index
    %c0_7 = arith.constant 0 : index
    %c0_8 = arith.constant 0 : index
    %3 = vector.load %arg2[%c0_5, %c0_6, %c0_7, %c0_8] : memref<9x1x32x1xf32, #tpu.memory_space<vmem>>, vector<1x1x32x1xf32>
    %4 = vector.shape_cast %3 : vector<1x1x32x1xf32> to vector<1x32x1xf32>
    %5 = vector.broadcast %2 : vector<5x1x9xf32> to vector<5x32x9xf32>
    %6 = vector.broadcast %4 : vector<1x32x1xf32> to vector<5x32x9xf32>
    %7 = arith.mulf %5, %6 : vector<5x32x9xf32>
    %8 = arith.addf %0, %7 : vector<5x32x9xf32>
    %c0_9 = arith.constant 0 : index
    %c0_10 = arith.constant 0 : index
    %c1 = arith.constant 1 : index
    %c0_11 = arith.constant 0 : index
    %c0_12 = arith.constant 0 : index
    %c0_13 = arith.constant 0 : index
    %9 = vector.load %arg1[%c0_9, %c0_10, %c1, %c0_11, %c0_12, %c0_13] : memref<1x4x4x6x1x10xf32, #tpu.memory_space<vmem>>, vector<1x1x1x5x1x9xf32>
    %10 = vector.shape_cast %9 : vector<1x1x1x5x1x9xf32> to vector<5x1x9xf32>
    %c1_14 = arith.constant 1 : index
    %c0_15 = arith.constant 0 : index
    %c0_16 = arith.constant 0 : index
    %c0_17 = arith.constant 0 : index
    %11 = vector.load %arg2[%c1_14, %c0_15, %c0_16, %c0_17] : memref<9x1x32x1xf32, #tpu.memory_space<vmem>>, vector<1x1x32x1xf32>
    %12 = vector.shape_cast %11 : vector<1x1x32x1xf32> to vector<1x32x1xf32>
    %13 = vector.broadcast %10 : vector<5x1x9xf32> to vector<5x32x9xf32>
    %14 = vector.broadcast %12 : vector<1x32x1xf32> to vector<5x32x9xf32>
    %15 = arith.mulf %13, %14 : vector<5x32x9xf32>
    %16 = arith.addf %8, %15 : vector<5x32x9xf32>
    %c0_18 = arith.constant 0 : index
    %c0_19 = arith.constant 0 : index
    %c2 = arith.constant 2 : index
    %c0_20 = arith.constant 0 : index
    %c0_21 = arith.constant 0 : index
    %c0_22 = arith.constant 0 : index
    %17 = vector.load %arg1[%c0_18, %c0_19, %c2, %c0_20, %c0_21, %c0_22] : memref<1x4x4x6x1x10xf32, #tpu.memory_space<vmem>>, vector<1x1x1x5x1x9xf32>
    %18 = vector.shape_cast %17 : vector<1x1x1x5x1x9xf32> to vector<5x1x9xf32>
    %c2_23 = arith.constant 2 : index
    %c0_24 = arith.constant 0 : index
    %c0_25 = arith.constant 0 : index
    %c0_26 = arith.constant 0 : index
    %19 = vector.load %arg2[%c2_23, %c0_24, %c0_25, %c0_26] : memref<9x1x32x1xf32, #tpu.memory_space<vmem>>, vector<1x1x32x1xf32>
    %20 = vector.shape_cast %19 : vector<1x1x32x1xf32> to vector<1x32x1xf32>
    %21 = vector.broadcast %18 : vector<5x1x9xf32> to vector<5x32x9xf32>
    %22 = vector.broadcast %20 : vector<1x32x1xf32> to vector<5x32x9xf32>
    %23 = arith.mulf %21, %22 : vector<5x32x9xf32>
    %24 = arith.addf %16, %23 : vector<5x32x9xf32>
    %c0_27 = arith.constant 0 : index
    %c1_28 = arith.constant 1 : index
    %c0_29 = arith.constant 0 : index
    %c0_30 = arith.constant 0 : index
    %c0_31 = arith.constant 0 : index
    %c0_32 = arith.constant 0 : index
    %25 = vector.load %arg1[%c0_27, %c1_28, %c0_29, %c0_30, %c0_31, %c0_32] : memref<1x4x4x6x1x10xf32, #tpu.memory_space<vmem>>, vector<1x1x1x5x1x9xf32>
    %26 = vector.shape_cast %25 : vector<1x1x1x5x1x9xf32> to vector<5x1x9xf32>
    %c3 = arith.constant 3 : index
    %c0_33 = arith.constant 0 : index
    %c0_34 = arith.constant 0 : index
    %c0_35 = arith.constant 0 : index
    %27 = vector.load %arg2[%c3, %c0_33, %c0_34, %c0_35] : memref<9x1x32x1xf32, #tpu.memory_space<vmem>>, vector<1x1x32x1xf32>
    %28 = vector.shape_cast %27 : vector<1x1x32x1xf32> to vector<1x32x1xf32>
    %29 = vector.broadcast %26 : vector<5x1x9xf32> to vector<5x32x9xf32>
    %30 = vector.broadcast %28 : vector<1x32x1xf32> to vector<5x32x9xf32>
    %31 = arith.mulf %29, %30 : vector<5x32x9xf32>
    %32 = arith.addf %24, %31 : vector<5x32x9xf32>
    %c0_36 = arith.constant 0 : index
    %c1_37 = arith.constant 1 : index
    %c1_38 = arith.constant 1 : index
    %c0_39 = arith.constant 0 : index
    %c0_40 = arith.constant 0 : index
    %c0_41 = arith.constant 0 : index
    %33 = vector.load %arg1[%c0_36, %c1_37, %c1_38, %c0_39, %c0_40, %c0_41] : memref<1x4x4x6x1x10xf32, #tpu.memory_space<vmem>>, vector<1x1x1x5x1x9xf32>
    %34 = vector.shape_cast %33 : vector<1x1x1x5x1x9xf32> to vector<5x1x9xf32>
    %c4 = arith.constant 4 : index
    %c0_42 = arith.constant 0 : index
    %c0_43 = arith.constant 0 : index
    %c0_44 = arith.constant 0 : index
    %35 = vector.load %arg2[%c4, %c0_42, %c0_43, %c0_44] : memref<9x1x32x1xf32, #tpu.memory_space<vmem>>, vector<1x1x32x1xf32>
    %36 = vector.shape_cast %35 : vector<1x1x32x1xf32> to vector<1x32x1xf32>
    %37 = vector.broadcast %34 : vector<5x1x9xf32> to vector<5x32x9xf32>
    %38 = vector.broadcast %36 : vector<1x32x1xf32> to vector<5x32x9xf32>
    %39 = arith.mulf %37, %38 : vector<5x32x9xf32>
    %40 = arith.addf %32, %39 : vector<5x32x9xf32>
    %c0_45 = arith.constant 0 : index
    %c1_46 = arith.constant 1 : index
    %c2_47 = arith.constant 2 : index
    %c0_48 = arith.constant 0 : index
    %c0_49 = arith.constant 0 : index
    %c0_50 = arith.constant 0 : index
    %41 = vector.load %arg1[%c0_45, %c1_46, %c2_47, %c0_48, %c0_49, %c0_50] : memref<1x4x4x6x1x10xf32, #tpu.memory_space<vmem>>, vector<1x1x1x5x1x9xf32>
    %42 = vector.shape_cast %41 : vector<1x1x1x5x1x9xf32> to vector<5x1x9xf32>
    %c5 = arith.constant 5 : index
    %c0_51 = arith.constant 0 : index
    %c0_52 = arith.constant 0 : index
    %c0_53 = arith.constant 0 : index
    %43 = vector.load %arg2[%c5, %c0_51, %c0_52, %c0_53] : memref<9x1x32x1xf32, #tpu.memory_space<vmem>>, vector<1x1x32x1xf32>
    %44 = vector.shape_cast %43 : vector<1x1x32x1xf32> to vector<1x32x1xf32>
    %45 = vector.broadcast %42 : vector<5x1x9xf32> to vector<5x32x9xf32>
    %46 = vector.broadcast %44 : vector<1x32x1xf32> to vector<5x32x9xf32>
    %47 = arith.mulf %45, %46 : vector<5x32x9xf32>
    %48 = arith.addf %40, %47 : vector<5x32x9xf32>
    %c0_54 = arith.constant 0 : index
    %c2_55 = arith.constant 2 : index
    %c0_56 = arith.constant 0 : index
    %c0_57 = arith.constant 0 : index
    %c0_58 = arith.constant 0 : index
    %c0_59 = arith.constant 0 : index
    %49 = vector.load %arg1[%c0_54, %c2_55, %c0_56, %c0_57, %c0_58, %c0_59] : memref<1x4x4x6x1x10xf32, #tpu.memory_space<vmem>>, vector<1x1x1x5x1x9xf32>
    %50 = vector.shape_cast %49 : vector<1x1x1x5x1x9xf32> to vector<5x1x9xf32>
    %c6 = arith.constant 6 : index
    %c0_60 = arith.constant 0 : index
    %c0_61 = arith.constant 0 : index
    %c0_62 = arith.constant 0 : index
    %51 = vector.load %arg2[%c6, %c0_60, %c0_61, %c0_62] : memref<9x1x32x1xf32, #tpu.memory_space<vmem>>, vector<1x1x32x1xf32>
    %52 = vector.shape_cast %51 : vector<1x1x32x1xf32> to vector<1x32x1xf32>
    %53 = vector.broadcast %50 : vector<5x1x9xf32> to vector<5x32x9xf32>
    %54 = vector.broadcast %52 : vector<1x32x1xf32> to vector<5x32x9xf32>
    %55 = arith.mulf %53, %54 : vector<5x32x9xf32>
    %56 = arith.addf %48, %55 : vector<5x32x9xf32>
    %c0_63 = arith.constant 0 : index
    %c2_64 = arith.constant 2 : index
    %c1_65 = arith.constant 1 : index
    %c0_66 = arith.constant 0 : index
    %c0_67 = arith.constant 0 : index
    %c0_68 = arith.constant 0 : index
    %57 = vector.load %arg1[%c0_63, %c2_64, %c1_65, %c0_66, %c0_67, %c0_68] : memref<1x4x4x6x1x10xf32, #tpu.memory_space<vmem>>, vector<1x1x1x5x1x9xf32>
    %58 = vector.shape_cast %57 : vector<1x1x1x5x1x9xf32> to vector<5x1x9xf32>
    %c7 = arith.constant 7 : index
    %c0_69 = arith.constant 0 : index
    %c0_70 = arith.constant 0 : index
    %c0_71 = arith.constant 0 : index
    %59 = vector.load %arg2[%c7, %c0_69, %c0_70, %c0_71] : memref<9x1x32x1xf32, #tpu.memory_space<vmem>>, vector<1x1x32x1xf32>
    %60 = vector.shape_cast %59 : vector<1x1x32x1xf32> to vector<1x32x1xf32>
    %61 = vector.broadcast %58 : vector<5x1x9xf32> to vector<5x32x9xf32>
    %62 = vector.broadcast %60 : vector<1x32x1xf32> to vector<5x32x9xf32>
    %63 = arith.mulf %61, %62 : vector<5x32x9xf32>
    %64 = arith.addf %56, %63 : vector<5x32x9xf32>
    %c0_72 = arith.constant 0 : index
    %c2_73 = arith.constant 2 : index
    %c2_74 = arith.constant 2 : index
    %c0_75 = arith.constant 0 : index
    %c0_76 = arith.constant 0 : index
    %c0_77 = arith.constant 0 : index
    %65 = vector.load %arg1[%c0_72, %c2_73, %c2_74, %c0_75, %c0_76, %c0_77] : memref<1x4x4x6x1x10xf32, #tpu.memory_space<vmem>>, vector<1x1x1x5x1x9xf32>
    %66 = vector.shape_cast %65 : vector<1x1x1x5x1x9xf32> to vector<5x1x9xf32>
    %c8 = arith.constant 8 : index
    %c0_78 = arith.constant 0 : index
    %c0_79 = arith.constant 0 : index
    %c0_80 = arith.constant 0 : index
    %67 = vector.load %arg2[%c8, %c0_78, %c0_79, %c0_80] : memref<9x1x32x1xf32, #tpu.memory_space<vmem>>, vector<1x1x32x1xf32>
    %68 = vector.shape_cast %67 : vector<1x1x32x1xf32> to vector<1x32x1xf32>
    %69 = vector.broadcast %66 : vector<5x1x9xf32> to vector<5x32x9xf32>
    %70 = vector.broadcast %68 : vector<1x32x1xf32> to vector<5x32x9xf32>
    %71 = arith.mulf %69, %70 : vector<5x32x9xf32>
    %72 = arith.addf %64, %71 : vector<5x32x9xf32>
    %c0_81 = arith.constant 0 : index
    %c0_82 = arith.constant 0 : index
    %c0_83 = arith.constant 0 : index
    %73 = vector.load %arg3[%c0_81, %c0_82, %c0_83] : memref<1x32x1xf32, #tpu.memory_space<vmem>>, vector<1x32x1xf32>
    %74 = vector.broadcast %73 : vector<1x32x1xf32> to vector<5x32x9xf32>
    %75 = arith.addf %72, %74 : vector<5x32x9xf32>
    %cst_84 = arith.constant 0.000000e+00 : f32
    %cst_85 = arith.constant 2.000000e+01 : f32
    %76 = vector.broadcast %cst_84 : f32 to vector<5x32x9xf32>
    %77 = arith.maximumf %76, %75 : vector<5x32x9xf32>
    %78 = vector.broadcast %cst_85 : f32 to vector<5x32x9xf32>
    %79 = arith.minimumf %78, %77 : vector<5x32x9xf32>
    %80 = arith.truncf %79 : vector<5x32x9xf32> to vector<5x32x9xbf16>
    %81 = vector.extract_strided_slice %80 {offsets = [0, 0, 0], sizes = [1, 32, 8], strides = [1, 1, 1]} : vector<5x32x9xbf16> to vector<1x32x8xbf16>
    %82 = vector.shape_cast %81 : vector<1x32x8xbf16> to vector<32x8xbf16>
    %c0_86 = arith.constant 0 : index
    %c0_87 = arith.constant 0 : index
    %83 = vector.load %arg7[%c0_86, %c0_87] : memref<960x8xbf16, #tpu.memory_space<vmem>>, vector<32x8xbf16>
    tpu.vector_store %arg7[%c0_86, %c0_87], %82 {strides = array<i32>} : memref<960x8xbf16, #tpu.memory_space<vmem>>, vector<32x8xbf16>,
    %84 = vector.extract_strided_slice %80 {offsets = [1, 0, 0], sizes = [1, 32, 8], strides = [1, 1, 1]} : vector<5x32x9xbf16> to vector<1x32x8xbf16>
    %85 = vector.shape_cast %84 : vector<1x32x8xbf16> to vector<32x8xbf16>
    %c32 = arith.constant 32 : index
    %c0_88 = arith.constant 0 : index
    %86 = vector.load %arg7[%c32, %c0_88] : memref<960x8xbf16, #tpu.memory_space<vmem>>, vector<32x8xbf16>
    tpu.vector_store %arg7[%c32, %c0_88], %85 {strides = array<i32>} : memref<960x8xbf16, #tpu.memory_space<vmem>>, vector<32x8xbf16>,
    %87 = vector.extract_strided_slice %80 {offsets = [2, 0, 0], sizes = [1, 32, 8], strides = [1, 1, 1]} : vector<5x32x9xbf16> to vector<1x32x8xbf16>
    %88 = vector.shape_cast %87 : vector<1x32x8xbf16> to vector<32x8xbf16>
    %c64 = arith.constant 64 : index
    %c0_89 = arith.constant 0 : index
    %89 = vector.load %arg7[%c64, %c0_89] : memref<960x8xbf16, #tpu.memory_space<vmem>>, vector<32x8xbf16>
    tpu.vector_store %arg7[%c64, %c0_89], %88 {strides = array<i32>} : memref<960x8xbf16, #tpu.memory_space<vmem>>, vector<32x8xbf16>,
    %90 = vector.extract_strided_slice %80 {offsets = [3, 0, 0], sizes = [1, 32, 8], strides = [1, 1, 1]} : vector<5x32x9xbf16> to vector<1x32x8xbf16>
    %91 = vector.shape_cast %90 : vector<1x32x8xbf16> to vector<32x8xbf16>
    %c96 = arith.constant 96 : index
    %c0_90 = arith.constant 0 : index
    %92 = vector.load %arg7[%c96, %c0_90] : memref<960x8xbf16, #tpu.memory_space<vmem>>, vector<32x8xbf16>
    tpu.vector_store %arg7[%c96, %c0_90], %91 {strides = array<i32>} : memref<960x8xbf16, #tpu.memory_space<vmem>>, vector<32x8xbf16>,
    %93 = vector.extract_strided_slice %80 {offsets = [4, 0, 0], sizes = [1, 32, 8], strides = [1, 1, 1]} : vector<5x32x9xbf16> to vector<1x32x8xbf16>
    %94 = vector.shape_cast %93 : vector<1x32x8xbf16> to vector<32x8xbf16>
    %c128 = arith.constant 128 : index
    %c0_91 = arith.constant 0 : index
    %95 = vector.load %arg7[%c128, %c0_91] : memref<960x8xbf16, #tpu.memory_space<vmem>>, vector<32x8xbf16>
    tpu.vector_store %arg7[%c128, %c0_91], %94 {strides = array<i32>} : memref<960x8xbf16, #tpu.memory_space<vmem>>, vector<32x8xbf16>,
    %96 = vector.extract_strided_slice %80 {offsets = [0, 0, 1], sizes = [1, 32, 8], strides = [1, 1, 1]} : vector<5x32x9xbf16> to vector<1x32x8xbf16>
    %97 = vector.shape_cast %96 : vector<1x32x8xbf16> to vector<32x8xbf16>
    %c640 = arith.constant 640 : index
    %c0_92 = arith.constant 0 : index
    %98 = vector.load %arg7[%c640, %c0_92] : memref<960x8xbf16, #tpu.memory_space<vmem>>, vector<32x8xbf16>
    tpu.vector_store %arg7[%c640, %c0_92], %97 {strides = array<i32>} : memref<960x8xbf16, #tpu.memory_space<vmem>>, vector<32x8xbf16>,
    %99 = vector.extract_strided_slice %80 {offsets = [1, 0, 1], sizes = [1, 32, 8], strides = [1, 1, 1]} : vector<5x32x9xbf16> to vector<1x32x8xbf16>
    %100 = vector.shape_cast %99 : vector<1x32x8xbf16> to vector<32x8xbf16>
    %c672 = arith.constant 672 : index
    %c0_93 = arith.constant 0 : index
    %101 = vector.load %arg7[%c672, %c0_93] : memref<960x8xbf16, #tpu.memory_space<vmem>>, vector<32x8xbf16>
    tpu.vector_store %arg7[%c672, %c0_93], %100 {strides = array<i32>} : memref<960x8xbf16, #tpu.memory_space<vmem>>, vector<32x8xbf16>,
    %102 = vector.extract_strided_slice %80 {offsets = [2, 0, 1], sizes = [1, 32, 8], strides = [1, 1, 1]} : vector<5x32x9xbf16> to vector<1x32x8xbf16>
    %103 = vector.shape_cast %102 : vector<1x32x8xbf16> to vector<32x8xbf16>
    %c704 = arith.constant 704 : index
    %c0_94 = arith.constant 0 : index
    %104 = vector.load %arg7[%c704, %c0_94] : memref<960x8xbf16, #tpu.memory_space<vmem>>, vector<32x8xbf16>
    tpu.vector_store %arg7[%c704, %c0_94], %103 {strides = array<i32>} : memref<960x8xbf16, #tpu.memory_space<vmem>>, vector<32x8xbf16>,
    %105 = vector.extract_strided_slice %80 {offsets = [3, 0, 1], sizes = [1, 32, 8], strides = [1, 1, 1]} : vector<5x32x9xbf16> to vector<1x32x8xbf16>
    %106 = vector.shape_cast %105 : vector<1x32x8xbf16> to vector<32x8xbf16>
    %c736 = arith.constant 736 : index
    %c0_95 = arith.constant 0 : index
    %107 = vector.load %arg7[%c736, %c0_95] : memref<960x8xbf16, #tpu.memory_space<vmem>>, vector<32x8xbf16>
    tpu.vector_store %arg7[%c736, %c0_95], %106 {strides = array<i32>} : memref<960x8xbf16, #tpu.memory_space<vmem>>, vector<32x8xbf16>,
    %108 = vector.extract_strided_slice %80 {offsets = [4, 0, 1], sizes = [1, 32, 8], strides = [1, 1, 1]} : vector<5x32x9xbf16> to vector<1x32x8xbf16>
    %109 = vector.shape_cast %108 : vector<1x32x8xbf16> to vector<32x8xbf16>
    %c768 = arith.constant 768 : index
    %c0_96 = arith.constant 0 : index
    %110 = vector.load %arg7[%c768, %c0_96] : memref<960x8xbf16, #tpu.memory_space<vmem>>, vector<32x8xbf16>
    tpu.vector_store %arg7[%c768, %c0_96], %109 {strides = array<i32>} : memref<960x8xbf16, #tpu.memory_space<vmem>>, vector<32x8xbf16>,
    %cst_97 = arith.constant 0.000000e+00 : f32
    %111 = vector.broadcast %cst_97 : f32 to vector<5x32x9xf32>
    %c0_98 = arith.constant 0 : index
    %c0_99 = arith.constant 0 : index
    %c2_100 = arith.constant 2 : index
    %c0_101 = arith.constant 0 : index
    %c0_102 = arith.constant 0 : index
    %c0_103 = arith.constant 0 : index
    %112 = vector.load %arg1[%c0_98, %c0_99, %c2_100, %c0_101, %c0_102, %c0_103] : memref<1x4x4x6x1x10xf32, #tpu.memory_space<vmem>>, vector<1x1x1x5x1x9xf32>
    %113 = vector.shape_cast %112 : vector<1x1x1x5x1x9xf32> to vector<5x1x9xf32>
    %c0_104 = arith.constant 0 : index
    %c0_105 = arith.constant 0 : index
    %c0_106 = arith.constant 0 : index
    %c0_107 = arith.constant 0 : index
    %114 = vector.load %arg2[%c0_104, %c0_105, %c0_106, %c0_107] : memref<9x1x32x1xf32, #tpu.memory_space<vmem>>, vector<1x1x32x1xf32>
    %115 = vector.shape_cast %114 : vector<1x1x32x1xf32> to vector<1x32x1xf32>
    %116 = vector.broadcast %113 : vector<5x1x9xf32> to vector<5x32x9xf32>
    %117 = vector.broadcast %115 : vector<1x32x1xf32> to vector<5x32x9xf32>
    %118 = arith.mulf %116, %117 : vector<5x32x9xf32>
    %119 = arith.addf %111, %118 : vector<5x32x9xf32>
    %c0_108 = arith.constant 0 : index
    %c0_109 = arith.constant 0 : index
    %c3_110 = arith.constant 3 : index
    %c0_111 = arith.constant 0 : index
    %c0_112 = arith.constant 0 : index
    %c0_113 = arith.constant 0 : index
    %120 = vector.load %arg1[%c0_108, %c0_109, %c3_110, %c0_111, %c0_112, %c0_113] : memref<1x4x4x6x1x10xf32, #tpu.memory_space<vmem>>, vector<1x1x1x5x1x9xf32>
    %121 = vector.shape_cast %120 : vector<1x1x1x5x1x9xf32> to vector<5x1x9xf32>
    %c1_114 = arith.constant 1 : index
    %c0_115 = arith.constant 0 : index
    %c0_116 = arith.constant 0 : index
    %c0_117 = arith.constant 0 : index
    %122 = vector.load %arg2[%c1_114, %c0_115, %c0_116, %c0_117] : memref<9x1x32x1xf32, #tpu.memory_space<vmem>>, vector<1x1x32x1xf32>
    %123 = vector.shape_cast %122 : vector<1x1x32x1xf32> to vector<1x32x1xf32>
    %124 = vector.broadcast %121 : vector<5x1x9xf32> to vector<5x32x9xf32>
    %125 = vector.broadcast %123 : vector<1x32x1xf32> to vector<5x32x9xf32>
    %126 = arith.mulf %124, %125 : vector<5x32x9xf32>
    %127 = arith.addf %119, %126 : vector<5x32x9xf32>
    %c0_118 = arith.constant 0 : index
    %c0_119 = arith.constant 0 : index
    %c0_120 = arith.constant 0 : index
    %c0_121 = arith.constant 0 : index
    %c0_122 = arith.constant 0 : index
    %c1_123 = arith.constant 1 : index
    %128 = vector.load %arg1[%c0_118, %c0_119, %c0_120, %c0_121, %c0_122, %c1_123] : memref<1x4x4x6x1x10xf32, #tpu.memory_space<vmem>>, vector<1x1x1x5x1x9xf32>
    %129 = vector.shape_cast %128 : vector<1x1x1x5x1x9xf32> to vector<5x1x9xf32>
    %c2_124 = arith.constant 2 : index
    %c0_125 = arith.constant 0 : index
    %c0_126 = arith.constant 0 : index
    %c0_127 = arith.constant 0 : index
    %130 = vector.load %arg2[%c2_124, %c0_125, %c0_126, %c0_127] : memref<9x1x32x1xf32, #tpu.memory_space<vmem>>, vector<1x1x32x1xf32>
    %131 = vector.shape_cast %130 : vector<1x1x32x1xf32> to vector<1x32x1xf32>
    %132 = vector.broadcast %129 : vector<5x1x9xf32> to vector<5x32x9xf32>
    %133 = vector.broadcast %131 : vector<1x32x1xf32> to vector<5x32x9xf32>
    %134 = arith.mulf %132, %133 : vector<5x32x9xf32>
    %135 = arith.addf %127, %134 : vector<5x32x9xf32>
    %c0_128 = arith.constant 0 : index
    %c1_129 = arith.constant 1 : index
    %c2_130 = arith.constant 2 : index
    %c0_131 = arith.constant 0 : index
    %c0_132 = arith.constant 0 : index
    %c0_133 = arith.constant 0 : index
    %136 = vector.load %arg1[%c0_128, %c1_129, %c2_130, %c0_131, %c0_132, %c0_133] : memref<1x4x4x6x1x10xf32, #tpu.memory_space<vmem>>, vector<1x1x1x5x1x9xf32>
    %137 = vector.shape_cast %136 : vector<1x1x1x5x1x9xf32> to vector<5x1x9xf32>
    %c3_134 = arith.constant 3 : index
    %c0_135 = arith.constant 0 : index
    %c0_136 = arith.constant 0 : index
    %c0_137 = arith.constant 0 : index
    %138 = vector.load %arg2[%c3_134, %c0_135, %c0_136, %c0_137] : memref<9x1x32x1xf32, #tpu.memory_space<vmem>>, vector<1x1x32x1xf32>
    %139 = vector.shape_cast %138 : vector<1x1x32x1xf32> to vector<1x32x1xf32>
    %140 = vector.broadcast %137 : vector<5x1x9xf32> to vector<5x32x9xf32>
    %141 = vector.broadcast %139 : vector<1x32x1xf32> to vector<5x32x9xf32>
    %142 = arith.mulf %140, %141 : vector<5x32x9xf32>
    %143 = arith.addf %135, %142 : vector<5x32x9xf32>
    %c0_138 = arith.constant 0 : index
    %c1_139 = arith.constant 1 : index
    %c3_140 = arith.constant 3 : index
    %c0_141 = arith.constant 0 : index
    %c0_142 = arith.constant 0 : index
    %c0_143 = arith.constant 0 : index
    %144 = vector.load %arg1[%c0_138, %c1_139, %c3_140, %c0_141, %c0_142, %c0_143] : memref<1x4x4x6x1x10xf32, #tpu.memory_space<vmem>>, vector<1x1x1x5x1x9xf32>
    %145 = vector.shape_cast %144 : vector<1x1x1x5x1x9xf32> to vector<5x1x9xf32>
    %c4_144 = arith.constant 4 : index
    %c0_145 = arith.constant 0 : index
    %c0_146 = arith.constant 0 : index
    %c0_147 = arith.constant 0 : index
    %146 = vector.load %arg2[%c4_144, %c0_145, %c0_146, %c0_147] : memref<9x1x32x1xf32, #tpu.memory_space<vmem>>, vector<1x1x32x1xf32>
    %147 = vector.shape_cast %146 : vector<1x1x32x1xf32> to vector<1x32x1xf32>
    %148 = vector.broadcast %145 : vector<5x1x9xf32> to vector<5x32x9xf32>
    %149 = vector.broadcast %147 : vector<1x32x1xf32> to vector<5x32x9xf32>
    %150 = arith.mulf %148, %149 : vector<5x32x9xf32>
    %151 = arith.addf %143, %150 : vector<5x32x9xf32>
    %c0_148 = arith.constant 0 : index
    %c1_149 = arith.constant 1 : index
    %c0_150 = arith.constant 0 : index
    %c0_151 = arith.constant 0 : index
    %c0_152 = arith.constant 0 : index
    %c1_153 = arith.constant 1 : index
    %152 = vector.load %arg1[%c0_148, %c1_149, %c0_150, %c0_151, %c0_152, %c1_153] : memref<1x4x4x6x1x10xf32, #tpu.memory_space<vmem>>, vector<1x1x1x5x1x9xf32>
    %153 = vector.shape_cast %152 : vector<1x1x1x5x1x9xf32> to vector<5x1x9xf32>
    %c5_154 = arith.constant 5 : index
    %c0_155 = arith.constant 0 : index
    %c0_156 = arith.constant 0 : index
    %c0_157 = arith.constant 0 : index
    %154 = vector.load %arg2[%c5_154, %c0_155, %c0_156, %c0_157] : memref<9x1x32x1xf32, #tpu.memory_space<vmem>>, vector<1x1x32x1xf32>
    %155 = vector.shape_cast %154 : vector<1x1x32x1xf32> to vector<1x32x1xf32>
    %156 = vector.broadcast %153 : vector<5x1x9xf32> to vector<5x32x9xf32>
    %157 = vector.broadcast %155 : vector<1x32x1xf32> to vector<5x32x9xf32>
    %158 = arith.mulf %156, %157 : vector<5x32x9xf32>
    %159 = arith.addf %151, %158 : vector<5x32x9xf32>
    %c0_158 = arith.constant 0 : index
    %c2_159 = arith.constant 2 : index
    %c2_160 = arith.constant 2 : index
    %c0_161 = arith.constant 0 : index
    %c0_162 = arith.constant 0 : index
    %c0_163 = arith.constant 0 : index
    %160 = vector.load %arg1[%c0_158, %c2_159, %c2_160, %c0_161, %c0_162, %c0_163] : memref<1x4x4x6x1x10xf32, #tpu.memory_space<vmem>>, vector<1x1x1x5x1x9xf32>
    %161 = vector.shape_cast %160 : vector<1x1x1x5x1x9xf32> to vector<5x1x9xf32>
    %c6_164 = arith.constant 6 : index
    %c0_165 = arith.constant 0 : index
    %c0_166 = arith.constant 0 : index
    %c0_167 = arith.constant 0 : index
    %162 = vector.load %arg2[%c6_164, %c0_165, %c0_166, %c0_167] : memref<9x1x32x1xf32, #tpu.memory_space<vmem>>, vector<1x1x32x1xf32>
    %163 = vector.shape_cast %162 : vector<1x1x32x1xf32> to vector<1x32x1xf32>
    %164 = vector.broadcast %161 : vector<5x1x9xf32> to vector<5x32x9xf32>
    %165 = vector.broadcast %163 : vector<1x32x1xf32> to vector<5x32x9xf32>
    %166 = arith.mulf %164, %165 : vector<5x32x9xf32>
    %167 = arith.addf %159, %166 : vector<5x32x9xf32>
    %c0_168 = arith.constant 0 : index
    %c2_169 = arith.constant 2 : index
    %c3_170 = arith.constant 3 : index
    %c0_171 = arith.constant 0 : index
    %c0_172 = arith.constant 0 : index
    %c0_173 = arith.constant 0 : index
    %168 = vector.load %arg1[%c0_168, %c2_169, %c3_170, %c0_171, %c0_172, %c0_173] : memref<1x4x4x6x1x10xf32, #tpu.memory_space<vmem>>, vector<1x1x1x5x1x9xf32>
    %169 = vector.shape_cast %168 : vector<1x1x1x5x1x9xf32> to vector<5x1x9xf32>
    %c7_174 = arith.constant 7 : index
    %c0_175 = arith.constant 0 : index
    %c0_176 = arith.constant 0 : index
    %c0_177 = arith.constant 0 : index
    %170 = vector.load %arg2[%c7_174, %c0_175, %c0_176, %c0_177] : memref<9x1x32x1xf32, #tpu.memory_space<vmem>>, vector<1x1x32x1xf32>
    %171 = vector.shape_cast %170 : vector<1x1x32x1xf32> to vector<1x32x1xf32>
    %172 = vector.broadcast %169 : vector<5x1x9xf32> to vector<5x32x9xf32>
    %173 = vector.broadcast %171 : vector<1x32x1xf32> to vector<5x32x9xf32>
    %174 = arith.mulf %172, %173 : vector<5x32x9xf32>
    %175 = arith.addf %167, %174 : vector<5x32x9xf32>
    %c0_178 = arith.constant 0 : index
    %c2_179 = arith.constant 2 : index
    %c0_180 = arith.constant 0 : index
    %c0_181 = arith.constant 0 : index
    %c0_182 = arith.constant 0 : index
    %c1_183 = arith.constant 1 : index
    %176 = vector.load %arg1[%c0_178, %c2_179, %c0_180, %c0_181, %c0_182, %c1_183] : memref<1x4x4x6x1x10xf32, #tpu.memory_space<vmem>>, vector<1x1x1x5x1x9xf32>
    %177 = vector.shape_cast %176 : vector<1x1x1x5x1x9xf32> to vector<5x1x9xf32>
    %c8_184 = arith.constant 8 : index
    %c0_185 = arith.constant 0 : index
    %c0_186 = arith.constant 0 : index
    %c0_187 = arith.constant 0 : index
    %178 = vector.load %arg2[%c8_184, %c0_185, %c0_186, %c0_187] : memref<9x1x32x1xf32, #tpu.memory_space<vmem>>, vector<1x1x32x1xf32>
    %179 = vector.shape_cast %178 : vector<1x1x32x1xf32> to vector<1x32x1xf32>
    %180 = vector.broadcast %177 : vector<5x1x9xf32> to vector<5x32x9xf32>
    %181 = vector.broadcast %179 : vector<1x32x1xf32> to vector<5x32x9xf32>
    %182 = arith.mulf %180, %181 : vector<5x32x9xf32>
    %183 = arith.addf %175, %182 : vector<5x32x9xf32>
    %c0_188 = arith.constant 0 : index
    %c0_189 = arith.constant 0 : index
    %c0_190 = arith.constant 0 : index
    %184 = vector.load %arg3[%c0_188, %c0_189, %c0_190] : memref<1x32x1xf32, #tpu.memory_space<vmem>>, vector<1x32x1xf32>
    %185 = vector.broadcast %184 : vector<1x32x1xf32> to vector<5x32x9xf32>
    %186 = arith.addf %183, %185 : vector<5x32x9xf32>
    %cst_191 = arith.constant 0.000000e+00 : f32
    %cst_192 = arith.constant 2.000000e+01 : f32
    %187 = vector.broadcast %cst_191 : f32 to vector<5x32x9xf32>
    %188 = arith.maximumf %187, %186 : vector<5x32x9xf32>
    %189 = vector.broadcast %cst_192 : f32 to vector<5x32x9xf32>
    %190 = arith.minimumf %189, %188 : vector<5x32x9xf32>
    %191 = arith.truncf %190 : vector<5x32x9xf32> to vector<5x32x9xbf16>
    %192 = vector.extract_strided_slice %191 {offsets = [0, 0, 0], sizes = [1, 32, 8], strides = [1, 1, 1]} : vector<5x32x9xbf16> to vector<1x32x8xbf16>
    %193 = vector.shape_cast %192 : vector<1x32x8xbf16> to vector<32x8xbf16>
    %c320 = arith.constant 320 : index
    %c0_193 = arith.constant 0 : index
    %194 = vector.load %arg7[%c320, %c0_193] : memref<960x8xbf16, #tpu.memory_space<vmem>>, vector<32x8xbf16>
    tpu.vector_store %arg7[%c320, %c0_193], %193 {strides = array<i32>} : memref<960x8xbf16, #tpu.memory_space<vmem>>, vector<32x8xbf16>,
    %195 = vector.extract_strided_slice %191 {offsets = [1, 0, 0], sizes = [1, 32, 8], strides = [1, 1, 1]} : vector<5x32x9xbf16> to vector<1x32x8xbf16>
    %196 = vector.shape_cast %195 : vector<1x32x8xbf16> to vector<32x8xbf16>
    %c352 = arith.constant 352 : index
    %c0_194 = arith.constant 0 : index
    %197 = vector.load %arg7[%c352, %c0_194] : memref<960x8xbf16, #tpu.memory_space<vmem>>, vector<32x8xbf16>
    tpu.vector_store %arg7[%c352, %c0_194], %196 {strides = array<i32>} : memref<960x8xbf16, #tpu.memory_space<vmem>>, vector<32x8xbf16>,
    %198 = vector.extract_strided_slice %191 {offsets = [2, 0, 0], sizes = [1, 32, 8], strides = [1, 1, 1]} : vector<5x32x9xbf16> to vector<1x32x8xbf16>
    %199 = vector.shape_cast %198 : vector<1x32x8xbf16> to vector<32x8xbf16>
    %c384 = arith.constant 384 : index
    %c0_195 = arith.constant 0 : index
    %200 = vector.load %arg7[%c384, %c0_195] : memref<960x8xbf16, #tpu.memory_space<vmem>>, vector<32x8xbf16>
    tpu.vector_store %arg7[%c384, %c0_195], %199 {strides = array<i32>} : memref<960x8xbf16, #tpu.memory_space<vmem>>, vector<32x8xbf16>,
    %201 = vector.extract_strided_slice %191 {offsets = [3, 0, 0], sizes = [1, 32, 8], strides = [1, 1, 1]} : vector<5x32x9xbf16> to vector<1x32x8xbf16>
    %202 = vector.shape_cast %201 : vector<1x32x8xbf16> to vector<32x8xbf16>
    %c416 = arith.constant 416 : index
    %c0_196 = arith.constant 0 : index
    %203 = vector.load %arg7[%c416, %c0_196] : memref<960x8xbf16, #tpu.memory_space<vmem>>, vector<32x8xbf16>
    tpu.vector_store %arg7[%c416, %c0_196], %202 {strides = array<i32>} : memref<960x8xbf16, #tpu.memory_space<vmem>>, vector<32x8xbf16>,
    %204 = vector.extract_strided_slice %191 {offsets = [4, 0, 0], sizes = [1, 32, 8], strides = [1, 1, 1]} : vector<5x32x9xbf16> to vector<1x32x8xbf16>
    %205 = vector.shape_cast %204 : vector<1x32x8xbf16> to vector<32x8xbf16>
    %c448 = arith.constant 448 : index
    %c0_197 = arith.constant 0 : index
    %206 = vector.load %arg7[%c448, %c0_197] : memref<960x8xbf16, #tpu.memory_space<vmem>>, vector<32x8xbf16>
    tpu.vector_store %arg7[%c448, %c0_197], %205 {strides = array<i32>} : memref<960x8xbf16, #tpu.memory_space<vmem>>, vector<32x8xbf16>,
    %cst_198 = arith.constant 0.000000e+00 : f32
    %207 = vector.broadcast %cst_198 : f32 to vector<5x32x9xf32>
    %c0_199 = arith.constant 0 : index
    %c2_200 = arith.constant 2 : index
    %c0_201 = arith.constant 0 : index
    %c0_202 = arith.constant 0 : index
    %c0_203 = arith.constant 0 : index
    %c0_204 = arith.constant 0 : index
    %208 = vector.load %arg1[%c0_199, %c2_200, %c0_201, %c0_202, %c0_203, %c0_204] : memref<1x4x4x6x1x10xf32, #tpu.memory_space<vmem>>, vector<1x1x1x5x1x9xf32>
    %209 = vector.shape_cast %208 : vector<1x1x1x5x1x9xf32> to vector<5x1x9xf32>
    %c0_205 = arith.constant 0 : index
    %c0_206 = arith.constant 0 : index
    %c0_207 = arith.constant 0 : index
    %c0_208 = arith.constant 0 : index
    %210 = vector.load %arg2[%c0_205, %c0_206, %c0_207, %c0_208] : memref<9x1x32x1xf32, #tpu.memory_space<vmem>>, vector<1x1x32x1xf32>
    %211 = vector.shape_cast %210 : vector<1x1x32x1xf32> to vector<1x32x1xf32>
    %212 = vector.broadcast %209 : vector<5x1x9xf32> to vector<5x32x9xf32>
    %213 = vector.broadcast %211 : vector<1x32x1xf32> to vector<5x32x9xf32>
    %214 = arith.mulf %212, %213 : vector<5x32x9xf32>
    %215 = arith.addf %207, %214 : vector<5x32x9xf32>
    %c0_209 = arith.constant 0 : index
    %c2_210 = arith.constant 2 : index
    %c1_211 = arith.constant 1 : index
    %c0_212 = arith.constant 0 : index
    %c0_213 = arith.constant 0 : index
    %c0_214 = arith.constant 0 : index
    %216 = vector.load %arg1[%c0_209, %c2_210, %c1_211, %c0_212, %c0_213, %c0_214] : memref<1x4x4x6x1x10xf32, #tpu.memory_space<vmem>>, vector<1x1x1x5x1x9xf32>
    %217 = vector.shape_cast %216 : vector<1x1x1x5x1x9xf32> to vector<5x1x9xf32>
    %c1_215 = arith.constant 1 : index
    %c0_216 = arith.constant 0 : index
    %c0_217 = arith.constant 0 : index
    %c0_218 = arith.constant 0 : index
    %218 = vector.load %arg2[%c1_215, %c0_216, %c0_217, %c0_218] : memref<9x1x32x1xf32, #tpu.memory_space<vmem>>, vector<1x1x32x1xf32>
    %219 = vector.shape_cast %218 : vector<1x1x32x1xf32> to vector<1x32x1xf32>
    %220 = vector.broadcast %217 : vector<5x1x9xf32> to vector<5x32x9xf32>
    %221 = vector.broadcast %219 : vector<1x32x1xf32> to vector<5x32x9xf32>
    %222 = arith.mulf %220, %221 : vector<5x32x9xf32>
    %223 = arith.addf %215, %222 : vector<5x32x9xf32>
    %c0_219 = arith.constant 0 : index
    %c2_220 = arith.constant 2 : index
    %c2_221 = arith.constant 2 : index
    %c0_222 = arith.constant 0 : index
    %c0_223 = arith.constant 0 : index
    %c0_224 = arith.constant 0 : index
    %224 = vector.load %arg1[%c0_219, %c2_220, %c2_221, %c0_222, %c0_223, %c0_224] : memref<1x4x4x6x1x10xf32, #tpu.memory_space<vmem>>, vector<1x1x1x5x1x9xf32>
    %225 = vector.shape_cast %224 : vector<1x1x1x5x1x9xf32> to vector<5x1x9xf32>
    %c2_225 = arith.constant 2 : index
    %c0_226 = arith.constant 0 : index
    %c0_227 = arith.constant 0 : index
    %c0_228 = arith.constant 0 : index
    %226 = vector.load %arg2[%c2_225, %c0_226, %c0_227, %c0_228] : memref<9x1x32x1xf32, #tpu.memory_space<vmem>>, vector<1x1x32x1xf32>
    %227 = vector.shape_cast %226 : vector<1x1x32x1xf32> to vector<1x32x1xf32>
    %228 = vector.broadcast %225 : vector<5x1x9xf32> to vector<5x32x9xf32>
    %229 = vector.broadcast %227 : vector<1x32x1xf32> to vector<5x32x9xf32>
    %230 = arith.mulf %228, %229 : vector<5x32x9xf32>
    %231 = arith.addf %223, %230 : vector<5x32x9xf32>
    %c0_229 = arith.constant 0 : index
    %c3_230 = arith.constant 3 : index
    %c0_231 = arith.constant 0 : index
    %c0_232 = arith.constant 0 : index
    %c0_233 = arith.constant 0 : index
    %c0_234 = arith.constant 0 : index
    %232 = vector.load %arg1[%c0_229, %c3_230, %c0_231, %c0_232, %c0_233, %c0_234] : memref<1x4x4x6x1x10xf32, #tpu.memory_space<vmem>>, vector<1x1x1x5x1x9xf32>
    %233 = vector.shape_cast %232 : vector<1x1x1x5x1x9xf32> to vector<5x1x9xf32>
    %c3_235 = arith.constant 3 : index
    %c0_236 = arith.constant 0 : index
    %c0_237 = arith.constant 0 : index
    %c0_238 = arith.constant 0 : index
    %234 = vector.load %arg2[%c3_235, %c0_236, %c0_237, %c0_238] : memref<9x1x32x1xf32, #tpu.memory_space<vmem>>, vector<1x1x32x1xf32>
    %235 = vector.shape_cast %234 : vector<1x1x32x1xf32> to vector<1x32x1xf32>
    %236 = vector.broadcast %233 : vector<5x1x9xf32> to vector<5x32x9xf32>
    %237 = vector.broadcast %235 : vector<1x32x1xf32> to vector<5x32x9xf32>
    %238 = arith.mulf %236, %237 : vector<5x32x9xf32>
    %239 = arith.addf %231, %238 : vector<5x32x9xf32>
    %c0_239 = arith.constant 0 : index
    %c3_240 = arith.constant 3 : index
    %c1_241 = arith.constant 1 : index
    %c0_242 = arith.constant 0 : index
    %c0_243 = arith.constant 0 : index
    %c0_244 = arith.constant 0 : index
    %240 = vector.load %arg1[%c0_239, %c3_240, %c1_241, %c0_242, %c0_243, %c0_244] : memref<1x4x4x6x1x10xf32, #tpu.memory_space<vmem>>, vector<1x1x1x5x1x9xf32>
    %241 = vector.shape_cast %240 : vector<1x1x1x5x1x9xf32> to vector<5x1x9xf32>
    %c4_245 = arith.constant 4 : index
    %c0_246 = arith.constant 0 : index
    %c0_247 = arith.constant 0 : index
    %c0_248 = arith.constant 0 : index
    %242 = vector.load %arg2[%c4_245, %c0_246, %c0_247, %c0_248] : memref<9x1x32x1xf32, #tpu.memory_space<vmem>>, vector<1x1x32x1xf32>
    %243 = vector.shape_cast %242 : vector<1x1x32x1xf32> to vector<1x32x1xf32>
    %244 = vector.broadcast %241 : vector<5x1x9xf32> to vector<5x32x9xf32>
    %245 = vector.broadcast %243 : vector<1x32x1xf32> to vector<5x32x9xf32>
    %246 = arith.mulf %244, %245 : vector<5x32x9xf32>
    %247 = arith.addf %239, %246 : vector<5x32x9xf32>
    %c0_249 = arith.constant 0 : index
    %c3_250 = arith.constant 3 : index
    %c2_251 = arith.constant 2 : index
    %c0_252 = arith.constant 0 : index
    %c0_253 = arith.constant 0 : index
    %c0_254 = arith.constant 0 : index
    %248 = vector.load %arg1[%c0_249, %c3_250, %c2_251, %c0_252, %c0_253, %c0_254] : memref<1x4x4x6x1x10xf32, #tpu.memory_space<vmem>>, vector<1x1x1x5x1x9xf32>
    %249 = vector.shape_cast %248 : vector<1x1x1x5x1x9xf32> to vector<5x1x9xf32>
    %c5_255 = arith.constant 5 : index
    %c0_256 = arith.constant 0 : index
    %c0_257 = arith.constant 0 : index
    %c0_258 = arith.constant 0 : index
    %250 = vector.load %arg2[%c5_255, %c0_256, %c0_257, %c0_258] : memref<9x1x32x1xf32, #tpu.memory_space<vmem>>, vector<1x1x32x1xf32>
    %251 = vector.shape_cast %250 : vector<1x1x32x1xf32> to vector<1x32x1xf32>
    %252 = vector.broadcast %249 : vector<5x1x9xf32> to vector<5x32x9xf32>
    %253 = vector.broadcast %251 : vector<1x32x1xf32> to vector<5x32x9xf32>
    %254 = arith.mulf %252, %253 : vector<5x32x9xf32>
    %255 = arith.addf %247, %254 : vector<5x32x9xf32>
    %c0_259 = arith.constant 0 : index
    %c0_260 = arith.constant 0 : index
    %c0_261 = arith.constant 0 : index
    %c1_262 = arith.constant 1 : index
    %c0_263 = arith.constant 0 : index
    %c0_264 = arith.constant 0 : index
    %256 = vector.load %arg1[%c0_259, %c0_260, %c0_261, %c1_262, %c0_263, %c0_264] : memref<1x4x4x6x1x10xf32, #tpu.memory_space<vmem>>, vector<1x1x1x5x1x9xf32>
    %257 = vector.shape_cast %256 : vector<1x1x1x5x1x9xf32> to vector<5x1x9xf32>
    %c6_265 = arith.constant 6 : index
    %c0_266 = arith.constant 0 : index
    %c0_267 = arith.constant 0 : index
    %c0_268 = arith.constant 0 : index
    %258 = vector.load %arg2[%c6_265, %c0_266, %c0_267, %c0_268] : memref<9x1x32x1xf32, #tpu.memory_space<vmem>>, vector<1x1x32x1xf32>
    %259 = vector.shape_cast %258 : vector<1x1x32x1xf32> to vector<1x32x1xf32>
    %260 = vector.broadcast %257 : vector<5x1x9xf32> to vector<5x32x9xf32>
    %261 = vector.broadcast %259 : vector<1x32x1xf32> to vector<5x32x9xf32>
    %262 = arith.mulf %260, %261 : vector<5x32x9xf32>
    %263 = arith.addf %255, %262 : vector<5x32x9xf32>
    %c0_269 = arith.constant 0 : index
    %c0_270 = arith.constant 0 : index
    %c1_271 = arith.constant 1 : index
    %c1_272 = arith.constant 1 : index
    %c0_273 = arith.constant 0 : index
    %c0_274 = arith.constant 0 : index
    %264 = vector.load %arg1[%c0_269, %c0_270, %c1_271, %c1_272, %c0_273, %c0_274] : memref<1x4x4x6x1x10xf32, #tpu.memory_space<vmem>>, vector<1x1x1x5x1x9xf32>
    %265 = vector.shape_cast %264 : vector<1x1x1x5x1x9xf32> to vector<5x1x9xf32>
    %c7_275 = arith.constant 7 : index
    %c0_276 = arith.constant 0 : index
    %c0_277 = arith.constant 0 : index
    %c0_278 = arith.constant 0 : index
    %266 = vector.load %arg2[%c7_275, %c0_276, %c0_277, %c0_278] : memref<9x1x32x1xf32, #tpu.memory_space<vmem>>, vector<1x1x32x1xf32>
    %267 = vector.shape_cast %266 : vector<1x1x32x1xf32> to vector<1x32x1xf32>
    %268 = vector.broadcast %265 : vector<5x1x9xf32> to vector<5x32x9xf32>
    %269 = vector.broadcast %267 : vector<1x32x1xf32> to vector<5x32x9xf32>
    %270 = arith.mulf %268, %269 : vector<5x32x9xf32>
    %271 = arith.addf %263, %270 : vector<5x32x9xf32>
    %c0_279 = arith.constant 0 : index
    %c0_280 = arith.constant 0 : index
    %c2_281 = arith.constant 2 : index
    %c1_282 = arith.constant 1 : index
    %c0_283 = arith.constant 0 : index
    %c0_284 = arith.constant 0 : index
    %272 = vector.load %arg1[%c0_279, %c0_280, %c2_281, %c1_282, %c0_283, %c0_284] : memref<1x4x4x6x1x10xf32, #tpu.memory_space<vmem>>, vector<1x1x1x5x1x9xf32>
    %273 = vector.shape_cast %272 : vector<1x1x1x5x1x9xf32> to vector<5x1x9xf32>
    %c8_285 = arith.constant 8 : index
    %c0_286 = arith.constant 0 : index
    %c0_287 = arith.constant 0 : index
    %c0_288 = arith.constant 0 : index
    %274 = vector.load %arg2[%c8_285, %c0_286, %c0_287, %c0_288] : memref<9x1x32x1xf32, #tpu.memory_space<vmem>>, vector<1x1x32x1xf32>
    %275 = vector.shape_cast %274 : vector<1x1x32x1xf32> to vector<1x32x1xf32>
    %276 = vector.broadcast %273 : vector<5x1x9xf32> to vector<5x32x9xf32>
    %277 = vector.broadcast %275 : vector<1x32x1xf32> to vector<5x32x9xf32>
    %278 = arith.mulf %276, %277 : vector<5x32x9xf32>
    %279 = arith.addf %271, %278 : vector<5x32x9xf32>
    %c0_289 = arith.constant 0 : index
    %c0_290 = arith.constant 0 : index
    %c0_291 = arith.constant 0 : index
    %280 = vector.load %arg3[%c0_289, %c0_290, %c0_291] : memref<1x32x1xf32, #tpu.memory_space<vmem>>, vector<1x32x1xf32>
    %281 = vector.broadcast %280 : vector<1x32x1xf32> to vector<5x32x9xf32>
    %282 = arith.addf %279, %281 : vector<5x32x9xf32>
    %cst_292 = arith.constant 0.000000e+00 : f32
    %cst_293 = arith.constant 2.000000e+01 : f32
    %283 = vector.broadcast %cst_292 : f32 to vector<5x32x9xf32>
    %284 = arith.maximumf %283, %282 : vector<5x32x9xf32>
    %285 = vector.broadcast %cst_293 : f32 to vector<5x32x9xf32>
    %286 = arith.minimumf %285, %284 : vector<5x32x9xf32>
    %287 = arith.truncf %286 : vector<5x32x9xf32> to vector<5x32x9xbf16>
    %288 = vector.extract_strided_slice %287 {offsets = [0, 0, 0], sizes = [1, 32, 8], strides = [1, 1, 1]} : vector<5x32x9xbf16> to vector<1x32x8xbf16>
    %289 = vector.shape_cast %288 : vector<1x32x8xbf16> to vector<32x8xbf16>
    %c160 = arith.constant 160 : index
    %c0_294 = arith.constant 0 : index
    %290 = vector.load %arg7[%c160, %c0_294] : memref<960x8xbf16, #tpu.memory_space<vmem>>, vector<32x8xbf16>
    tpu.vector_store %arg7[%c160, %c0_294], %289 {strides = array<i32>} : memref<960x8xbf16, #tpu.memory_space<vmem>>, vector<32x8xbf16>,
    %291 = vector.extract_strided_slice %287 {offsets = [1, 0, 0], sizes = [1, 32, 8], strides = [1, 1, 1]} : vector<5x32x9xbf16> to vector<1x32x8xbf16>
    %292 = vector.shape_cast %291 : vector<1x32x8xbf16> to vector<32x8xbf16>
    %c192 = arith.constant 192 : index
    %c0_295 = arith.constant 0 : index
    %293 = vector.load %arg7[%c192, %c0_295] : memref<960x8xbf16, #tpu.memory_space<vmem>>, vector<32x8xbf16>
    tpu.vector_store %arg7[%c192, %c0_295], %292 {strides = array<i32>} : memref<960x8xbf16, #tpu.memory_space<vmem>>, vector<32x8xbf16>,
    %294 = vector.extract_strided_slice %287 {offsets = [2, 0, 0], sizes = [1, 32, 8], strides = [1, 1, 1]} : vector<5x32x9xbf16> to vector<1x32x8xbf16>
    %295 = vector.shape_cast %294 : vector<1x32x8xbf16> to vector<32x8xbf16>
    %c224 = arith.constant 224 : index
    %c0_296 = arith.constant 0 : index
    %296 = vector.load %arg7[%c224, %c0_296] : memref<960x8xbf16, #tpu.memory_space<vmem>>, vector<32x8xbf16>
    tpu.vector_store %arg7[%c224, %c0_296], %295 {strides = array<i32>} : memref<960x8xbf16, #tpu.memory_space<vmem>>, vector<32x8xbf16>,
    %297 = vector.extract_strided_slice %287 {offsets = [3, 0, 0], sizes = [1, 32, 8], strides = [1, 1, 1]} : vector<5x32x9xbf16> to vector<1x32x8xbf16>
    %298 = vector.shape_cast %297 : vector<1x32x8xbf16> to vector<32x8xbf16>
    %c256 = arith.constant 256 : index
    %c0_297 = arith.constant 0 : index
    %299 = vector.load %arg7[%c256, %c0_297] : memref<960x8xbf16, #tpu.memory_space<vmem>>, vector<32x8xbf16>
    tpu.vector_store %arg7[%c256, %c0_297], %298 {strides = array<i32>} : memref<960x8xbf16, #tpu.memory_space<vmem>>, vector<32x8xbf16>,
    %300 = vector.extract_strided_slice %287 {offsets = [4, 0, 0], sizes = [1, 32, 8], strides = [1, 1, 1]} : vector<5x32x9xbf16> to vector<1x32x8xbf16>
    %301 = vector.shape_cast %300 : vector<1x32x8xbf16> to vector<32x8xbf16>
    %c288 = arith.constant 288 : index
    %c0_298 = arith.constant 0 : index
    %302 = vector.load %arg7[%c288, %c0_298] : memref<960x8xbf16, #tpu.memory_space<vmem>>, vector<32x8xbf16>
    tpu.vector_store %arg7[%c288, %c0_298], %301 {strides = array<i32>} : memref<960x8xbf16, #tpu.memory_space<vmem>>, vector<32x8xbf16>,
    %303 = vector.extract_strided_slice %287 {offsets = [0, 0, 1], sizes = [1, 32, 8], strides = [1, 1, 1]} : vector<5x32x9xbf16> to vector<1x32x8xbf16>
    %304 = vector.shape_cast %303 : vector<1x32x8xbf16> to vector<32x8xbf16>
    %c800 = arith.constant 800 : index
    %c0_299 = arith.constant 0 : index
    %305 = vector.load %arg7[%c800, %c0_299] : memref<960x8xbf16, #tpu.memory_space<vmem>>, vector<32x8xbf16>
    tpu.vector_store %arg7[%c800, %c0_299], %304 {strides = array<i32>} : memref<960x8xbf16, #tpu.memory_space<vmem>>, vector<32x8xbf16>,
    %306 = vector.extract_strided_slice %287 {offsets = [1, 0, 1], sizes = [1, 32, 8], strides = [1, 1, 1]} : vector<5x32x9xbf16> to vector<1x32x8xbf16>
    %307 = vector.shape_cast %306 : vector<1x32x8xbf16> to vector<32x8xbf16>
    %c832 = arith.constant 832 : index
    %c0_300 = arith.constant 0 : index
    %308 = vector.load %arg7[%c832, %c0_300] : memref<960x8xbf16, #tpu.memory_space<vmem>>, vector<32x8xbf16>
    tpu.vector_store %arg7[%c832, %c0_300], %307 {strides = array<i32>} : memref<960x8xbf16, #tpu.memory_space<vmem>>, vector<32x8xbf16>,
    %309 = vector.extract_strided_slice %287 {offsets = [2, 0, 1], sizes = [1, 32, 8], strides = [1, 1, 1]} : vector<5x32x9xbf16> to vector<1x32x8xbf16>
    %310 = vector.shape_cast %309 : vector<1x32x8xbf16> to vector<32x8xbf16>
    %c864 = arith.constant 864 : index
    %c0_301 = arith.constant 0 : index
    %311 = vector.load %arg7[%c864, %c0_301] : memref<960x8xbf16, #tpu.memory_space<vmem>>, vector<32x8xbf16>
    tpu.vector_store %arg7[%c864, %c0_301], %310 {strides = array<i32>} : memref<960x8xbf16, #tpu.memory_space<vmem>>, vector<32x8xbf16>,
    %312 = vector.extract_strided_slice %287 {offsets = [3, 0, 1], sizes = [1, 32, 8], strides = [1, 1, 1]} : vector<5x32x9xbf16> to vector<1x32x8xbf16>
    %313 = vector.shape_cast %312 : vector<1x32x8xbf16> to vector<32x8xbf16>
    %c896 = arith.constant 896 : index
    %c0_302 = arith.constant 0 : index
    %314 = vector.load %arg7[%c896, %c0_302] : memref<960x8xbf16, #tpu.memory_space<vmem>>, vector<32x8xbf16>
    tpu.vector_store %arg7[%c896, %c0_302], %313 {strides = array<i32>} : memref<960x8xbf16, #tpu.memory_space<vmem>>, vector<32x8xbf16>,
    %315 = vector.extract_strided_slice %287 {offsets = [4, 0, 1], sizes = [1, 32, 8], strides = [1, 1, 1]} : vector<5x32x9xbf16> to vector<1x32x8xbf16>
    %316 = vector.shape_cast %315 : vector<1x32x8xbf16> to vector<32x8xbf16>
    %c928 = arith.constant 928 : index
    %c0_303 = arith.constant 0 : index
    %317 = vector.load %arg7[%c928, %c0_303] : memref<960x8xbf16, #tpu.memory_space<vmem>>, vector<32x8xbf16>
    tpu.vector_store %arg7[%c928, %c0_303], %316 {strides = array<i32>} : memref<960x8xbf16, #tpu.memory_space<vmem>>, vector<32x8xbf16>,
    %cst_304 = arith.constant 0.000000e+00 : f32
    %318 = vector.broadcast %cst_304 : f32 to vector<5x32x9xf32>
    %c0_305 = arith.constant 0 : index
    %c2_306 = arith.constant 2 : index
    %c2_307 = arith.constant 2 : index
    %c0_308 = arith.constant 0 : index
    %c0_309 = arith.constant 0 : index
    %c0_310 = arith.constant 0 : index
    %319 = vector.load %arg1[%c0_305, %c2_306, %c2_307, %c0_308, %c0_309, %c0_310] : memref<1x4x4x6x1x10xf32, #tpu.memory_space<vmem>>, vector<1x1x1x5x1x9xf32>
    %320 = vector.shape_cast %319 : vector<1x1x1x5x1x9xf32> to vector<5x1x9xf32>
    %c0_311 = arith.constant 0 : index
    %c0_312 = arith.constant 0 : index
    %c0_313 = arith.constant 0 : index
    %c0_314 = arith.constant 0 : index
    %321 = vector.load %arg2[%c0_311, %c0_312, %c0_313, %c0_314] : memref<9x1x32x1xf32, #tpu.memory_space<vmem>>, vector<1x1x32x1xf32>
    %322 = vector.shape_cast %321 : vector<1x1x32x1xf32> to vector<1x32x1xf32>
    %323 = vector.broadcast %320 : vector<5x1x9xf32> to vector<5x32x9xf32>
    %324 = vector.broadcast %322 : vector<1x32x1xf32> to vector<5x32x9xf32>
    %325 = arith.mulf %323, %324 : vector<5x32x9xf32>
    %326 = arith.addf %318, %325 : vector<5x32x9xf32>
    %c0_315 = arith.constant 0 : index
    %c2_316 = arith.constant 2 : index
    %c3_317 = arith.constant 3 : index
    %c0_318 = arith.constant 0 : index
    %c0_319 = arith.constant 0 : index
    %c0_320 = arith.constant 0 : index
    %327 = vector.load %arg1[%c0_315, %c2_316, %c3_317, %c0_318, %c0_319, %c0_320] : memref<1x4x4x6x1x10xf32, #tpu.memory_space<vmem>>, vector<1x1x1x5x1x9xf32>
    %328 = vector.shape_cast %327 : vector<1x1x1x5x1x9xf32> to vector<5x1x9xf32>
    %c1_321 = arith.constant 1 : index
    %c0_322 = arith.constant 0 : index
    %c0_323 = arith.constant 0 : index
    %c0_324 = arith.constant 0 : index
    %329 = vector.load %arg2[%c1_321, %c0_322, %c0_323, %c0_324] : memref<9x1x32x1xf32, #tpu.memory_space<vmem>>, vector<1x1x32x1xf32>
    %330 = vector.shape_cast %329 : vector<1x1x32x1xf32> to vector<1x32x1xf32>
    %331 = vector.broadcast %328 : vector<5x1x9xf32> to vector<5x32x9xf32>
    %332 = vector.broadcast %330 : vector<1x32x1xf32> to vector<5x32x9xf32>
    %333 = arith.mulf %331, %332 : vector<5x32x9xf32>
    %334 = arith.addf %326, %333 : vector<5x32x9xf32>
    %c0_325 = arith.constant 0 : index
    %c2_326 = arith.constant 2 : index
    %c0_327 = arith.constant 0 : index
    %c0_328 = arith.constant 0 : index
    %c0_329 = arith.constant 0 : index
    %c1_330 = arith.constant 1 : index
    %335 = vector.load %arg1[%c0_325, %c2_326, %c0_327, %c0_328, %c0_329, %c1_330] : memref<1x4x4x6x1x10xf32, #tpu.memory_space<vmem>>, vector<1x1x1x5x1x9xf32>
    %336 = vector.shape_cast %335 : vector<1x1x1x5x1x9xf32> to vector<5x1x9xf32>
    %c2_331 = arith.constant 2 : index
    %c0_332 = arith.constant 0 : index
    %c0_333 = arith.constant 0 : index
    %c0_334 = arith.constant 0 : index
    %337 = vector.load %arg2[%c2_331, %c0_332, %c0_333, %c0_334] : memref<9x1x32x1xf32, #tpu.memory_space<vmem>>, vector<1x1x32x1xf32>
    %338 = vector.shape_cast %337 : vector<1x1x32x1xf32> to vector<1x32x1xf32>
    %339 = vector.broadcast %336 : vector<5x1x9xf32> to vector<5x32x9xf32>
    %340 = vector.broadcast %338 : vector<1x32x1xf32> to vector<5x32x9xf32>
    %341 = arith.mulf %339, %340 : vector<5x32x9xf32>
    %342 = arith.addf %334, %341 : vector<5x32x9xf32>
    %c0_335 = arith.constant 0 : index
    %c3_336 = arith.constant 3 : index
    %c2_337 = arith.constant 2 : index
    %c0_338 = arith.constant 0 : index
    %c0_339 = arith.constant 0 : index
    %c0_340 = arith.constant 0 : index
    %343 = vector.load %arg1[%c0_335, %c3_336, %c2_337, %c0_338, %c0_339, %c0_340] : memref<1x4x4x6x1x10xf32, #tpu.memory_space<vmem>>, vector<1x1x1x5x1x9xf32>
    %344 = vector.shape_cast %343 : vector<1x1x1x5x1x9xf32> to vector<5x1x9xf32>
    %c3_341 = arith.constant 3 : index
    %c0_342 = arith.constant 0 : index
    %c0_343 = arith.constant 0 : index
    %c0_344 = arith.constant 0 : index
    %345 = vector.load %arg2[%c3_341, %c0_342, %c0_343, %c0_344] : memref<9x1x32x1xf32, #tpu.memory_space<vmem>>, vector<1x1x32x1xf32>
    %346 = vector.shape_cast %345 : vector<1x1x32x1xf32> to vector<1x32x1xf32>
    %347 = vector.broadcast %344 : vector<5x1x9xf32> to vector<5x32x9xf32>
    %348 = vector.broadcast %346 : vector<1x32x1xf32> to vector<5x32x9xf32>
    %349 = arith.mulf %347, %348 : vector<5x32x9xf32>
    %350 = arith.addf %342, %349 : vector<5x32x9xf32>
    %c0_345 = arith.constant 0 : index
    %c3_346 = arith.constant 3 : index
    %c3_347 = arith.constant 3 : index
    %c0_348 = arith.constant 0 : index
    %c0_349 = arith.constant 0 : index
    %c0_350 = arith.constant 0 : index
    %351 = vector.load %arg1[%c0_345, %c3_346, %c3_347, %c0_348, %c0_349, %c0_350] : memref<1x4x4x6x1x10xf32, #tpu.memory_space<vmem>>, vector<1x1x1x5x1x9xf32>
    %352 = vector.shape_cast %351 : vector<1x1x1x5x1x9xf32> to vector<5x1x9xf32>
    %c4_351 = arith.constant 4 : index
    %c0_352 = arith.constant 0 : index
    %c0_353 = arith.constant 0 : index
    %c0_354 = arith.constant 0 : index
    %353 = vector.load %arg2[%c4_351, %c0_352, %c0_353, %c0_354] : memref<9x1x32x1xf32, #tpu.memory_space<vmem>>, vector<1x1x32x1xf32>
    %354 = vector.shape_cast %353 : vector<1x1x32x1xf32> to vector<1x32x1xf32>
    %355 = vector.broadcast %352 : vector<5x1x9xf32> to vector<5x32x9xf32>
    %356 = vector.broadcast %354 : vector<1x32x1xf32> to vector<5x32x9xf32>
    %357 = arith.mulf %355, %356 : vector<5x32x9xf32>
    %358 = arith.addf %350, %357 : vector<5x32x9xf32>
    %c0_355 = arith.constant 0 : index
    %c3_356 = arith.constant 3 : index
    %c0_357 = arith.constant 0 : index
    %c0_358 = arith.constant 0 : index
    %c0_359 = arith.constant 0 : index
    %c1_360 = arith.constant 1 : index
    %359 = vector.load %arg1[%c0_355, %c3_356, %c0_357, %c0_358, %c0_359, %c1_360] : memref<1x4x4x6x1x10xf32, #tpu.memory_space<vmem>>, vector<1x1x1x5x1x9xf32>
    %360 = vector.shape_cast %359 : vector<1x1x1x5x1x9xf32> to vector<5x1x9xf32>
    %c5_361 = arith.constant 5 : index
    %c0_362 = arith.constant 0 : index
    %c0_363 = arith.constant 0 : index
    %c0_364 = arith.constant 0 : index
    %361 = vector.load %arg2[%c5_361, %c0_362, %c0_363, %c0_364] : memref<9x1x32x1xf32, #tpu.memory_space<vmem>>, vector<1x1x32x1xf32>
    %362 = vector.shape_cast %361 : vector<1x1x32x1xf32> to vector<1x32x1xf32>
    %363 = vector.broadcast %360 : vector<5x1x9xf32> to vector<5x32x9xf32>
    %364 = vector.broadcast %362 : vector<1x32x1xf32> to vector<5x32x9xf32>
    %365 = arith.mulf %363, %364 : vector<5x32x9xf32>
    %366 = arith.addf %358, %365 : vector<5x32x9xf32>
    %c0_365 = arith.constant 0 : index
    %c0_366 = arith.constant 0 : index
    %c2_367 = arith.constant 2 : index
    %c1_368 = arith.constant 1 : index
    %c0_369 = arith.constant 0 : index
    %c0_370 = arith.constant 0 : index
    %367 = vector.load %arg1[%c0_365, %c0_366, %c2_367, %c1_368, %c0_369, %c0_370] : memref<1x4x4x6x1x10xf32, #tpu.memory_space<vmem>>, vector<1x1x1x5x1x9xf32>
    %368 = vector.shape_cast %367 : vector<1x1x1x5x1x9xf32> to vector<5x1x9xf32>
    %c6_371 = arith.constant 6 : index
    %c0_372 = arith.constant 0 : index
    %c0_373 = arith.constant 0 : index
    %c0_374 = arith.constant 0 : index
    %369 = vector.load %arg2[%c6_371, %c0_372, %c0_373, %c0_374] : memref<9x1x32x1xf32, #tpu.memory_space<vmem>>, vector<1x1x32x1xf32>
    %370 = vector.shape_cast %369 : vector<1x1x32x1xf32> to vector<1x32x1xf32>
    %371 = vector.broadcast %368 : vector<5x1x9xf32> to vector<5x32x9xf32>
    %372 = vector.broadcast %370 : vector<1x32x1xf32> to vector<5x32x9xf32>
    %373 = arith.mulf %371, %372 : vector<5x32x9xf32>
    %374 = arith.addf %366, %373 : vector<5x32x9xf32>
    %c0_375 = arith.constant 0 : index
    %c0_376 = arith.constant 0 : index
    %c3_377 = arith.constant 3 : index
    %c1_378 = arith.constant 1 : index
    %c0_379 = arith.constant 0 : index
    %c0_380 = arith.constant 0 : index
    %375 = vector.load %arg1[%c0_375, %c0_376, %c3_377, %c1_378, %c0_379, %c0_380] : memref<1x4x4x6x1x10xf32, #tpu.memory_space<vmem>>, vector<1x1x1x5x1x9xf32>
    %376 = vector.shape_cast %375 : vector<1x1x1x5x1x9xf32> to vector<5x1x9xf32>
    %c7_381 = arith.constant 7 : index
    %c0_382 = arith.constant 0 : index
    %c0_383 = arith.constant 0 : index
    %c0_384 = arith.constant 0 : index
    %377 = vector.load %arg2[%c7_381, %c0_382, %c0_383, %c0_384] : memref<9x1x32x1xf32, #tpu.memory_space<vmem>>, vector<1x1x32x1xf32>
    %378 = vector.shape_cast %377 : vector<1x1x32x1xf32> to vector<1x32x1xf32>
    %379 = vector.broadcast %376 : vector<5x1x9xf32> to vector<5x32x9xf32>
    %380 = vector.broadcast %378 : vector<1x32x1xf32> to vector<5x32x9xf32>
    %381 = arith.mulf %379, %380 : vector<5x32x9xf32>
    %382 = arith.addf %374, %381 : vector<5x32x9xf32>
    %c0_385 = arith.constant 0 : index
    %c0_386 = arith.constant 0 : index
    %c0_387 = arith.constant 0 : index
    %c1_388 = arith.constant 1 : index
    %c0_389 = arith.constant 0 : index
    %c1_390 = arith.constant 1 : index
    %383 = vector.load %arg1[%c0_385, %c0_386, %c0_387, %c1_388, %c0_389, %c1_390] : memref<1x4x4x6x1x10xf32, #tpu.memory_space<vmem>>, vector<1x1x1x5x1x9xf32>
    %384 = vector.shape_cast %383 : vector<1x1x1x5x1x9xf32> to vector<5x1x9xf32>
    %c8_391 = arith.constant 8 : index
    %c0_392 = arith.constant 0 : index
    %c0_393 = arith.constant 0 : index
    %c0_394 = arith.constant 0 : index
    %385 = vector.load %arg2[%c8_391, %c0_392, %c0_393, %c0_394] : memref<9x1x32x1xf32, #tpu.memory_space<vmem>>, vector<1x1x32x1xf32>
    %386 = vector.shape_cast %385 : vector<1x1x32x1xf32> to vector<1x32x1xf32>
    %387 = vector.broadcast %384 : vector<5x1x9xf32> to vector<5x32x9xf32>
    %388 = vector.broadcast %386 : vector<1x32x1xf32> to vector<5x32x9xf32>
    %389 = arith.mulf %387, %388 : vector<5x32x9xf32>
    %390 = arith.addf %382, %389 : vector<5x32x9xf32>
    %c0_395 = arith.constant 0 : index
    %c0_396 = arith.constant 0 : index
    %c0_397 = arith.constant 0 : index
    %391 = vector.load %arg3[%c0_395, %c0_396, %c0_397] : memref<1x32x1xf32, #tpu.memory_space<vmem>>, vector<1x32x1xf32>
    %392 = vector.broadcast %391 : vector<1x32x1xf32> to vector<5x32x9xf32>
    %393 = arith.addf %390, %392 : vector<5x32x9xf32>
    %cst_398 = arith.constant 0.000000e+00 : f32
    %cst_399 = arith.constant 2.000000e+01 : f32
    %394 = vector.broadcast %cst_398 : f32 to vector<5x32x9xf32>
    %395 = arith.maximumf %394, %393 : vector<5x32x9xf32>
    %396 = vector.broadcast %cst_399 : f32 to vector<5x32x9xf32>
    %397 = arith.minimumf %396, %395 : vector<5x32x9xf32>
    %398 = arith.truncf %397 : vector<5x32x9xf32> to vector<5x32x9xbf16>
    %399 = vector.extract_strided_slice %398 {offsets = [0, 0, 0], sizes = [1, 32, 8], strides = [1, 1, 1]} : vector<5x32x9xbf16> to vector<1x32x8xbf16>
    %400 = vector.shape_cast %399 : vector<1x32x8xbf16> to vector<32x8xbf16>
    %c480 = arith.constant 480 : index
    %c0_400 = arith.constant 0 : index
    %401 = vector.load %arg7[%c480, %c0_400] : memref<960x8xbf16, #tpu.memory_space<vmem>>, vector<32x8xbf16>
    tpu.vector_store %arg7[%c480, %c0_400], %400 {strides = array<i32>} : memref<960x8xbf16, #tpu.memory_space<vmem>>, vector<32x8xbf16>,
    %402 = vector.extract_strided_slice %398 {offsets = [1, 0, 0], sizes = [1, 32, 8], strides = [1, 1, 1]} : vector<5x32x9xbf16> to vector<1x32x8xbf16>
    %403 = vector.shape_cast %402 : vector<1x32x8xbf16> to vector<32x8xbf16>
    %c512 = arith.constant 512 : index
    %c0_401 = arith.constant 0 : index
    %404 = vector.load %arg7[%c512, %c0_401] : memref<960x8xbf16, #tpu.memory_space<vmem>>, vector<32x8xbf16>
    tpu.vector_store %arg7[%c512, %c0_401], %403 {strides = array<i32>} : memref<960x8xbf16, #tpu.memory_space<vmem>>, vector<32x8xbf16>,
    %405 = vector.extract_strided_slice %398 {offsets = [2, 0, 0], sizes = [1, 32, 8], strides = [1, 1, 1]} : vector<5x32x9xbf16> to vector<1x32x8xbf16>
    %406 = vector.shape_cast %405 : vector<1x32x8xbf16> to vector<32x8xbf16>
    %c544 = arith.constant 544 : index
    %c0_402 = arith.constant 0 : index
    %407 = vector.load %arg7[%c544, %c0_402] : memref<960x8xbf16, #tpu.memory_space<vmem>>, vector<32x8xbf16>
    tpu.vector_store %arg7[%c544, %c0_402], %406 {strides = array<i32>} : memref<960x8xbf16, #tpu.memory_space<vmem>>, vector<32x8xbf16>,
    %408 = vector.extract_strided_slice %398 {offsets = [3, 0, 0], sizes = [1, 32, 8], strides = [1, 1, 1]} : vector<5x32x9xbf16> to vector<1x32x8xbf16>
    %409 = vector.shape_cast %408 : vector<1x32x8xbf16> to vector<32x8xbf16>
    %c576 = arith.constant 576 : index
    %c0_403 = arith.constant 0 : index
    %410 = vector.load %arg7[%c576, %c0_403] : memref<960x8xbf16, #tpu.memory_space<vmem>>, vector<32x8xbf16>
    tpu.vector_store %arg7[%c576, %c0_403], %409 {strides = array<i32>} : memref<960x8xbf16, #tpu.memory_space<vmem>>, vector<32x8xbf16>,
    %411 = vector.extract_strided_slice %398 {offsets = [4, 0, 0], sizes = [1, 32, 8], strides = [1, 1, 1]} : vector<5x32x9xbf16> to vector<1x32x8xbf16>
    %412 = vector.shape_cast %411 : vector<1x32x8xbf16> to vector<32x8xbf16>
    %c608 = arith.constant 608 : index
    %c0_404 = arith.constant 0 : index
    %413 = vector.load %arg7[%c608, %c0_404] : memref<960x8xbf16, #tpu.memory_space<vmem>>, vector<32x8xbf16>
    tpu.vector_store %arg7[%c608, %c0_404], %412 {strides = array<i32>} : memref<960x8xbf16, #tpu.memory_space<vmem>>, vector<32x8xbf16>,
    %c0_405 = arith.constant 0 : index
    %c0_406 = arith.constant 0 : index
    %414 = vector.load %arg7[%c0_405, %c0_406] : memref<960x8xbf16, #tpu.memory_space<vmem>>, vector<960x8xbf16>
    %c0_407 = arith.constant 0 : index
    %c0_408 = arith.constant 0 : index
    %415 = vector.load %arg4[%c0_407, %c0_408] : memref<960x128xbf16, #tpu.memory_space<vmem>>, vector<960x128xbf16>
    %cst_409 = arith.constant dense<0.000000e+00> : vector<8x128xf32>
    %416 = tpu.matmul %414, %415, %cst_409 {dimension_numbers = #tpu.dot_dimension_numbers<[0], [0], [1], [1], [0, 1, 1, 1], [], []>} : vector<960x8xbf16>, vector<960x128xbf16>, vector<8x128xf32> -> vector<8x128xf32>
    %c0_410 = arith.constant 0 : index
    %c0_411 = arith.constant 0 : index
    %417 = vector.load %arg5[%c0_410, %c0_411] : memref<1x128xf32, #tpu.memory_space<vmem>>, vector<1x128xf32>
    %418 = vector.broadcast %417 : vector<1x128xf32> to vector<8x128xf32>
    %419 = arith.addf %416, %418 : vector<8x128xf32>
    %cst_412 = arith.constant 0.000000e+00 : f32
    %cst_413 = arith.constant 2.000000e+01 : f32
    %420 = vector.broadcast %cst_412 : f32 to vector<8x128xf32>
    %421 = arith.maximumf %420, %419 : vector<8x128xf32>
    %422 = vector.broadcast %cst_413 : f32 to vector<8x128xf32>
    %423 = arith.minimumf %422, %421 : vector<8x128xf32>
    %c0_414 = arith.constant 0 : index
    %c0_415 = arith.constant 0 : index
    %c0_416 = arith.constant 0 : index
    %424 = vector.load %arg6[%c0_414, %c0_415, %c0_416] : memref<1x8x128xf32, #tpu.memory_space<vmem>>, vector<1x8x128xf32>
    %425 = vector.shape_cast %424 : vector<1x8x128xf32> to vector<8x128xf32>
    %426 = vector.shape_cast %423 : vector<8x128xf32> to vector<1x8x128xf32>
    tpu.vector_store %arg6[%c0_414, %c0_415, %c0_416], %426 {strides = array<i32>} : memref<1x8x128xf32, #tpu.memory_space<vmem>>, vector<1x8x128xf32>,
    return
  }
  func.func @transform_0(%arg0: i32) -> (i32, i32, i32, i32, i32, i32) {
    %c0_i32 = arith.constant 0 : i32
    %c0_i32_0 = arith.constant 0 : i32
    %c0_i32_1 = arith.constant 0 : i32
    %c0_i32_2 = arith.constant 0 : i32
    %c0_i32_3 = arith.constant 0 : i32
    %c0_i32_4 = arith.constant 0 : i32
    return %arg0, %c0_i32, %c0_i32_0, %c0_i32_1, %c0_i32_2, %c0_i32_3 : i32, i32, i32, i32, i32, i32
  }
  func.func @transform_1(%arg0: i32) -> (i32, i32, i32, i32) {
    %c0_i32 = arith.constant 0 : i32
    %c0_i32_0 = arith.constant 0 : i32
    %c0_i32_1 = arith.constant 0 : i32
    %c0_i32_2 = arith.constant 0 : i32
    %c0_i32_3 = arith.constant 0 : i32
    return %c0_i32, %c0_i32_0, %c0_i32_1, %c0_i32_2 : i32, i32, i32, i32
  }
  func.func @transform_2(%arg0: i32) -> (i32, i32, i32) {
    %c0_i32 = arith.constant 0 : i32
    %c0_i32_0 = arith.constant 0 : i32
    %c0_i32_1 = arith.constant 0 : i32
    %c0_i32_2 = arith.constant 0 : i32
    return %c0_i32, %c0_i32_0, %c0_i32_1 : i32, i32, i32
  }
  func.func @transform_3(%arg0: i32) -> (i32, i32) {
    %c0_i32 = arith.constant 0 : i32
    %c0_i32_0 = arith.constant 0 : i32
    %c0_i32_1 = arith.constant 0 : i32
    return %c0_i32, %c0_i32_0 : i32, i32
  }
  func.func @transform_4(%arg0: i32) -> (i32, i32) {
    %c0_i32 = arith.constant 0 : i32
    %c0_i32_0 = arith.constant 0 : i32
    %c0_i32_1 = arith.constant 0 : i32
    return %c0_i32, %c0_i32_0 : i32, i32
  }
  func.func @transform_5(%arg0: i32) -> (i32, i32, i32) {
    %c0_i32 = arith.constant 0 : i32
    %c0_i32_0 = arith.constant 0 : i32
    %c0_i32_1 = arith.constant 0 : i32
    return %arg0, %c0_i32, %c0_i32_0 : i32, i32, i32
  }
}

</mosaic_0001>

<llo_original>
// kernel: conv2d_extractor_forward.1
$region0: #{conv2d_extractor_forward.1}
  #allocation0 [shape = 'u32[]', space=smem, size = 0x4, offset = 0x4, fixed_abs, tag = 'smem constant byte address 0x4 - core index']
  #allocation1 [shape = 'u32[144,128]{1,0:T(1,128)}', space=vmem, size = 0x12000, scoped, tag = 'internal scratch']
  #allocation2 [shape = 'bf16[960,8]{1,0:T(16,128)(2,1)}', space=vmem, size = 0x3c000, scoped, tag = 'scratch operand']
  %s0 = inlined_call_operand.vmem [shape: f32[2,4,4,6,1,10], index: 0, kind: input, shape index: {}]
  %s1 = inlined_call_operand.vmem [shape: f32[9,1,32,1], index: 1, kind: input, shape index: {}]
  %s2 = inlined_call_operand.vmem [shape: f32[1,32,1], index: 2, kind: input, shape index: {}]
  %s3 = inlined_call_operand.vmem [shape: bf16[960,128], index: 3, kind: input, shape index: {}]
  %s4 = inlined_call_operand.vmem [shape: f32[1,128], index: 4, kind: input, shape index: {}]
  %s5 = inlined_call_operand.hbm [shape: f32[2,8,128], index: 5, kind: output, shape index: {}]
  %s6 = sld [smem:[#allocation0]]
  $region53: #{conv2d_extractor_forward.1} parent=0
    _
  %s8 = ssub.s32 1, %s6
  %s9 = scalar_select 0, %s8, %s6
  $region1: #{conv2d_extractor_forward.1} parent=0
    #allocation3 [shape = 'u8[8192]{0}', space=vmem, size = 0x2000, scoped, tag = 'output window, operand 0']
    #allocation4 [shape = 's32[2]{0}', space=sflag, size = 0x8, scoped, tag = 'scoped memory for conv2d_extractor_forward.1']
    %10 = vsyncpa [#allocation4], 0
    %s11 = scalar_lea.sflag [#allocation4], 1
    %12 = vsyncpa %s11, 0
    loop: start=0, step=1, limit=4
    $region2: #{conv2d_extractor_forward.1} parent=1 // loop_pre_header
      _
    $region3: #{conv2d_extractor_forward.1} parent=1 // loop_header
      %s14 = sphi 0, %s18
      %p15 = scmp.ge.s32.totalorder %s14, 4
      %s24 = sphi 0, %s26
      %s27 = sphi 0, %s24
      %s28 = sphi 0, %s27
      %s44 = sphi 0, %s28
      %s48 = sphi 0, %s48
      %s50 = sphi 0, %s48
      %s51 = sphi 0, %s50
      %s65 = sphi 0, %s51
      %s69 = sphi 0, %s69
      %s71 = sphi 0, %s69
      %s72 = sphi 0, %s71
      %s86 = sphi 0, %s72
      %s90 = sphi 0, %s90
      %s92 = sphi 0, %s90
      %s93 = sphi 0, %s92
      %s107 = sphi 0, %s93
      %s111 = sphi 0, %s111
      %s113 = sphi 0, %s111
      %s114 = sphi 0, %s113
      %s128 = sphi 0, %s114
      %s134 = sphi 0, %s136
      %s137 = sphi 0, %s134
      %s138 = sphi 0, %s137
      %s154 = sphi 0, %s138
    $region4: #{conv2d_extractor_forward.1} parent=1 // loop_header_branch
      %17 = sbr.rel (%p15) target = $region8
    $region5: #{conv2d_extractor_forward.1} parent=1 // loop_body
      %s19 = ssub.s32 %s14, 1
      %s20 = ssub.s32 %s14, 2
      %s21 = sadd.s32 %s14, 1
      %s22 = ssub.s32 %s14, %s21
      %p23 = scmp.eq.s32.totalorder %s22, 0
      %s25 = sadd.s32 %s24, 1
      %s26 = scalar_select %p23, %s24, %s25
      %p29 = pneg %p23
      %p30 = scmp.eq.s32.totalorder %s14, 1
      %p31 = por %p29, %p30
      %p32 = scmp.ne.s32.totalorder %s24, %s27
      %p33 = scmp.eq.s32.totalorder %s14, 0
      %p34 = por %p32, %p33
      %p35 = scmp.ne.s32.totalorder %s24, %s27
      %p36 = scmp.eq.s32.totalorder %s19, 1
      %p37 = por %p35, %p36
      %p38 = scmp.ne.s32.totalorder %s27, %s28
      %p39 = scmp.eq.s32.totalorder %s19, 0
      %p40 = por %p38, %p39
      %p41 = scmp.ne.s32.totalorder %s27, %s28
      %p42 = scmp.eq.s32.totalorder %s20, 1
      %p43 = por %p41, %p42
      %p45 = scmp.ne.s32.totalorder %s28, %s44
      %p46 = scmp.eq.s32.totalorder %s20, 0
      %p47 = por %p45, %p46
      %s49 = sadd.s32 %s48, 1
      %p52 = scmp.eq.s32.totalorder %s14, 1
      %p53 = scmp.ne.s32.totalorder %s48, %s50
      %p54 = scmp.eq.s32.totalorder %s14, 0
      %p55 = por %p53, %p54
      %p56 = scmp.ne.s32.totalorder %s48, %s50
      %p57 = scmp.eq.s32.totalorder %s19, 1
      %p58 = por %p56, %p57
      %p59 = scmp.ne.s32.totalorder %s50, %s51
      %p60 = scmp.eq.s32.totalorder %s19, 0
      %p61 = por %p59, %p60
      %p62 = scmp.ne.s32.totalorder %s50, %s51
      %p63 = scmp.eq.s32.totalorder %s20, 1
      %p64 = por %p62, %p63
      %p66 = scmp.ne.s32.totalorder %s51, %s65
      %p67 = scmp.eq.s32.totalorder %s20, 0
      %p68 = por %p66, %p67
      %s70 = sadd.s32 %s69, 1
      %p73 = scmp.eq.s32.totalorder %s14, 1
      %p74 = scmp.ne.s32.totalorder %s69, %s71
      %p75 = scmp.eq.s32.totalorder %s14, 0
      %p76 = por %p74, %p75
      %p77 = scmp.ne.s32.totalorder %s69, %s71
      %p78 = scmp.eq.s32.totalorder %s19, 1
      %p79 = por %p77, %p78
      %p80 = scmp.ne.s32.totalorder %s71, %s72
      %p81 = scmp.eq.s32.totalorder %s19, 0
      %p82 = por %p80, %p81
      %p83 = scmp.ne.s32.totalorder %s71, %s72
      %p84 = scmp.eq.s32.totalorder %s20, 1
      %p85 = por %p83, %p84
      %p87 = scmp.ne.s32.totalorder %s72, %s86
      %p88 = scmp.eq.s32.totalorder %s20, 0
      %p89 = por %p87, %p88
      %s91 = sadd.s32 %s90, 1
      %p94 = scmp.eq.s32.totalorder %s14, 1
      %p95 = scmp.ne.s32.totalorder %s90, %s92
      %p96 = scmp.eq.s32.totalorder %s14, 0
      %p97 = por %p95, %p96
      %p98 = scmp.ne.s32.totalorder %s90, %s92
      %p99 = scmp.eq.s32.totalorder %s19, 1
      %p100 = por %p98, %p99
      %p101 = scmp.ne.s32.totalorder %s92, %s93
      %p102 = scmp.eq.s32.totalorder %s19, 0
      %p103 = por %p101, %p102
      %p104 = scmp.ne.s32.totalorder %s92, %s93
      %p105 = scmp.eq.s32.totalorder %s20, 1
      %p106 = por %p104, %p105
      %p108 = scmp.ne.s32.totalorder %s93, %s107
      %p109 = scmp.eq.s32.totalorder %s20, 0
      %p110 = por %p108, %p109
      %s112 = sadd.s32 %s111, 1
      %p115 = scmp.eq.s32.totalorder %s14, 1
      %p116 = scmp.ne.s32.totalorder %s111, %s113
      %p117 = scmp.eq.s32.totalorder %s14, 0
      %p118 = por %p116, %p117
      %p119 = scmp.ne.s32.totalorder %s111, %s113
      %p120 = scmp.eq.s32.totalorder %s19, 1
      %p121 = por %p119, %p120
      %p122 = scmp.ne.s32.totalorder %s113, %s114
      %p123 = scmp.eq.s32.totalorder %s19, 0
      %p124 = por %p122, %p123
      %p125 = scmp.ne.s32.totalorder %s113, %s114
      %p126 = scmp.eq.s32.totalorder %s20, 1
      %p127 = por %p125, %p126
      %p129 = scmp.ne.s32.totalorder %s114, %s128
      %p130 = scmp.eq.s32.totalorder %s20, 0
      %p131 = por %p129, %p130
      %s132 = ssub.s32 %s14, %s21
      %p133 = scmp.eq.s32.totalorder %s132, 0
      %s135 = sadd.s32 %s134, 1
      %s136 = scalar_select %p133, %s134, %s135
      %p139 = pneg %p133
      %p140 = scmp.eq.s32.totalorder %s14, 1
      %p141 = por %p139, %p140
      %p142 = scmp.ne.s32.totalorder %s134, %s137
      %p143 = scmp.eq.s32.totalorder %s14, 0
      %p144 = por %p142, %p143
      %p145 = scmp.ne.s32.totalorder %s134, %s137
      %p146 = scmp.eq.s32.totalorder %s19, 1
      %p147 = por %p145, %p146
      %p148 = scmp.ne.s32.totalorder %s137, %s138
      %p149 = scmp.eq.s32.totalorder %s19, 0
      %p150 = por %p148, %p149
      %p151 = scmp.ne.s32.totalorder %s137, %s138
      %p152 = scmp.eq.s32.totalorder %s20, 1
      %p153 = por %p151, %p152
      %p155 = scmp.ne.s32.totalorder %s138, %s154
      %p156 = scmp.eq.s32.totalorder %s20, 0
      %p157 = por %p155, %p156
      %p158 = scmp.le.s32.totalorder 1, %s14
      %p159 = scmp.lt.s32.totalorder %s14, 3
      %p160 = pnand %p158, %p159
      %p161 = pneg %p160
      // Predicated region
      $region9: #{conv2d_extractor_forward.1} parent=5 // pred_check
        _
      $region10: #{conv2d_extractor_forward.1} parent=5 // pred_check_branch
        %163 = sbr.rel (%p160) target = $region12
      $region11: #{conv2d_extractor_forward.1} parent=5 // pred_region
        %s164 = ssub.s32 %s14, 1
        // Predicated region
        $region13: #{conv2d_extractor_forward.1} parent=11 // pred_check
          %p165 = pneg %p61
        $region14: #{conv2d_extractor_forward.1} parent=11 // pred_check_branch
          %167 = sbr.rel (%p165) target = $region16
        $region15: #{conv2d_extractor_forward.1} parent=11 // pred_region
          _
        $region16: #{conv2d_extractor_forward.1} parent=11 // pred_fallthru
          _
        // Predicated region
        $region17: #{conv2d_extractor_forward.1} parent=11 // pred_check
          %p168 = pneg %p82
        $region18: #{conv2d_extractor_forward.1} parent=11 // pred_check_branch
          %170 = sbr.rel (%p168) target = $region20
        $region19: #{conv2d_extractor_forward.1} parent=11 // pred_region
          _
        $region20: #{conv2d_extractor_forward.1} parent=11 // pred_fallthru
          _
        // Predicated region
        $region21: #{conv2d_extractor_forward.1} parent=11 // pred_check
          %p171 = pneg %p103
        $region22: #{conv2d_extractor_forward.1} parent=11 // pred_check_branch
          %173 = sbr.rel (%p171) target = $region24
        $region23: #{conv2d_extractor_forward.1} parent=11 // pred_region
          _
        $region24: #{conv2d_extractor_forward.1} parent=11 // pred_fallthru
          _
        // Predicated region
        $region25: #{conv2d_extractor_forward.1} parent=11 // pred_check
          %p174 = pneg %p124
        $region26: #{conv2d_extractor_forward.1} parent=11 // pred_check_branch
          %176 = sbr.rel (%p174) target = $region28
        $region27: #{conv2d_extractor_forward.1} parent=11 // pred_region
          _
        $region28: #{conv2d_extractor_forward.1} parent=11 // pred_fallthru
          _
      $region12: #{conv2d_extractor_forward.1} parent=5 // pred_fallthru
        _
      %p177 = scmp.lt.s32.totalorder %s14, 2
      // Predicated region
      $region29: #{conv2d_extractor_forward.1} parent=5 // pred_check
        %p178 = pneg %p177
      $region30: #{conv2d_extractor_forward.1} parent=5 // pred_check_branch
        %180 = sbr.rel (%p178) target = $region32
      $region31: #{conv2d_extractor_forward.1} parent=5 // pred_region
        // Predicated region
        $region33: #{conv2d_extractor_forward.1} parent=31 // pred_check
          %p181 = pneg %p34
        $region34: #{conv2d_extractor_forward.1} parent=31 // pred_check_branch
          %183 = sbr.rel (%p181) target = $region36
        $region35: #{conv2d_extractor_forward.1} parent=31 // pred_region
          %p184 = scmp.lt.s32.totalorder %s14, 1
          %s185 = scalar_select %p184, %s14, 1
          %s186 = smul.addr %s185, 96
          %s187 = scalar_lea.vmem %s0, %s186
        $region36: #{conv2d_extractor_forward.1} parent=31 // pred_fallthru
          _
      $region32: #{conv2d_extractor_forward.1} parent=5 // pred_fallthru
        _
      %p188 = scmp.le.s32.totalorder 1, %s14
      %p189 = scmp.lt.s32.totalorder %s14, 3
      %p190 = pnand %p188, %p189
      %p191 = pneg %p190
      // Predicated region
      $region37: #{conv2d_extractor_forward.1} parent=5 // pred_check
        _
      $region38: #{conv2d_extractor_forward.1} parent=5 // pred_check_branch
        %193 = sbr.rel (%p190) target = $region40
      $region39: #{conv2d_extractor_forward.1} parent=5 // pred_region
        %s194 = ssub.s32 %s14, 1
        %p195 = scmp.lt.s32.totalorder %s19, 1
        %s196 = scalar_select %p195, %s19, 1
        %s197 = smul.addr %s196, 96
        %s198 = scalar_lea.vmem %s0, %s197
        %p199 = pneg %p40
        %p200 = pneg %p37
        %p201 = pneg %p61
        %p202 = pneg %p58
        %p203 = pneg %p82
        %p204 = pneg %p79
        %p205 = pneg %p103
        %p206 = pneg %p100
        %p207 = pneg %p124
        %p208 = pneg %p121
        %p209 = pneg %p150
        %p210 = pneg %p147
        %s211 = sand.u32 %s137, 1
        %s212 = scalar_lea.sflag [#allocation4], %s211
        %s213 = sand.u32 %s137, 1
        %s214 = smul.addr %s213, 8
        %s215 = scalar_lea.vmem [#allocation3], %s214
        %p216 = scmp.lt.s32.totalorder %s19, 1
        %s217 = scalar_select %p216, %s19, 1
        %s218 = smul.addr %s217, 96
        %s219 = scalar_lea.vmem %s0, %s218
        %v221 = vld [vmem:[%s219] sm:$0x1]
        %v222 = vld [vmem:[%s219 + $0x1] sm:$0x1]
        %v223 = vld [vmem:[%s219 + $0x2] sm:$0x1]
        %v224 = vld [vmem:[%s219 + $0x3] sm:$0x1]
        %v225 = vld [vmem:[%s219 + $0x4] sm:$0x1]
        %v226 = vld [vmem:[%s1] sm:$0xff]
        %v227 = vld [vmem:[%s1 + $0x8] sm:$0xff]
        %v228 = vld [vmem:[%s1 + $0x10] sm:$0xff]
        %v229 = vld [vmem:[%s1 + $0x18] sm:$0xff]
        %v235 = vlaneseq
        %v236 = vshrl.u32 %v235, 7
        %v237 = vsub.s32 0, %v236
        %v238 = vrot.slane %v221, %v237
        %v239 = vlaneseq
        %v240 = vshrl.u32 %v239, 7
        %v241 = vsub.s32 0, %v240
        %v242 = vrot.slane %v222, %v241
        %v243 = vlaneseq
        %v244 = vshrl.u32 %v243, 7
        %v245 = vsub.s32 0, %v244
        %v246 = vrot.slane %v223, %v245
        %v247 = vlaneseq
        %v248 = vshrl.u32 %v247, 7
        %v249 = vsub.s32 0, %v248
        %v250 = vrot.slane %v224, %v249
        %v251 = vlaneseq
        %v252 = vshrl.u32 %v251, 7
        %v253 = vsub.s32 0, %v252
        %v254 = vrot.slane %v225, %v253
        %261 = vset.pattern.permute.xlu0 0
        %262 = vperm.xlu0 %261, %v226
        %v263 = vpop.permute.xlu0 %262
        %266 = vset.pattern.permute.xlu0 0
        %267 = vperm.xlu0 %266, %v227
        %v268 = vpop.permute.xlu0 %267
        %271 = vset.pattern.permute.xlu0 0
        %272 = vperm.xlu0 %271, %v228
        %v273 = vpop.permute.xlu0 %272
        %276 = vset.pattern.permute.xlu0 0
        %277 = vperm.xlu0 %276, %v229
        %v278 = vpop.permute.xlu0 %277
        %v280 = vmul.f32 %v238, %v263
        %v281 = vmul.f32 %v238, %v268
        %v282 = vmul.f32 %v238, %v273
        %v283 = vmul.f32 %v238, %v278
        %v284 = vmul.f32 %v242, %v263
        %v285 = vmul.f32 %v242, %v268
        %v286 = vmul.f32 %v242, %v273
        %v287 = vmul.f32 %v242, %v278
        %v288 = vmul.f32 %v246, %v263
        %v289 = vmul.f32 %v246, %v268
        %v290 = vmul.f32 %v246, %v273
        %v291 = vmul.f32 %v246, %v278
        %v292 = vmul.f32 %v250, %v263
        %v293 = vmul.f32 %v250, %v268
        %v294 = vmul.f32 %v250, %v273
        %v295 = vmul.f32 %v250, %v278
        %v296 = vmul.f32 %v254, %v263
        %v297 = vmul.f32 %v254, %v268
        %v298 = vmul.f32 %v254, %v273
        %v299 = vmul.f32 %v254, %v278
        %v300 = vadd.f32 %v280, 0.0
        %v301 = vadd.f32 %v281, 0.0
        %v302 = vadd.f32 %v282, 0.0
        %v303 = vadd.f32 %v283, 0.0
        %v304 = vadd.f32 %v284, 0.0
        %v305 = vadd.f32 %v285, 0.0
        %v306 = vadd.f32 %v286, 0.0
        %v307 = vadd.f32 %v287, 0.0
        %v308 = vadd.f32 %v288, 0.0
        %v309 = vadd.f32 %v289, 0.0
        %v310 = vadd.f32 %v290, 0.0
        %v311 = vadd.f32 %v291, 0.0
        %v312 = vadd.f32 %v292, 0.0
        %v313 = vadd.f32 %v293, 0.0
        %v314 = vadd.f32 %v294, 0.0
        %v315 = vadd.f32 %v295, 0.0
        %v316 = vadd.f32 %v296, 0.0
        %v317 = vadd.f32 %v297, 0.0
        %v318 = vadd.f32 %v298, 0.0
        %v319 = vadd.f32 %v299, 0.0
        %s320 = scalar_lea.vmem %s219, 6
        %v321 = vld [vmem:[%s320] sm:$0x1]
        %v322 = vld [vmem:[%s320 + $0x1] sm:$0x1]
        %v323 = vld [vmem:[%s320 + $0x2] sm:$0x1]
        %v324 = vld [vmem:[%s320 + $0x3] sm:$0x1]
        %v325 = vld [vmem:[%s320 + $0x4] sm:$0x1]
        %s326 = scalar_lea.vmem %s1, 32
        %v327 = vld [vmem:[%s326] sm:$0xff]
        %v328 = vld [vmem:[%s326 + $0x8] sm:$0xff]
        %v329 = vld [vmem:[%s326 + $0x10] sm:$0xff]
        %v330 = vld [vmem:[%s326 + $0x18] sm:$0xff]
        %v336 = vlaneseq
        %v337 = vshrl.u32 %v336, 7
        %v338 = vsub.s32 0, %v337
        %v339 = vrot.slane %v321, %v338
        %v340 = vlaneseq
        %v341 = vshrl.u32 %v340, 7
        %v342 = vsub.s32 0, %v341
        %v343 = vrot.slane %v322, %v342
        %v344 = vlaneseq
        %v345 = vshrl.u32 %v344, 7
        %v346 = vsub.s32 0, %v345
        %v347 = vrot.slane %v323, %v346
        %v348 = vlaneseq
        %v349 = vshrl.u32 %v348, 7
        %v350 = vsub.s32 0, %v349
        %v351 = vrot.slane %v324, %v350
        %v352 = vlaneseq
        %v353 = vshrl.u32 %v352, 7
        %v354 = vsub.s32 0, %v353
        %v355 = vrot.slane %v325, %v354
        %362 = vset.pattern.permute.xlu0 0
        %363 = vperm.xlu0 %362, %v327
        %v364 = vpop.permute.xlu0 %363
        %367 = vset.pattern.permute.xlu0 0
        %368 = vperm.xlu0 %367, %v328
        %v369 = vpop.permute.xlu0 %368
        %372 = vset.pattern.permute.xlu0 0
        %373 = vperm.xlu0 %372, %v329
        %v374 = vpop.permute.xlu0 %373
        %377 = vset.pattern.permute.xlu0 0
        %378 = vperm.xlu0 %377, %v330
        %v379 = vpop.permute.xlu0 %378
        %v381 = vmul.f32 %v339, %v364
        %v382 = vmul.f32 %v339, %v369
        %v383 = vmul.f32 %v339, %v374
        %v384 = vmul.f32 %v339, %v379
        %v385 = vmul.f32 %v343, %v364
        %v386 = vmul.f32 %v343, %v369
        %v387 = vmul.f32 %v343, %v374
        %v388 = vmul.f32 %v343, %v379
        %v389 = vmul.f32 %v347, %v364
        %v390 = vmul.f32 %v347, %v369
        %v391 = vmul.f32 %v347, %v374
        %v392 = vmul.f32 %v347, %v379
        %v393 = vmul.f32 %v351, %v364
        %v394 = vmul.f32 %v351, %v369
        %v395 = vmul.f32 %v351, %v374
        %v396 = vmul.f32 %v351, %v379
        %v397 = vmul.f32 %v355, %v364
        %v398 = vmul.f32 %v355, %v369
        %v399 = vmul.f32 %v355, %v374
        %v400 = vmul.f32 %v355, %v379
        %v401 = vadd.f32 %v300, %v381
        %v402 = vadd.f32 %v301, %v382
        %v403 = vadd.f32 %v302, %v383
        %v404 = vadd.f32 %v303, %v384
        %v405 = vadd.f32 %v304, %v385
        %v406 = vadd.f32 %v305, %v386
        %v407 = vadd.f32 %v306, %v387
        %v408 = vadd.f32 %v307, %v388
        %v409 = vadd.f32 %v308, %v389
        %v410 = vadd.f32 %v309, %v390
        %v411 = vadd.f32 %v310, %v391
        %v412 = vadd.f32 %v311, %v392
        %v413 = vadd.f32 %v312, %v393
        %v414 = vadd.f32 %v313, %v394
        %v415 = vadd.f32 %v314, %v395
        %v416 = vadd.f32 %v315, %v396
        %v417 = vadd.f32 %v316, %v397
        %v418 = vadd.f32 %v317, %v398
        %v419 = vadd.f32 %v318, %v399
        %v420 = vadd.f32 %v319, %v400
        %s421 = scalar_lea.vmem %s219, 12
        %v422 = vld [vmem:[%s421] sm:$0x1]
        %v423 = vld [vmem:[%s421 + $0x1] sm:$0x1]
        %v424 = vld [vmem:[%s421 + $0x2] sm:$0x1]
        %v425 = vld [vmem:[%s421 + $0x3] sm:$0x1]
        %v426 = vld [vmem:[%s421 + $0x4] sm:$0x1]
        %s427 = scalar_lea.vmem %s1, 64
        %v428 = vld [vmem:[%s427] sm:$0xff]
        %v429 = vld [vmem:[%s427 + $0x8] sm:$0xff]
        %v430 = vld [vmem:[%s427 + $0x10] sm:$0xff]
        %v431 = vld [vmem:[%s427 + $0x18] sm:$0xff]
        %v437 = vlaneseq
        %v438 = vshrl.u32 %v437, 7
        %v439 = vsub.s32 0, %v438
        %v440 = vrot.slane %v422, %v439
        %v441 = vlaneseq
        %v442 = vshrl.u32 %v441, 7
        %v443 = vsub.s32 0, %v442
        %v444 = vrot.slane %v423, %v443
        %v445 = vlaneseq
        %v446 = vshrl.u32 %v445, 7
        %v447 = vsub.s32 0, %v446
        %v448 = vrot.slane %v424, %v447
        %v449 = vlaneseq
        %v450 = vshrl.u32 %v449, 7
        %v451 = vsub.s32 0, %v450
        %v452 = vrot.slane %v425, %v451
        %v453 = vlaneseq
        %v454 = vshrl.u32 %v453, 7
        %v455 = vsub.s32 0, %v454
        %v456 = vrot.slane %v426, %v455
        %463 = vset.pattern.permute.xlu0 0
        %464 = vperm.xlu0 %463, %v428
        %v465 = vpop.permute.xlu0 %464
        %468 = vset.pattern.permute.xlu0 0
        %469 = vperm.xlu0 %468, %v429
        %v470 = vpop.permute.xlu0 %469
        %473 = vset.pattern.permute.xlu0 0
        %474 = vperm.xlu0 %473, %v430
        %v475 = vpop.permute.xlu0 %474
        %478 = vset.pattern.permute.xlu0 0
        %479 = vperm.xlu0 %478, %v431
        %v480 = vpop.permute.xlu0 %479
        %v482 = vmul.f32 %v440, %v465
        %v483 = vmul.f32 %v440, %v470
        %v484 = vmul.f32 %v440, %v475
        %v485 = vmul.f32 %v440, %v480
        %v486 = vmul.f32 %v444, %v465
        %v487 = vmul.f32 %v444, %v470
        %v488 = vmul.f32 %v444, %v475
        %v489 = vmul.f32 %v444, %v480
        %v490 = vmul.f32 %v448, %v465
        %v491 = vmul.f32 %v448, %v470
        %v492 = vmul.f32 %v448, %v475
        %v493 = vmul.f32 %v448, %v480
        %v494 = vmul.f32 %v452, %v465
        %v495 = vmul.f32 %v452, %v470
        %v496 = vmul.f32 %v452, %v475
        %v497 = vmul.f32 %v452, %v480
        %v498 = vmul.f32 %v456, %v465
        %v499 = vmul.f32 %v456, %v470
        %v500 = vmul.f32 %v456, %v475
        %v501 = vmul.f32 %v456, %v480
        %v502 = vadd.f32 %v401, %v482
        %v503 = vadd.f32 %v402, %v483
        %v504 = vadd.f32 %v403, %v484
        %v505 = vadd.f32 %v404, %v485
        %v506 = vadd.f32 %v405, %v486
        %v507 = vadd.f32 %v406, %v487
        %v508 = vadd.f32 %v407, %v488
        %v509 = vadd.f32 %v408, %v489
        %v510 = vadd.f32 %v409, %v490
        %v511 = vadd.f32 %v410, %v491
        %v512 = vadd.f32 %v411, %v492
        %v513 = vadd.f32 %v412, %v493
        %v514 = vadd.f32 %v413, %v494
        %v515 = vadd.f32 %v414, %v495
        %v516 = vadd.f32 %v415, %v496
        %v517 = vadd.f32 %v416, %v497
        %v518 = vadd.f32 %v417, %v498
        %v519 = vadd.f32 %v418, %v499
        %v520 = vadd.f32 %v419, %v500
        %v521 = vadd.f32 %v420, %v501
        %s522 = scalar_lea.vmem %s219, 24
        %v523 = vld [vmem:[%s522] sm:$0x1]
        %v524 = vld [vmem:[%s522 + $0x1] sm:$0x1]
        %v525 = vld [vmem:[%s522 + $0x2] sm:$0x1]
        %v526 = vld [vmem:[%s522 + $0x3] sm:$0x1]
        %v527 = vld [vmem:[%s522 + $0x4] sm:$0x1]
        %s528 = scalar_lea.vmem %s1, 96
        %v529 = vld [vmem:[%s528] sm:$0xff]
        %v530 = vld [vmem:[%s528 + $0x8] sm:$0xff]
        %v531 = vld [vmem:[%s528 + $0x10] sm:$0xff]
        %v532 = vld [vmem:[%s528 + $0x18] sm:$0xff]
        %v538 = vlaneseq
        %v539 = vshrl.u32 %v538, 7
        %v540 = vsub.s32 0, %v539
        %v541 = vrot.slane %v523, %v540
        %v542 = vlaneseq
        %v543 = vshrl.u32 %v542, 7
        %v544 = vsub.s32 0, %v543
        %v545 = vrot.slane %v524, %v544
        %v546 = vlaneseq
        %v547 = vshrl.u32 %v546, 7
        %v548 = vsub.s32 0, %v547
        %v549 = vrot.slane %v525, %v548
        %v550 = vlaneseq
        %v551 = vshrl.u32 %v550, 7
        %v552 = vsub.s32 0, %v551
        %v553 = vrot.slane %v526, %v552
        %v554 = vlaneseq
        %v555 = vshrl.u32 %v554, 7
        %v556 = vsub.s32 0, %v555
        %v557 = vrot.slane %v527, %v556
        %564 = vset.pattern.permute.xlu0 0
        %565 = vperm.xlu0 %564, %v529
        %v566 = vpop.permute.xlu0 %565
        %569 = vset.pattern.permute.xlu0 0
        %570 = vperm.xlu0 %569, %v530
        %v571 = vpop.permute.xlu0 %570
        %574 = vset.pattern.permute.xlu0 0
        %575 = vperm.xlu0 %574, %v531
        %v576 = vpop.permute.xlu0 %575
        %579 = vset.pattern.permute.xlu0 0
        %580 = vperm.xlu0 %579, %v532
        %v581 = vpop.permute.xlu0 %580
        %v583 = vmul.f32 %v541, %v566
        %v584 = vmul.f32 %v541, %v571
        %v585 = vmul.f32 %v541, %v576
        %v586 = vmul.f32 %v541, %v581
        %v587 = vmul.f32 %v545, %v566
        %v588 = vmul.f32 %v545, %v571
        %v589 = vmul.f32 %v545, %v576
        %v590 = vmul.f32 %v545, %v581
        %v591 = vmul.f32 %v549, %v566
        %v592 = vmul.f32 %v549, %v571
        %v593 = vmul.f32 %v549, %v576
        %v594 = vmul.f32 %v549, %v581
        %v595 = vmul.f32 %v553, %v566
        %v596 = vmul.f32 %v553, %v571
        %v597 = vmul.f32 %v553, %v576
        %v598 = vmul.f32 %v553, %v581
        %v599 = vmul.f32 %v557, %v566
        %v600 = vmul.f32 %v557, %v571
        %v601 = vmul.f32 %v557, %v576
        %v602 = vmul.f32 %v557, %v581
        %v603 = vadd.f32 %v502, %v583
        %v604 = vadd.f32 %v503, %v584
        %v605 = vadd.f32 %v504, %v585
        %v606 = vadd.f32 %v505, %v586
        %v607 = vadd.f32 %v506, %v587
        %v608 = vadd.f32 %v507, %v588
        %v609 = vadd.f32 %v508, %v589
        %v610 = vadd.f32 %v509, %v590
        %v611 = vadd.f32 %v510, %v591
        %v612 = vadd.f32 %v511, %v592
        %v613 = vadd.f32 %v512, %v593
        %v614 = vadd.f32 %v513, %v594
        %v615 = vadd.f32 %v514, %v595
        %v616 = vadd.f32 %v515, %v596
        %v617 = vadd.f32 %v516, %v597
        %v618 = vadd.f32 %v517, %v598
        %v619 = vadd.f32 %v518, %v599
        %v620 = vadd.f32 %v519, %v600
        %v621 = vadd.f32 %v520, %v601
        %v622 = vadd.f32 %v521, %v602
        %s623 = scalar_lea.vmem %s219, 30
        %v624 = vld [vmem:[%s623] sm:$0x1]
        %v625 = vld [vmem:[%s623 + $0x1] sm:$0x1]
        %v626 = vld [vmem:[%s623 + $0x2] sm:$0x1]
        %v627 = vld [vmem:[%s623 + $0x3] sm:$0x1]
        %v628 = vld [vmem:[%s623 + $0x4] sm:$0x1]
        %s629 = scalar_lea.vmem %s1, 128
        %v630 = vld [vmem:[%s629] sm:$0xff]
        %v631 = vld [vmem:[%s629 + $0x8] sm:$0xff]
        %v632 = vld [vmem:[%s629 + $0x10] sm:$0xff]
        %v633 = vld [vmem:[%s629 + $0x18] sm:$0xff]
        %v639 = vlaneseq
        %v640 = vshrl.u32 %v639, 7
        %v641 = vsub.s32 0, %v640
        %v642 = vrot.slane %v624, %v641
        %v643 = vlaneseq
        %v644 = vshrl.u32 %v643, 7
        %v645 = vsub.s32 0, %v644
        %v646 = vrot.slane %v625, %v645
        %v647 = vlaneseq
        %v648 = vshrl.u32 %v647, 7
        %v649 = vsub.s32 0, %v648
        %v650 = vrot.slane %v626, %v649
        %v651 = vlaneseq
        %v652 = vshrl.u32 %v651, 7
        %v653 = vsub.s32 0, %v652
        %v654 = vrot.slane %v627, %v653
        %v655 = vlaneseq
        %v656 = vshrl.u32 %v655, 7
        %v657 = vsub.s32 0, %v656
        %v658 = vrot.slane %v628, %v657
        %665 = vset.pattern.permute.xlu0 0
        %666 = vperm.xlu0 %665, %v630
        %v667 = vpop.permute.xlu0 %666
        %670 = vset.pattern.permute.xlu0 0
        %671 = vperm.xlu0 %670, %v631
        %v672 = vpop.permute.xlu0 %671
        %675 = vset.pattern.permute.xlu0 0
        %676 = vperm.xlu0 %675, %v632
        %v677 = vpop.permute.xlu0 %676
        %680 = vset.pattern.permute.xlu0 0
        %681 = vperm.xlu0 %680, %v633
        %v682 = vpop.permute.xlu0 %681
        %v684 = vmul.f32 %v642, %v667
        %v685 = vmul.f32 %v642, %v672
        %v686 = vmul.f32 %v642, %v677
        %v687 = vmul.f32 %v642, %v682
        %v688 = vmul.f32 %v646, %v667
        %v689 = vmul.f32 %v646, %v672
        %v690 = vmul.f32 %v646, %v677
        %v691 = vmul.f32 %v646, %v682
        %v692 = vmul.f32 %v650, %v667
        %v693 = vmul.f32 %v650, %v672
        %v694 = vmul.f32 %v650, %v677
        %v695 = vmul.f32 %v650, %v682
        %v696 = vmul.f32 %v654, %v667
        %v697 = vmul.f32 %v654, %v672
        %v698 = vmul.f32 %v654, %v677
        %v699 = vmul.f32 %v654, %v682
        %v700 = vmul.f32 %v658, %v667
        %v701 = vmul.f32 %v658, %v672
        %v702 = vmul.f32 %v658, %v677
        %v703 = vmul.f32 %v658, %v682
        %v704 = vadd.f32 %v603, %v684
        %v705 = vadd.f32 %v604, %v685
        %v706 = vadd.f32 %v605, %v686
        %v707 = vadd.f32 %v606, %v687
        %v708 = vadd.f32 %v607, %v688
        %v709 = vadd.f32 %v608, %v689
        %v710 = vadd.f32 %v609, %v690
        %v711 = vadd.f32 %v610, %v691
        %v712 = vadd.f32 %v611, %v692
        %v713 = vadd.f32 %v612, %v693
        %v714 = vadd.f32 %v613, %v694
        %v715 = vadd.f32 %v614, %v695
        %v716 = vadd.f32 %v615, %v696
        %v717 = vadd.f32 %v616, %v697
        %v718 = vadd.f32 %v617, %v698
        %v719 = vadd.f32 %v618, %v699
        %v720 = vadd.f32 %v619, %v700
        %v721 = vadd.f32 %v620, %v701
        %v722 = vadd.f32 %v621, %v702
        %v723 = vadd.f32 %v622, %v703
        %s724 = scalar_lea.vmem %s219, 36
        %v725 = vld [vmem:[%s724] sm:$0x1]
        %v726 = vld [vmem:[%s724 + $0x1] sm:$0x1]
        %v727 = vld [vmem:[%s724 + $0x2] sm:$0x1]
        %v728 = vld [vmem:[%s724 + $0x3] sm:$0x1]
        %v729 = vld [vmem:[%s724 + $0x4] sm:$0x1]
        %s730 = scalar_lea.vmem %s1, 160
        %v731 = vld [vmem:[%s730] sm:$0xff]
        %v732 = vld [vmem:[%s730 + $0x8] sm:$0xff]
        %v733 = vld [vmem:[%s730 + $0x10] sm:$0xff]
        %v734 = vld [vmem:[%s730 + $0x18] sm:$0xff]
        %v740 = vlaneseq
        %v741 = vshrl.u32 %v740, 7
        %v742 = vsub.s32 0, %v741
        %v743 = vrot.slane %v725, %v742
        %v744 = vlaneseq
        %v745 = vshrl.u32 %v744, 7
        %v746 = vsub.s32 0, %v745
        %v747 = vrot.slane %v726, %v746
        %v748 = vlaneseq
        %v749 = vshrl.u32 %v748, 7
        %v750 = vsub.s32 0, %v749
        %v751 = vrot.slane %v727, %v750
        %v752 = vlaneseq
        %v753 = vshrl.u32 %v752, 7
        %v754 = vsub.s32 0, %v753
        %v755 = vrot.slane %v728, %v754
        %v756 = vlaneseq
        %v757 = vshrl.u32 %v756, 7
        %v758 = vsub.s32 0, %v757
        %v759 = vrot.slane %v729, %v758
        %766 = vset.pattern.permute.xlu0 0
        %767 = vperm.xlu0 %766, %v731
        %v768 = vpop.permute.xlu0 %767
        %771 = vset.pattern.permute.xlu0 0
        %772 = vperm.xlu0 %771, %v732
        %v773 = vpop.permute.xlu0 %772
        %776 = vset.pattern.permute.xlu0 0
        %777 = vperm.xlu0 %776, %v733
        %v778 = vpop.permute.xlu0 %777
        %781 = vset.pattern.permute.xlu0 0
        %782 = vperm.xlu0 %781, %v734
        %v783 = vpop.permute.xlu0 %782
        %v785 = vmul.f32 %v743, %v768
        %v786 = vmul.f32 %v743, %v773
        %v787 = vmul.f32 %v743, %v778
        %v788 = vmul.f32 %v743, %v783
        %v789 = vmul.f32 %v747, %v768
        %v790 = vmul.f32 %v747, %v773
        %v791 = vmul.f32 %v747, %v778
        %v792 = vmul.f32 %v747, %v783
        %v793 = vmul.f32 %v751, %v768
        %v794 = vmul.f32 %v751, %v773
        %v795 = vmul.f32 %v751, %v778
        %v796 = vmul.f32 %v751, %v783
        %v797 = vmul.f32 %v755, %v768
        %v798 = vmul.f32 %v755, %v773
        %v799 = vmul.f32 %v755, %v778
        %v800 = vmul.f32 %v755, %v783
        %v801 = vmul.f32 %v759, %v768
        %v802 = vmul.f32 %v759, %v773
        %v803 = vmul.f32 %v759, %v778
        %v804 = vmul.f32 %v759, %v783
        %v805 = vadd.f32 %v704, %v785
        %v806 = vadd.f32 %v705, %v786
        %v807 = vadd.f32 %v706, %v787
        %v808 = vadd.f32 %v707, %v788
        %v809 = vadd.f32 %v708, %v789
        %v810 = vadd.f32 %v709, %v790
        %v811 = vadd.f32 %v710, %v791
        %v812 = vadd.f32 %v711, %v792
        %v813 = vadd.f32 %v712, %v793
        %v814 = vadd.f32 %v713, %v794
        %v815 = vadd.f32 %v714, %v795
        %v816 = vadd.f32 %v715, %v796
        %v817 = vadd.f32 %v716, %v797
        %v818 = vadd.f32 %v717, %v798
        %v819 = vadd.f32 %v718, %v799
        %v820 = vadd.f32 %v719, %v800
        %v821 = vadd.f32 %v720, %v801
        %v822 = vadd.f32 %v721, %v802
        %v823 = vadd.f32 %v722, %v803
        %v824 = vadd.f32 %v723, %v804
        %s825 = scalar_lea.vmem %s219, 48
        %v826 = vld [vmem:[%s825] sm:$0x1]
        %v827 = vld [vmem:[%s825 + $0x1] sm:$0x1]
        %v828 = vld [vmem:[%s825 + $0x2] sm:$0x1]
        %v829 = vld [vmem:[%s825 + $0x3] sm:$0x1]
        %v830 = vld [vmem:[%s825 + $0x4] sm:$0x1]
        %s831 = scalar_lea.vmem %s1, 192
        %v832 = vld [vmem:[%s831] sm:$0xff]
        %v833 = vld [vmem:[%s831 + $0x8] sm:$0xff]
        %v834 = vld [vmem:[%s831 + $0x10] sm:$0xff]
        %v835 = vld [vmem:[%s831 + $0x18] sm:$0xff]
        %v841 = vlaneseq
        %v842 = vshrl.u32 %v841, 7
        %v843 = vsub.s32 0, %v842
        %v844 = vrot.slane %v826, %v843
        %v845 = vlaneseq
        %v846 = vshrl.u32 %v845, 7
        %v847 = vsub.s32 0, %v846
        %v848 = vrot.slane %v827, %v847
        %v849 = vlaneseq
        %v850 = vshrl.u32 %v849, 7
        %v851 = vsub.s32 0, %v850
        %v852 = vrot.slane %v828, %v851
        %v853 = vlaneseq
        %v854 = vshrl.u32 %v853, 7
        %v855 = vsub.s32 0, %v854
        %v856 = vrot.slane %v829, %v855
        %v857 = vlaneseq
        %v858 = vshrl.u32 %v857, 7
        %v859 = vsub.s32 0, %v858
        %v860 = vrot.slane %v830, %v859
        %867 = vset.pattern.permute.xlu0 0
        %868 = vperm.xlu0 %867, %v832
        %v869 = vpop.permute.xlu0 %868
        %872 = vset.pattern.permute.xlu0 0
        %873 = vperm.xlu0 %872, %v833
        %v874 = vpop.permute.xlu0 %873
        %877 = vset.pattern.permute.xlu0 0
        %878 = vperm.xlu0 %877, %v834
        %v879 = vpop.permute.xlu0 %878
        %882 = vset.pattern.permute.xlu0 0
        %883 = vperm.xlu0 %882, %v835
        %v884 = vpop.permute.xlu0 %883
        %v886 = vmul.f32 %v844, %v869
        %v887 = vmul.f32 %v844, %v874
        %v888 = vmul.f32 %v844, %v879
        %v889 = vmul.f32 %v844, %v884
        %v890 = vmul.f32 %v848, %v869
        %v891 = vmul.f32 %v848, %v874
        %v892 = vmul.f32 %v848, %v879
        %v893 = vmul.f32 %v848, %v884
        %v894 = vmul.f32 %v852, %v869
        %v895 = vmul.f32 %v852, %v874
        %v896 = vmul.f32 %v852, %v879
        %v897 = vmul.f32 %v852, %v884
        %v898 = vmul.f32 %v856, %v869
        %v899 = vmul.f32 %v856, %v874
        %v900 = vmul.f32 %v856, %v879
        %v901 = vmul.f32 %v856, %v884
        %v902 = vmul.f32 %v860, %v869
        %v903 = vmul.f32 %v860, %v874
        %v904 = vmul.f32 %v860, %v879
        %v905 = vmul.f32 %v860, %v884
        %v906 = vadd.f32 %v805, %v886
        %v907 = vadd.f32 %v806, %v887
        %v908 = vadd.f32 %v807, %v888
        %v909 = vadd.f32 %v808, %v889
        %v910 = vadd.f32 %v809, %v890
        %v911 = vadd.f32 %v810, %v891
        %v912 = vadd.f32 %v811, %v892
        %v913 = vadd.f32 %v812, %v893
        %v914 = vadd.f32 %v813, %v894
        %v915 = vadd.f32 %v814, %v895
        %v916 = vadd.f32 %v815, %v896
        %v917 = vadd.f32 %v816, %v897
        %v918 = vadd.f32 %v817, %v898
        %v919 = vadd.f32 %v818, %v899
        %v920 = vadd.f32 %v819, %v900
        %v921 = vadd.f32 %v820, %v901
        %v922 = vadd.f32 %v821, %v902
        %v923 = vadd.f32 %v822, %v903
        %v924 = vadd.f32 %v823, %v904
        %v925 = vadd.f32 %v824, %v905
        %s926 = scalar_lea.vmem %s219, 54
        %v927 = vld [vmem:[%s926] sm:$0x1]
        %v928 = vld [vmem:[%s926 + $0x1] sm:$0x1]
        %v929 = vld [vmem:[%s926 + $0x2] sm:$0x1]
        %v930 = vld [vmem:[%s926 + $0x3] sm:$0x1]
        %v931 = vld [vmem:[%s926 + $0x4] sm:$0x1]
        %s932 = scalar_lea.vmem %s1, 224
        %v933 = vld [vmem:[%s932] sm:$0xff]
        %v934 = vld [vmem:[%s932 + $0x8] sm:$0xff]
        %v935 = vld [vmem:[%s932 + $0x10] sm:$0xff]
        %v936 = vld [vmem:[%s932 + $0x18] sm:$0xff]
        %v942 = vlaneseq
        %v943 = vshrl.u32 %v942, 7
        %v944 = vsub.s32 0, %v943
        %v945 = vrot.slane %v927, %v944
        %v946 = vlaneseq
        %v947 = vshrl.u32 %v946, 7
        %v948 = vsub.s32 0, %v947
        %v949 = vrot.slane %v928, %v948
        %v950 = vlaneseq
        %v951 = vshrl.u32 %v950, 7
        %v952 = vsub.s32 0, %v951
        %v953 = vrot.slane %v929, %v952
        %v954 = vlaneseq
        %v955 = vshrl.u32 %v954, 7
        %v956 = vsub.s32 0, %v955
        %v957 = vrot.slane %v930, %v956
        %v958 = vlaneseq
        %v959 = vshrl.u32 %v958, 7
        %v960 = vsub.s32 0, %v959
        %v961 = vrot.slane %v931, %v960
        %968 = vset.pattern.permute.xlu0 0
        %969 = vperm.xlu0 %968, %v933
        %v970 = vpop.permute.xlu0 %969
        %973 = vset.pattern.permute.xlu0 0
        %974 = vperm.xlu0 %973, %v934
        %v975 = vpop.permute.xlu0 %974
        %978 = vset.pattern.permute.xlu0 0
        %979 = vperm.xlu0 %978, %v935
        %v980 = vpop.permute.xlu0 %979
        %983 = vset.pattern.permute.xlu0 0
        %984 = vperm.xlu0 %983, %v936
        %v985 = vpop.permute.xlu0 %984
        %v987 = vmul.f32 %v945, %v970
        %v988 = vmul.f32 %v945, %v975
        %v989 = vmul.f32 %v945, %v980
        %v990 = vmul.f32 %v945, %v985
        %v991 = vmul.f32 %v949, %v970
        %v992 = vmul.f32 %v949, %v975
        %v993 = vmul.f32 %v949, %v980
        %v994 = vmul.f32 %v949, %v985
        %v995 = vmul.f32 %v953, %v970
        %v996 = vmul.f32 %v953, %v975
        %v997 = vmul.f32 %v953, %v980
        %v998 = vmul.f32 %v953, %v985
        %v999 = vmul.f32 %v957, %v970
        %v1000 = vmul.f32 %v957, %v975
        %v1001 = vmul.f32 %v957, %v980
        %v1002 = vmul.f32 %v957, %v985
        %v1003 = vmul.f32 %v961, %v970
        %v1004 = vmul.f32 %v961, %v975
        %v1005 = vmul.f32 %v961, %v980
        %v1006 = vmul.f32 %v961, %v985
        %v1007 = vadd.f32 %v906, %v987
        %v1008 = vadd.f32 %v907, %v988
        %v1009 = vadd.f32 %v908, %v989
        %v1010 = vadd.f32 %v909, %v990
        %v1011 = vadd.f32 %v910, %v991
        %v1012 = vadd.f32 %v911, %v992
        %v1013 = vadd.f32 %v912, %v993
        %v1014 = vadd.f32 %v913, %v994
        %v1015 = vadd.f32 %v914, %v995
        %v1016 = vadd.f32 %v915, %v996
        %v1017 = vadd.f32 %v916, %v997
        %v1018 = vadd.f32 %v917, %v998
        %v1019 = vadd.f32 %v918, %v999
        %v1020 = vadd.f32 %v919, %v1000
        %v1021 = vadd.f32 %v920, %v1001
        %v1022 = vadd.f32 %v921, %v1002
        %v1023 = vadd.f32 %v922, %v1003
        %v1024 = vadd.f32 %v923, %v1004
        %v1025 = vadd.f32 %v924, %v1005
        %v1026 = vadd.f32 %v925, %v1006
        %s1027 = scalar_lea.vmem %s219, 60
        %v1028 = vld [vmem:[%s1027] sm:$0x1]
        %v1029 = vld [vmem:[%s1027 + $0x1] sm:$0x1]
        %v1030 = vld [vmem:[%s1027 + $0x2] sm:$0x1]
        %v1031 = vld [vmem:[%s1027 + $0x3] sm:$0x1]
        %v1032 = vld [vmem:[%s1027 + $0x4] sm:$0x1]
        %s1033 = scalar_lea.vmem %s1, 256
        %v1034 = vld [vmem:[%s1033] sm:$0xff]
        %v1035 = vld [vmem:[%s1033 + $0x8] sm:$0xff]
        %v1036 = vld [vmem:[%s1033 + $0x10] sm:$0xff]
        %v1037 = vld [vmem:[%s1033 + $0x18] sm:$0xff]
        %v1043 = vlaneseq
        %v1044 = vshrl.u32 %v1043, 7
        %v1045 = vsub.s32 0, %v1044
        %v1046 = vrot.slane %v1028, %v1045
        %v1047 = vlaneseq
        %v1048 = vshrl.u32 %v1047, 7
        %v1049 = vsub.s32 0, %v1048
        %v1050 = vrot.slane %v1029, %v1049
        %v1051 = vlaneseq
        %v1052 = vshrl.u32 %v1051, 7
        %v1053 = vsub.s32 0, %v1052
        %v1054 = vrot.slane %v1030, %v1053
        %v1055 = vlaneseq
        %v1056 = vshrl.u32 %v1055, 7
        %v1057 = vsub.s32 0, %v1056
        %v1058 = vrot.slane %v1031, %v1057
        %v1059 = vlaneseq
        %v1060 = vshrl.u32 %v1059, 7
        %v1061 = vsub.s32 0, %v1060
        %v1062 = vrot.slane %v1032, %v1061
        %1069 = vset.pattern.permute.xlu0 0
        %1070 = vperm.xlu0 %1069, %v1034
        %v1071 = vpop.permute.xlu0 %1070
        %1074 = vset.pattern.permute.xlu0 0
        %1075 = vperm.xlu0 %1074, %v1035
        %v1076 = vpop.permute.xlu0 %1075
        %1079 = vset.pattern.permute.xlu0 0
        %1080 = vperm.xlu0 %1079, %v1036
        %v1081 = vpop.permute.xlu0 %1080
        %1084 = vset.pattern.permute.xlu0 0
        %1085 = vperm.xlu0 %1084, %v1037
        %v1086 = vpop.permute.xlu0 %1085
        %v1088 = vmul.f32 %v1046, %v1071
        %v1089 = vmul.f32 %v1046, %v1076
        %v1090 = vmul.f32 %v1046, %v1081
        %v1091 = vmul.f32 %v1046, %v1086
        %v1092 = vmul.f32 %v1050, %v1071
        %v1093 = vmul.f32 %v1050, %v1076
        %v1094 = vmul.f32 %v1050, %v1081
        %v1095 = vmul.f32 %v1050, %v1086
        %v1096 = vmul.f32 %v1054, %v1071
        %v1097 = vmul.f32 %v1054, %v1076
        %v1098 = vmul.f32 %v1054, %v1081
        %v1099 = vmul.f32 %v1054, %v1086
        %v1100 = vmul.f32 %v1058, %v1071
        %v1101 = vmul.f32 %v1058, %v1076
        %v1102 = vmul.f32 %v1058, %v1081
        %v1103 = vmul.f32 %v1058, %v1086
        %v1104 = vmul.f32 %v1062, %v1071
        %v1105 = vmul.f32 %v1062, %v1076
        %v1106 = vmul.f32 %v1062, %v1081
        %v1107 = vmul.f32 %v1062, %v1086
        %v1108 = vadd.f32 %v1007, %v1088
        %v1109 = vadd.f32 %v1008, %v1089
        %v1110 = vadd.f32 %v1009, %v1090
        %v1111 = vadd.f32 %v1010, %v1091
        %v1112 = vadd.f32 %v1011, %v1092
        %v1113 = vadd.f32 %v1012, %v1093
        %v1114 = vadd.f32 %v1013, %v1094
        %v1115 = vadd.f32 %v1014, %v1095
        %v1116 = vadd.f32 %v1015, %v1096
        %v1117 = vadd.f32 %v1016, %v1097
        %v1118 = vadd.f32 %v1017, %v1098
        %v1119 = vadd.f32 %v1018, %v1099
        %v1120 = vadd.f32 %v1019, %v1100
        %v1121 = vadd.f32 %v1020, %v1101
        %v1122 = vadd.f32 %v1021, %v1102
        %v1123 = vadd.f32 %v1022, %v1103
        %v1124 = vadd.f32 %v1023, %v1104
        %v1125 = vadd.f32 %v1024, %v1105
        %v1126 = vadd.f32 %v1025, %v1106
        %v1127 = vadd.f32 %v1026, %v1107
        %v1128 = vld [vmem:[%s2] sm:$0xff]
        %v1129 = vld [vmem:[%s2 + $0x8] sm:$0xff]
        %v1130 = vld [vmem:[%s2 + $0x10] sm:$0xff]
        %v1131 = vld [vmem:[%s2 + $0x18] sm:$0xff]
        %1133 = vset.pattern.permute.xlu0 0
        %1134 = vperm.xlu0 %1133, %v1128
        %v1135 = vpop.permute.xlu0 %1134
        %1138 = vset.pattern.permute.xlu0 0
        %1139 = vperm.xlu0 %1138, %v1129
        %v1140 = vpop.permute.xlu0 %1139
        %1143 = vset.pattern.permute.xlu0 0
        %1144 = vperm.xlu0 %1143, %v1130
        %v1145 = vpop.permute.xlu0 %1144
        %1148 = vset.pattern.permute.xlu0 0
        %1149 = vperm.xlu0 %1148, %v1131
        %v1150 = vpop.permute.xlu0 %1149
        %v1152 = vadd.f32 %v1108, %v1135
        %v1153 = vadd.f32 %v1109, %v1140
        %v1154 = vadd.f32 %v1110, %v1145
        %v1155 = vadd.f32 %v1111, %v1150
        %v1156 = vadd.f32 %v1112, %v1135
        %v1157 = vadd.f32 %v1113, %v1140
        %v1158 = vadd.f32 %v1114, %v1145
        %v1159 = vadd.f32 %v1115, %v1150
        %v1160 = vadd.f32 %v1116, %v1135
        %v1161 = vadd.f32 %v1117, %v1140
        %v1162 = vadd.f32 %v1118, %v1145
        %v1163 = vadd.f32 %v1119, %v1150
        %v1164 = vadd.f32 %v1120, %v1135
        %v1165 = vadd.f32 %v1121, %v1140
        %v1166 = vadd.f32 %v1122, %v1145
        %v1167 = vadd.f32 %v1123, %v1150
        %v1168 = vadd.f32 %v1124, %v1135
        %v1169 = vadd.f32 %v1125, %v1140
        %v1170 = vadd.f32 %v1126, %v1145
        %v1171 = vadd.f32 %v1127, %v1150
        %v1172 = vmax.f32 %v1152, 0.0
        %v1173 = vmax.f32 %v1153, 0.0
        %v1174 = vmax.f32 %v1154, 0.0
        %v1175 = vmax.f32 %v1155, 0.0
        %v1176 = vmax.f32 %v1156, 0.0
        %v1177 = vmax.f32 %v1157, 0.0
        %v1178 = vmax.f32 %v1158, 0.0
        %v1179 = vmax.f32 %v1159, 0.0
        %v1180 = vmax.f32 %v1160, 0.0
        %v1181 = vmax.f32 %v1161, 0.0
        %v1182 = vmax.f32 %v1162, 0.0
        %v1183 = vmax.f32 %v1163, 0.0
        %v1184 = vmax.f32 %v1164, 0.0
        %v1185 = vmax.f32 %v1165, 0.0
        %v1186 = vmax.f32 %v1166, 0.0
        %v1187 = vmax.f32 %v1167, 0.0
        %v1188 = vmax.f32 %v1168, 0.0
        %v1189 = vmax.f32 %v1169, 0.0
        %v1190 = vmax.f32 %v1170, 0.0
        %v1191 = vmax.f32 %v1171, 0.0
        %v1192 = vmin.f32 %v1172, 20.0
        %v1193 = vmin.f32 %v1173, 20.0
        %v1194 = vmin.f32 %v1174, 20.0
        %v1195 = vmin.f32 %v1175, 20.0
        %v1196 = vmin.f32 %v1176, 20.0
        %v1197 = vmin.f32 %v1177, 20.0
        %v1198 = vmin.f32 %v1178, 20.0
        %v1199 = vmin.f32 %v1179, 20.0
        %v1200 = vmin.f32 %v1180, 20.0
        %v1201 = vmin.f32 %v1181, 20.0
        %v1202 = vmin.f32 %v1182, 20.0
        %v1203 = vmin.f32 %v1183, 20.0
        %v1204 = vmin.f32 %v1184, 20.0
        %v1205 = vmin.f32 %v1185, 20.0
        %v1206 = vmin.f32 %v1186, 20.0
        %v1207 = vmin.f32 %v1187, 20.0
        %v1208 = vmin.f32 %v1188, 20.0
        %v1209 = vmin.f32 %v1189, 20.0
        %v1210 = vmin.f32 %v1190, 20.0
        %v1211 = vmin.f32 %v1191, 20.0
        %v1212 = vpack.c.bf16 %v1193, %v1192
        %v1213 = vpack.c.bf16 %v1195, %v1194
        %v1214 = vpack.c.bf16 %v1197, %v1196
        %v1215 = vpack.c.bf16 %v1199, %v1198
        %v1216 = vpack.c.bf16 %v1201, %v1200
        %v1217 = vpack.c.bf16 %v1203, %v1202
        %v1218 = vpack.c.bf16 %v1205, %v1204
        %v1219 = vpack.c.bf16 %v1207, %v1206
        %v1220 = vpack.c.bf16 %v1209, %v1208
        %v1221 = vpack.c.bf16 %v1211, %v1210
        %vm1222 = vcmask 64512
        %1223 = vst.msk [vmem:[#allocation2] sm:$0xff] %vm1222, %v1212
        %1224 = vst.msk [vmem:[#allocation2 + $0x8] sm:$0xff] %vm1222, %v1213
        %1225 = vst.msk [vmem:[#allocation2 + $0x10] sm:$0xff] %vm1222, %v1214
        %1226 = vst.msk [vmem:[#allocation2 + $0x18] sm:$0xff] %vm1222, %v1215
        %1227 = vst.msk [vmem:[#allocation2 + $0x20] sm:$0xff] %vm1222, %v1216
        %1228 = vst.msk [vmem:[#allocation2 + $0x28] sm:$0xff] %vm1222, %v1217
        %1229 = vst.msk [vmem:[#allocation2 + $0x30] sm:$0xff] %vm1222, %v1218
        %1230 = vst.msk [vmem:[#allocation2 + $0x38] sm:$0xff] %vm1222, %v1219
        %1231 = vst.msk [vmem:[#allocation2 + $0x40] sm:$0xff] %vm1222, %v1220
        %1232 = vst.msk [vmem:[#allocation2 + $0x48] sm:$0xff] %vm1222, %v1221
        %1235 = vrot.lane.b32.xlu0 %v1212, 127
        %v1236 = vpop.permute.xlu0 %1235
        %1237 = vrot.lane.b32.xlu0 %v1213, 127
        %v1238 = vpop.permute.xlu0 %1237
        %1241 = vst.msk [vmem:[#allocation2 + $0x140] sm:$0xff] %vm1222, %v1236
        %1242 = vst.msk [vmem:[#allocation2 + $0x148] sm:$0xff] %vm1222, %v1238
        %1245 = vrot.lane.b32.xlu0 %v1214, 127
        %v1246 = vpop.permute.xlu0 %1245
        %1247 = vrot.lane.b32.xlu0 %v1215, 127
        %v1248 = vpop.permute.xlu0 %1247
        %1251 = vst.msk [vmem:[#allocation2 + $0x150] sm:$0xff] %vm1222, %v1246
        %1252 = vst.msk [vmem:[#allocation2 + $0x158] sm:$0xff] %vm1222, %v1248
        %1255 = vrot.lane.b32.xlu0 %v1216, 127
        %v1256 = vpop.permute.xlu0 %1255
        %1257 = vrot.lane.b32.xlu0 %v1217, 127
        %v1258 = vpop.permute.xlu0 %1257
        %1261 = vst.msk [vmem:[#allocation2 + $0x160] sm:$0xff] %vm1222, %v1256
        %1262 = vst.msk [vmem:[#allocation2 + $0x168] sm:$0xff] %vm1222, %v1258
        %1265 = vrot.lane.b32.xlu0 %v1218, 127
        %v1266 = vpop.permute.xlu0 %1265
        %1267 = vrot.lane.b32.xlu0 %v1219, 127
        %v1268 = vpop.permute.xlu0 %1267
        %1271 = vst.msk [vmem:[#allocation2 + $0x170] sm:$0xff] %vm1222, %v1266
        %1272 = vst.msk [vmem:[#allocation2 + $0x178] sm:$0xff] %vm1222, %v1268
        %1275 = vrot.lane.b32.xlu0 %v1220, 127
        %v1276 = vpop.permute.xlu0 %1275
        %1277 = vrot.lane.b32.xlu0 %v1221, 127
        %v1278 = vpop.permute.xlu0 %1277
        %1281 = vst.msk [vmem:[#allocation2 + $0x180] sm:$0xff] %vm1222, %v1276
        %1282 = vst.msk [vmem:[#allocation2 + $0x188] sm:$0xff] %vm1222, %v1278
        %v1283 = vld [vmem:[%s421] sm:$0x1]
        %v1284 = vld [vmem:[%s421 + $0x1] sm:$0x1]
        %v1285 = vld [vmem:[%s421 + $0x2] sm:$0x1]
        %v1286 = vld [vmem:[%s421 + $0x3] sm:$0x1]
        %v1287 = vld [vmem:[%s421 + $0x4] sm:$0x1]
        %v1288 = vld [vmem:[%s1] sm:$0xff]
        %v1289 = vld [vmem:[%s1 + $0x8] sm:$0xff]
        %v1290 = vld [vmem:[%s1 + $0x10] sm:$0xff]
        %v1291 = vld [vmem:[%s1 + $0x18] sm:$0xff]
        %v1297 = vlaneseq
        %v1298 = vshrl.u32 %v1297, 7
        %v1299 = vsub.s32 0, %v1298
        %v1300 = vrot.slane %v1283, %v1299
        %v1301 = vlaneseq
        %v1302 = vshrl.u32 %v1301, 7
        %v1303 = vsub.s32 0, %v1302
        %v1304 = vrot.slane %v1284, %v1303
        %v1305 = vlaneseq
        %v1306 = vshrl.u32 %v1305, 7
        %v1307 = vsub.s32 0, %v1306
        %v1308 = vrot.slane %v1285, %v1307
        %v1309 = vlaneseq
        %v1310 = vshrl.u32 %v1309, 7
        %v1311 = vsub.s32 0, %v1310
        %v1312 = vrot.slane %v1286, %v1311
        %v1313 = vlaneseq
        %v1314 = vshrl.u32 %v1313, 7
        %v1315 = vsub.s32 0, %v1314
        %v1316 = vrot.slane %v1287, %v1315
        %1323 = vset.pattern.permute.xlu0 0
        %1324 = vperm.xlu0 %1323, %v1288
        %v1325 = vpop.permute.xlu0 %1324
        %1328 = vset.pattern.permute.xlu0 0
        %1329 = vperm.xlu0 %1328, %v1289
        %v1330 = vpop.permute.xlu0 %1329
        %1333 = vset.pattern.permute.xlu0 0
        %1334 = vperm.xlu0 %1333, %v1290
        %v1335 = vpop.permute.xlu0 %1334
        %1338 = vset.pattern.permute.xlu0 0
        %1339 = vperm.xlu0 %1338, %v1291
        %v1340 = vpop.permute.xlu0 %1339
        %v1342 = vmul.f32 %v1300, %v1325
        %v1343 = vmul.f32 %v1300, %v1330
        %v1344 = vmul.f32 %v1300, %v1335
        %v1345 = vmul.f32 %v1300, %v1340
        %v1346 = vmul.f32 %v1304, %v1325
        %v1347 = vmul.f32 %v1304, %v1330
        %v1348 = vmul.f32 %v1304, %v1335
        %v1349 = vmul.f32 %v1304, %v1340
        %v1350 = vmul.f32 %v1308, %v1325
        %v1351 = vmul.f32 %v1308, %v1330
        %v1352 = vmul.f32 %v1308, %v1335
        %v1353 = vmul.f32 %v1308, %v1340
        %v1354 = vmul.f32 %v1312, %v1325
        %v1355 = vmul.f32 %v1312, %v1330
        %v1356 = vmul.f32 %v1312, %v1335
        %v1357 = vmul.f32 %v1312, %v1340
        %v1358 = vmul.f32 %v1316, %v1325
        %v1359 = vmul.f32 %v1316, %v1330
        %v1360 = vmul.f32 %v1316, %v1335
        %v1361 = vmul.f32 %v1316, %v1340
        %v1362 = vadd.f32 %v1342, 0.0
        %v1363 = vadd.f32 %v1343, 0.0
        %v1364 = vadd.f32 %v1344, 0.0
        %v1365 = vadd.f32 %v1345, 0.0
        %v1366 = vadd.f32 %v1346, 0.0
        %v1367 = vadd.f32 %v1347, 0.0
        %v1368 = vadd.f32 %v1348, 0.0
        %v1369 = vadd.f32 %v1349, 0.0
        %v1370 = vadd.f32 %v1350, 0.0
        %v1371 = vadd.f32 %v1351, 0.0
        %v1372 = vadd.f32 %v1352, 0.0
        %v1373 = vadd.f32 %v1353, 0.0
        %v1374 = vadd.f32 %v1354, 0.0
        %v1375 = vadd.f32 %v1355, 0.0
        %v1376 = vadd.f32 %v1356, 0.0
        %v1377 = vadd.f32 %v1357, 0.0
        %v1378 = vadd.f32 %v1358, 0.0
        %v1379 = vadd.f32 %v1359, 0.0
        %v1380 = vadd.f32 %v1360, 0.0
        %v1381 = vadd.f32 %v1361, 0.0
        %s1382 = scalar_lea.vmem %s219, 18
        %v1383 = vld [vmem:[%s1382] sm:$0x1]
        %v1384 = vld [vmem:[%s1382 + $0x1] sm:$0x1]
        %v1385 = vld [vmem:[%s1382 + $0x2] sm:$0x1]
        %v1386 = vld [vmem:[%s1382 + $0x3] sm:$0x1]
        %v1387 = vld [vmem:[%s1382 + $0x4] sm:$0x1]
        %v1388 = vld [vmem:[%s326] sm:$0xff]
        %v1389 = vld [vmem:[%s326 + $0x8] sm:$0xff]
        %v1390 = vld [vmem:[%s326 + $0x10] sm:$0xff]
        %v1391 = vld [vmem:[%s326 + $0x18] sm:$0xff]
        %v1397 = vlaneseq
        %v1398 = vshrl.u32 %v1397, 7
        %v1399 = vsub.s32 0, %v1398
        %v1400 = vrot.slane %v1383, %v1399
        %v1401 = vlaneseq
        %v1402 = vshrl.u32 %v1401, 7
        %v1403 = vsub.s32 0, %v1402
        %v1404 = vrot.slane %v1384, %v1403
        %v1405 = vlaneseq
        %v1406 = vshrl.u32 %v1405, 7
        %v1407 = vsub.s32 0, %v1406
        %v1408 = vrot.slane %v1385, %v1407
        %v1409 = vlaneseq
        %v1410 = vshrl.u32 %v1409, 7
        %v1411 = vsub.s32 0, %v1410
        %v1412 = vrot.slane %v1386, %v1411
        %v1413 = vlaneseq
        %v1414 = vshrl.u32 %v1413, 7
        %v1415 = vsub.s32 0, %v1414
        %v1416 = vrot.slane %v1387, %v1415
        %1423 = vset.pattern.permute.xlu0 0
        %1424 = vperm.xlu0 %1423, %v1388
        %v1425 = vpop.permute.xlu0 %1424
        %1428 = vset.pattern.permute.xlu0 0
        %1429 = vperm.xlu0 %1428, %v1389
        %v1430 = vpop.permute.xlu0 %1429
        %1433 = vset.pattern.permute.xlu0 0
        %1434 = vperm.xlu0 %1433, %v1390
        %v1435 = vpop.permute.xlu0 %1434
        %1438 = vset.pattern.permute.xlu0 0
        %1439 = vperm.xlu0 %1438, %v1391
        %v1440 = vpop.permute.xlu0 %1439
        %v1442 = vmul.f32 %v1400, %v1425
        %v1443 = vmul.f32 %v1400, %v1430
        %v1444 = vmul.f32 %v1400, %v1435
        %v1445 = vmul.f32 %v1400, %v1440
        %v1446 = vmul.f32 %v1404, %v1425
        %v1447 = vmul.f32 %v1404, %v1430
        %v1448 = vmul.f32 %v1404, %v1435
        %v1449 = vmul.f32 %v1404, %v1440
        %v1450 = vmul.f32 %v1408, %v1425
        %v1451 = vmul.f32 %v1408, %v1430
        %v1452 = vmul.f32 %v1408, %v1435
        %v1453 = vmul.f32 %v1408, %v1440
        %v1454 = vmul.f32 %v1412, %v1425
        %v1455 = vmul.f32 %v1412, %v1430
        %v1456 = vmul.f32 %v1412, %v1435
        %v1457 = vmul.f32 %v1412, %v1440
        %v1458 = vmul.f32 %v1416, %v1425
        %v1459 = vmul.f32 %v1416, %v1430
        %v1460 = vmul.f32 %v1416, %v1435
        %v1461 = vmul.f32 %v1416, %v1440
        %v1462 = vadd.f32 %v1362, %v1442
        %v1463 = vadd.f32 %v1363, %v1443
        %v1464 = vadd.f32 %v1364, %v1444
        %v1465 = vadd.f32 %v1365, %v1445
        %v1466 = vadd.f32 %v1366, %v1446
        %v1467 = vadd.f32 %v1367, %v1447
        %v1468 = vadd.f32 %v1368, %v1448
        %v1469 = vadd.f32 %v1369, %v1449
        %v1470 = vadd.f32 %v1370, %v1450
        %v1471 = vadd.f32 %v1371, %v1451
        %v1472 = vadd.f32 %v1372, %v1452
        %v1473 = vadd.f32 %v1373, %v1453
        %v1474 = vadd.f32 %v1374, %v1454
        %v1475 = vadd.f32 %v1375, %v1455
        %v1476 = vadd.f32 %v1376, %v1456
        %v1477 = vadd.f32 %v1377, %v1457
        %v1478 = vadd.f32 %v1378, %v1458
        %v1479 = vadd.f32 %v1379, %v1459
        %v1480 = vadd.f32 %v1380, %v1460
        %v1481 = vadd.f32 %v1381, %v1461
        %v1482 = vld [vmem:[%s219] sm:$0x1]
        %v1483 = vld [vmem:[%s219 + $0x1] sm:$0x1]
        %v1484 = vld [vmem:[%s219 + $0x2] sm:$0x1]
        %v1485 = vld [vmem:[%s219 + $0x3] sm:$0x1]
        %v1486 = vld [vmem:[%s219 + $0x4] sm:$0x1]
        %v1487 = vld [vmem:[%s427] sm:$0xff]
        %v1488 = vld [vmem:[%s427 + $0x8] sm:$0xff]
        %v1489 = vld [vmem:[%s427 + $0x10] sm:$0xff]
        %v1490 = vld [vmem:[%s427 + $0x18] sm:$0xff]
        %v1496 = vlaneseq
        %v1497 = vshrl.u32 %v1496, 7
        %v1498 = vsub.s32 0, %v1497
        %v1499 = vrot.slane %v1482, %v1498
        %v1500 = vlaneseq
        %v1501 = vshrl.u32 %v1500, 7
        %v1502 = vsub.s32 0, %v1501
        %v1503 = vrot.slane %v1483, %v1502
        %v1504 = vlaneseq
        %v1505 = vshrl.u32 %v1504, 7
        %v1506 = vsub.s32 0, %v1505
        %v1507 = vrot.slane %v1484, %v1506
        %v1508 = vlaneseq
        %v1509 = vshrl.u32 %v1508, 7
        %v1510 = vsub.s32 0, %v1509
        %v1511 = vrot.slane %v1485, %v1510
        %v1512 = vlaneseq
        %v1513 = vshrl.u32 %v1512, 7
        %v1514 = vsub.s32 0, %v1513
        %v1515 = vrot.slane %v1486, %v1514
        %1522 = vset.pattern.permute.xlu0 0
        %1523 = vperm.xlu0 %1522, %v1487
        %v1524 = vpop.permute.xlu0 %1523
        %1527 = vset.pattern.permute.xlu0 0
        %1528 = vperm.xlu0 %1527, %v1488
        %v1529 = vpop.permute.xlu0 %1528
        %1532 = vset.pattern.permute.xlu0 0
        %1533 = vperm.xlu0 %1532, %v1489
        %v1534 = vpop.permute.xlu0 %1533
        %1537 = vset.pattern.permute.xlu0 0
        %1538 = vperm.xlu0 %1537, %v1490
        %v1539 = vpop.permute.xlu0 %1538
        %v1541 = vmul.f32 %v1499, %v1524
        %v1542 = vmul.f32 %v1499, %v1529
        %v1543 = vmul.f32 %v1499, %v1534
        %v1544 = vmul.f32 %v1499, %v1539
        %v1545 = vmul.f32 %v1503, %v1524
        %v1546 = vmul.f32 %v1503, %v1529
        %v1547 = vmul.f32 %v1503, %v1534
        %v1548 = vmul.f32 %v1503, %v1539
        %v1549 = vmul.f32 %v1507, %v1524
        %v1550 = vmul.f32 %v1507, %v1529
        %v1551 = vmul.f32 %v1507, %v1534
        %v1552 = vmul.f32 %v1507, %v1539
        %v1553 = vmul.f32 %v1511, %v1524
        %v1554 = vmul.f32 %v1511, %v1529
        %v1555 = vmul.f32 %v1511, %v1534
        %v1556 = vmul.f32 %v1511, %v1539
        %v1557 = vmul.f32 %v1515, %v1524
        %v1558 = vmul.f32 %v1515, %v1529
        %v1559 = vmul.f32 %v1515, %v1534
        %v1560 = vmul.f32 %v1515, %v1539
        %1581 = vrot.lane.b32.xlu0 %v1541, 127
        %v1582 = vpop.permute.xlu0 %1581
        %1583 = vrot.lane.b32.xlu0 %v1542, 127
        %v1584 = vpop.permute.xlu0 %1583
        %1585 = vrot.lane.b32.xlu0 %v1543, 127
        %v1586 = vpop.permute.xlu0 %1585
        %1587 = vrot.lane.b32.xlu0 %v1544, 127
        %v1588 = vpop.permute.xlu0 %1587
        %1589 = vrot.lane.b32.xlu0 %v1545, 127
        %v1590 = vpop.permute.xlu0 %1589
        %1591 = vrot.lane.b32.xlu0 %v1546, 127
        %v1592 = vpop.permute.xlu0 %1591
        %1593 = vrot.lane.b32.xlu0 %v1547, 127
        %v1594 = vpop.permute.xlu0 %1593
        %1595 = vrot.lane.b32.xlu0 %v1548, 127
        %v1596 = vpop.permute.xlu0 %1595
        %1597 = vrot.lane.b32.xlu0 %v1549, 127
        %v1598 = vpop.permute.xlu0 %1597
        %1599 = vrot.lane.b32.xlu0 %v1550, 127
        %v1600 = vpop.permute.xlu0 %1599
        %1601 = vrot.lane.b32.xlu0 %v1551, 127
        %v1602 = vpop.permute.xlu0 %1601
        %1603 = vrot.lane.b32.xlu0 %v1552, 127
        %v1604 = vpop.permute.xlu0 %1603
        %1605 = vrot.lane.b32.xlu0 %v1553, 127
        %v1606 = vpop.permute.xlu0 %1605
        %1607 = vrot.lane.b32.xlu0 %v1554, 127
        %v1608 = vpop.permute.xlu0 %1607
        %1609 = vrot.lane.b32.xlu0 %v1555, 127
        %v1610 = vpop.permute.xlu0 %1609
        %1611 = vrot.lane.b32.xlu0 %v1556, 127
        %v1612 = vpop.permute.xlu0 %1611
        %1613 = vrot.lane.b32.xlu0 %v1557, 127
        %v1614 = vpop.permute.xlu0 %1613
        %1615 = vrot.lane.b32.xlu0 %v1558, 127
        %v1616 = vpop.permute.xlu0 %1615
        %1617 = vrot.lane.b32.xlu0 %v1559, 127
        %v1618 = vpop.permute.xlu0 %1617
        %1619 = vrot.lane.b32.xlu0 %v1560, 127
        %v1620 = vpop.permute.xlu0 %1619
        %v1641 = vadd.f32 %v1462, %v1582
        %v1642 = vadd.f32 %v1463, %v1584
        %v1643 = vadd.f32 %v1464, %v1586
        %v1644 = vadd.f32 %v1465, %v1588
        %v1645 = vadd.f32 %v1466, %v1590
        %v1646 = vadd.f32 %v1467, %v1592
        %v1647 = vadd.f32 %v1468, %v1594
        %v1648 = vadd.f32 %v1469, %v1596
        %v1649 = vadd.f32 %v1470, %v1598
        %v1650 = vadd.f32 %v1471, %v1600
        %v1651 = vadd.f32 %v1472, %v1602
        %v1652 = vadd.f32 %v1473, %v1604
        %v1653 = vadd.f32 %v1474, %v1606
        %v1654 = vadd.f32 %v1475, %v1608
        %v1655 = vadd.f32 %v1476, %v1610
        %v1656 = vadd.f32 %v1477, %v1612
        %v1657 = vadd.f32 %v1478, %v1614
        %v1658 = vadd.f32 %v1479, %v1616
        %v1659 = vadd.f32 %v1480, %v1618
        %v1660 = vadd.f32 %v1481, %v1620
        %v1661 = vld [vmem:[%s724] sm:$0x1]
        %v1662 = vld [vmem:[%s724 + $0x1] sm:$0x1]
        %v1663 = vld [vmem:[%s724 + $0x2] sm:$0x1]
        %v1664 = vld [vmem:[%s724 + $0x3] sm:$0x1]
        %v1665 = vld [vmem:[%s724 + $0x4] sm:$0x1]
        %v1666 = vld [vmem:[%s528] sm:$0xff]
        %v1667 = vld [vmem:[%s528 + $0x8] sm:$0xff]
        %v1668 = vld [vmem:[%s528 + $0x10] sm:$0xff]
        %v1669 = vld [vmem:[%s528 + $0x18] sm:$0xff]
        %v1675 = vlaneseq
        %v1676 = vshrl.u32 %v1675, 7
        %v1677 = vsub.s32 0, %v1676
        %v1678 = vrot.slane %v1661, %v1677
        %v1679 = vlaneseq
        %v1680 = vshrl.u32 %v1679, 7
        %v1681 = vsub.s32 0, %v1680
        %v1682 = vrot.slane %v1662, %v1681
        %v1683 = vlaneseq
        %v1684 = vshrl.u32 %v1683, 7
        %v1685 = vsub.s32 0, %v1684
        %v1686 = vrot.slane %v1663, %v1685
        %v1687 = vlaneseq
        %v1688 = vshrl.u32 %v1687, 7
        %v1689 = vsub.s32 0, %v1688
        %v1690 = vrot.slane %v1664, %v1689
        %v1691 = vlaneseq
        %v1692 = vshrl.u32 %v1691, 7
        %v1693 = vsub.s32 0, %v1692
        %v1694 = vrot.slane %v1665, %v1693
        %1701 = vset.pattern.permute.xlu0 0
        %1702 = vperm.xlu0 %1701, %v1666
        %v1703 = vpop.permute.xlu0 %1702
        %1706 = vset.pattern.permute.xlu0 0
        %1707 = vperm.xlu0 %1706, %v1667
        %v1708 = vpop.permute.xlu0 %1707
        %1711 = vset.pattern.permute.xlu0 0
        %1712 = vperm.xlu0 %1711, %v1668
        %v1713 = vpop.permute.xlu0 %1712
        %1716 = vset.pattern.permute.xlu0 0
        %1717 = vperm.xlu0 %1716, %v1669
        %v1718 = vpop.permute.xlu0 %1717
        %v1720 = vmul.f32 %v1678, %v1703
        %v1721 = vmul.f32 %v1678, %v1708
        %v1722 = vmul.f32 %v1678, %v1713
        %v1723 = vmul.f32 %v1678, %v1718
        %v1724 = vmul.f32 %v1682, %v1703
        %v1725 = vmul.f32 %v1682, %v1708
        %v1726 = vmul.f32 %v1682, %v1713
        %v1727 = vmul.f32 %v1682, %v1718
        %v1728 = vmul.f32 %v1686, %v1703
        %v1729 = vmul.f32 %v1686, %v1708
        %v1730 = vmul.f32 %v1686, %v1713
        %v1731 = vmul.f32 %v1686, %v1718
        %v1732 = vmul.f32 %v1690, %v1703
        %v1733 = vmul.f32 %v1690, %v1708
        %v1734 = vmul.f32 %v1690, %v1713
        %v1735 = vmul.f32 %v1690, %v1718
        %v1736 = vmul.f32 %v1694, %v1703
        %v1737 = vmul.f32 %v1694, %v1708
        %v1738 = vmul.f32 %v1694, %v1713
        %v1739 = vmul.f32 %v1694, %v1718
        %v1740 = vadd.f32 %v1641, %v1720
        %v1741 = vadd.f32 %v1642, %v1721
        %v1742 = vadd.f32 %v1643, %v1722
        %v1743 = vadd.f32 %v1644, %v1723
        %v1744 = vadd.f32 %v1645, %v1724
        %v1745 = vadd.f32 %v1646, %v1725
        %v1746 = vadd.f32 %v1647, %v1726
        %v1747 = vadd.f32 %v1648, %v1727
        %v1748 = vadd.f32 %v1649, %v1728
        %v1749 = vadd.f32 %v1650, %v1729
        %v1750 = vadd.f32 %v1651, %v1730
        %v1751 = vadd.f32 %v1652, %v1731
        %v1752 = vadd.f32 %v1653, %v1732
        %v1753 = vadd.f32 %v1654, %v1733
        %v1754 = vadd.f32 %v1655, %v1734
        %v1755 = vadd.f32 %v1656, %v1735
        %v1756 = vadd.f32 %v1657, %v1736
        %v1757 = vadd.f32 %v1658, %v1737
        %v1758 = vadd.f32 %v1659, %v1738
        %v1759 = vadd.f32 %v1660, %v1739
        %s1760 = scalar_lea.vmem %s219, 42
        %v1761 = vld [vmem:[%s1760] sm:$0x1]
        %v1762 = vld [vmem:[%s1760 + $0x1] sm:$0x1]
        %v1763 = vld [vmem:[%s1760 + $0x2] sm:$0x1]
        %v1764 = vld [vmem:[%s1760 + $0x3] sm:$0x1]
        %v1765 = vld [vmem:[%s1760 + $0x4] sm:$0x1]
        %v1766 = vld [vmem:[%s629] sm:$0xff]
        %v1767 = vld [vmem:[%s629 + $0x8] sm:$0xff]
        %v1768 = vld [vmem:[%s629 + $0x10] sm:$0xff]
        %v1769 = vld [vmem:[%s629 + $0x18] sm:$0xff]
        %v1775 = vlaneseq
        %v1776 = vshrl.u32 %v1775, 7
        %v1777 = vsub.s32 0, %v1776
        %v1778 = vrot.slane %v1761, %v1777
        %v1779 = vlaneseq
        %v1780 = vshrl.u32 %v1779, 7
        %v1781 = vsub.s32 0, %v1780
        %v1782 = vrot.slane %v1762, %v1781
        %v1783 = vlaneseq
        %v1784 = vshrl.u32 %v1783, 7
        %v1785 = vsub.s32 0, %v1784
        %v1786 = vrot.slane %v1763, %v1785
        %v1787 = vlaneseq
        %v1788 = vshrl.u32 %v1787, 7
        %v1789 = vsub.s32 0, %v1788
        %v1790 = vrot.slane %v1764, %v1789
        %v1791 = vlaneseq
        %v1792 = vshrl.u32 %v1791, 7
        %v1793 = vsub.s32 0, %v1792
        %v1794 = vrot.slane %v1765, %v1793
        %1801 = vset.pattern.permute.xlu0 0
        %1802 = vperm.xlu0 %1801, %v1766
        %v1803 = vpop.permute.xlu0 %1802
        %1806 = vset.pattern.permute.xlu0 0
        %1807 = vperm.xlu0 %1806, %v1767
        %v1808 = vpop.permute.xlu0 %1807
        %1811 = vset.pattern.permute.xlu0 0
        %1812 = vperm.xlu0 %1811, %v1768
        %v1813 = vpop.permute.xlu0 %1812
        %1816 = vset.pattern.permute.xlu0 0
        %1817 = vperm.xlu0 %1816, %v1769
        %v1818 = vpop.permute.xlu0 %1817
        %v1820 = vmul.f32 %v1778, %v1803
        %v1821 = vmul.f32 %v1778, %v1808
        %v1822 = vmul.f32 %v1778, %v1813
        %v1823 = vmul.f32 %v1778, %v1818
        %v1824 = vmul.f32 %v1782, %v1803
        %v1825 = vmul.f32 %v1782, %v1808
        %v1826 = vmul.f32 %v1782, %v1813
        %v1827 = vmul.f32 %v1782, %v1818
        %v1828 = vmul.f32 %v1786, %v1803
        %v1829 = vmul.f32 %v1786, %v1808
        %v1830 = vmul.f32 %v1786, %v1813
        %v1831 = vmul.f32 %v1786, %v1818
        %v1832 = vmul.f32 %v1790, %v1803
        %v1833 = vmul.f32 %v1790, %v1808
        %v1834 = vmul.f32 %v1790, %v1813
        %v1835 = vmul.f32 %v1790, %v1818
        %v1836 = vmul.f32 %v1794, %v1803
        %v1837 = vmul.f32 %v1794, %v1808
        %v1838 = vmul.f32 %v1794, %v1813
        %v1839 = vmul.f32 %v1794, %v1818
        %v1840 = vadd.f32 %v1740, %v1820
        %v1841 = vadd.f32 %v1741, %v1821
        %v1842 = vadd.f32 %v1742, %v1822
        %v1843 = vadd.f32 %v1743, %v1823
        %v1844 = vadd.f32 %v1744, %v1824
        %v1845 = vadd.f32 %v1745, %v1825
        %v1846 = vadd.f32 %v1746, %v1826
        %v1847 = vadd.f32 %v1747, %v1827
        %v1848 = vadd.f32 %v1748, %v1828
        %v1849 = vadd.f32 %v1749, %v1829
        %v1850 = vadd.f32 %v1750, %v1830
        %v1851 = vadd.f32 %v1751, %v1831
        %v1852 = vadd.f32 %v1752, %v1832
        %v1853 = vadd.f32 %v1753, %v1833
        %v1854 = vadd.f32 %v1754, %v1834
        %v1855 = vadd.f32 %v1755, %v1835
        %v1856 = vadd.f32 %v1756, %v1836
        %v1857 = vadd.f32 %v1757, %v1837
        %v1858 = vadd.f32 %v1758, %v1838
        %v1859 = vadd.f32 %v1759, %v1839
        %v1860 = vld [vmem:[%s522] sm:$0x1]
        %v1861 = vld [vmem:[%s522 + $0x1] sm:$0x1]
        %v1862 = vld [vmem:[%s522 + $0x2] sm:$0x1]
        %v1863 = vld [vmem:[%s522 + $0x3] sm:$0x1]
        %v1864 = vld [vmem:[%s522 + $0x4] sm:$0x1]
        %v1865 = vld [vmem:[%s730] sm:$0xff]
        %v1866 = vld [vmem:[%s730 + $0x8] sm:$0xff]
        %v1867 = vld [vmem:[%s730 + $0x10] sm:$0xff]
        %v1868 = vld [vmem:[%s730 + $0x18] sm:$0xff]
        %v1874 = vlaneseq
        %v1875 = vshrl.u32 %v1874, 7
        %v1876 = vsub.s32 0, %v1875
        %v1877 = vrot.slane %v1860, %v1876
        %v1878 = vlaneseq
        %v1879 = vshrl.u32 %v1878, 7
        %v1880 = vsub.s32 0, %v1879
        %v1881 = vrot.slane %v1861, %v1880
        %v1882 = vlaneseq
        %v1883 = vshrl.u32 %v1882, 7
        %v1884 = vsub.s32 0, %v1883
        %v1885 = vrot.slane %v1862, %v1884
        %v1886 = vlaneseq
        %v1887 = vshrl.u32 %v1886, 7
        %v1888 = vsub.s32 0, %v1887
        %v1889 = vrot.slane %v1863, %v1888
        %v1890 = vlaneseq
        %v1891 = vshrl.u32 %v1890, 7
        %v1892 = vsub.s32 0, %v1891
        %v1893 = vrot.slane %v1864, %v1892
        %1900 = vset.pattern.permute.xlu0 0
        %1901 = vperm.xlu0 %1900, %v1865
        %v1902 = vpop.permute.xlu0 %1901
        %1905 = vset.pattern.permute.xlu0 0
        %1906 = vperm.xlu0 %1905, %v1866
        %v1907 = vpop.permute.xlu0 %1906
        %1910 = vset.pattern.permute.xlu0 0
        %1911 = vperm.xlu0 %1910, %v1867
        %v1912 = vpop.permute.xlu0 %1911
        %1915 = vset.pattern.permute.xlu0 0
        %1916 = vperm.xlu0 %1915, %v1868
        %v1917 = vpop.permute.xlu0 %1916
        %v1919 = vmul.f32 %v1877, %v1902
        %v1920 = vmul.f32 %v1877, %v1907
        %v1921 = vmul.f32 %v1877, %v1912
        %v1922 = vmul.f32 %v1877, %v1917
        %v1923 = vmul.f32 %v1881, %v1902
        %v1924 = vmul.f32 %v1881, %v1907
        %v1925 = vmul.f32 %v1881, %v1912
        %v1926 = vmul.f32 %v1881, %v1917
        %v1927 = vmul.f32 %v1885, %v1902
        %v1928 = vmul.f32 %v1885, %v1907
        %v1929 = vmul.f32 %v1885, %v1912
        %v1930 = vmul.f32 %v1885, %v1917
        %v1931 = vmul.f32 %v1889, %v1902
        %v1932 = vmul.f32 %v1889, %v1907
        %v1933 = vmul.f32 %v1889, %v1912
        %v1934 = vmul.f32 %v1889, %v1917
        %v1935 = vmul.f32 %v1893, %v1902
        %v1936 = vmul.f32 %v1893, %v1907
        %v1937 = vmul.f32 %v1893, %v1912
        %v1938 = vmul.f32 %v1893, %v1917
        %1959 = vrot.lane.b32.xlu0 %v1919, 127
        %v1960 = vpop.permute.xlu0 %1959
        %1961 = vrot.lane.b32.xlu0 %v1920, 127
        %v1962 = vpop.permute.xlu0 %1961
        %1963 = vrot.lane.b32.xlu0 %v1921, 127
        %v1964 = vpop.permute.xlu0 %1963
        %1965 = vrot.lane.b32.xlu0 %v1922, 127
        %v1966 = vpop.permute.xlu0 %1965
        %1967 = vrot.lane.b32.xlu0 %v1923, 127
        %v1968 = vpop.permute.xlu0 %1967
        %1969 = vrot.lane.b32.xlu0 %v1924, 127
        %v1970 = vpop.permute.xlu0 %1969
        %1971 = vrot.lane.b32.xlu0 %v1925, 127
        %v1972 = vpop.permute.xlu0 %1971
        %1973 = vrot.lane.b32.xlu0 %v1926, 127
        %v1974 = vpop.permute.xlu0 %1973
        %1975 = vrot.lane.b32.xlu0 %v1927, 127
        %v1976 = vpop.permute.xlu0 %1975
        %1977 = vrot.lane.b32.xlu0 %v1928, 127
        %v1978 = vpop.permute.xlu0 %1977
        %1979 = vrot.lane.b32.xlu0 %v1929, 127
        %v1980 = vpop.permute.xlu0 %1979
        %1981 = vrot.lane.b32.xlu0 %v1930, 127
        %v1982 = vpop.permute.xlu0 %1981
        %1983 = vrot.lane.b32.xlu0 %v1931, 127
        %v1984 = vpop.permute.xlu0 %1983
        %1985 = vrot.lane.b32.xlu0 %v1932, 127
        %v1986 = vpop.permute.xlu0 %1985
        %1987 = vrot.lane.b32.xlu0 %v1933, 127
        %v1988 = vpop.permute.xlu0 %1987
        %1989 = vrot.lane.b32.xlu0 %v1934, 127
        %v1990 = vpop.permute.xlu0 %1989
        %1991 = vrot.lane.b32.xlu0 %v1935, 127
        %v1992 = vpop.permute.xlu0 %1991
        %1993 = vrot.lane.b32.xlu0 %v1936, 127
        %v1994 = vpop.permute.xlu0 %1993
        %1995 = vrot.lane.b32.xlu0 %v1937, 127
        %v1996 = vpop.permute.xlu0 %1995
        %1997 = vrot.lane.b32.xlu0 %v1938, 127
        %v1998 = vpop.permute.xlu0 %1997
        %v2019 = vadd.f32 %v1840, %v1960
        %v2020 = vadd.f32 %v1841, %v1962
        %v2021 = vadd.f32 %v1842, %v1964
        %v2022 = vadd.f32 %v1843, %v1966
        %v2023 = vadd.f32 %v1844, %v1968
        %v2024 = vadd.f32 %v1845, %v1970
        %v2025 = vadd.f32 %v1846, %v1972
        %v2026 = vadd.f32 %v1847, %v1974
        %v2027 = vadd.f32 %v1848, %v1976
        %v2028 = vadd.f32 %v1849, %v1978
        %v2029 = vadd.f32 %v1850, %v1980
        %v2030 = vadd.f32 %v1851, %v1982
        %v2031 = vadd.f32 %v1852, %v1984
        %v2032 = vadd.f32 %v1853, %v1986
        %v2033 = vadd.f32 %v1854, %v1988
        %v2034 = vadd.f32 %v1855, %v1990
        %v2035 = vadd.f32 %v1856, %v1992
        %v2036 = vadd.f32 %v1857, %v1994
        %v2037 = vadd.f32 %v1858, %v1996
        %v2038 = vadd.f32 %v1859, %v1998
        %v2039 = vld [vmem:[%s1027] sm:$0x1]
        %v2040 = vld [vmem:[%s1027 + $0x1] sm:$0x1]
        %v2041 = vld [vmem:[%s1027 + $0x2] sm:$0x1]
        %v2042 = vld [vmem:[%s1027 + $0x3] sm:$0x1]
        %v2043 = vld [vmem:[%s1027 + $0x4] sm:$0x1]
        %v2044 = vld [vmem:[%s831] sm:$0xff]
        %v2045 = vld [vmem:[%s831 + $0x8] sm:$0xff]
        %v2046 = vld [vmem:[%s831 + $0x10] sm:$0xff]
        %v2047 = vld [vmem:[%s831 + $0x18] sm:$0xff]
        %v2053 = vlaneseq
        %v2054 = vshrl.u32 %v2053, 7
        %v2055 = vsub.s32 0, %v2054
        %v2056 = vrot.slane %v2039, %v2055
        %v2057 = vlaneseq
        %v2058 = vshrl.u32 %v2057, 7
        %v2059 = vsub.s32 0, %v2058
        %v2060 = vrot.slane %v2040, %v2059
        %v2061 = vlaneseq
        %v2062 = vshrl.u32 %v2061, 7
        %v2063 = vsub.s32 0, %v2062
        %v2064 = vrot.slane %v2041, %v2063
        %v2065 = vlaneseq
        %v2066 = vshrl.u32 %v2065, 7
        %v2067 = vsub.s32 0, %v2066
        %v2068 = vrot.slane %v2042, %v2067
        %v2069 = vlaneseq
        %v2070 = vshrl.u32 %v2069, 7
        %v2071 = vsub.s32 0, %v2070
        %v2072 = vrot.slane %v2043, %v2071
        %2079 = vset.pattern.permute.xlu0 0
        %2080 = vperm.xlu0 %2079, %v2044
        %v2081 = vpop.permute.xlu0 %2080
        %2084 = vset.pattern.permute.xlu0 0
        %2085 = vperm.xlu0 %2084, %v2045
        %v2086 = vpop.permute.xlu0 %2085
        %2089 = vset.pattern.permute.xlu0 0
        %2090 = vperm.xlu0 %2089, %v2046
        %v2091 = vpop.permute.xlu0 %2090
        %2094 = vset.pattern.permute.xlu0 0
        %2095 = vperm.xlu0 %2094, %v2047
        %v2096 = vpop.permute.xlu0 %2095
        %v2098 = vmul.f32 %v2056, %v2081
        %v2099 = vmul.f32 %v2056, %v2086
        %v2100 = vmul.f32 %v2056, %v2091
        %v2101 = vmul.f32 %v2056, %v2096
        %v2102 = vmul.f32 %v2060, %v2081
        %v2103 = vmul.f32 %v2060, %v2086
        %v2104 = vmul.f32 %v2060, %v2091
        %v2105 = vmul.f32 %v2060, %v2096
        %v2106 = vmul.f32 %v2064, %v2081
        %v2107 = vmul.f32 %v2064, %v2086
        %v2108 = vmul.f32 %v2064, %v2091
        %v2109 = vmul.f32 %v2064, %v2096
        %v2110 = vmul.f32 %v2068, %v2081
        %v2111 = vmul.f32 %v2068, %v2086
        %v2112 = vmul.f32 %v2068, %v2091
        %v2113 = vmul.f32 %v2068, %v2096
        %v2114 = vmul.f32 %v2072, %v2081
        %v2115 = vmul.f32 %v2072, %v2086
        %v2116 = vmul.f32 %v2072, %v2091
        %v2117 = vmul.f32 %v2072, %v2096
        %v2118 = vadd.f32 %v2019, %v2098
        %v2119 = vadd.f32 %v2020, %v2099
        %v2120 = vadd.f32 %v2021, %v2100
        %v2121 = vadd.f32 %v2022, %v2101
        %v2122 = vadd.f32 %v2023, %v2102
        %v2123 = vadd.f32 %v2024, %v2103
        %v2124 = vadd.f32 %v2025, %v2104
        %v2125 = vadd.f32 %v2026, %v2105
        %v2126 = vadd.f32 %v2027, %v2106
        %v2127 = vadd.f32 %v2028, %v2107
        %v2128 = vadd.f32 %v2029, %v2108
        %v2129 = vadd.f32 %v2030, %v2109
        %v2130 = vadd.f32 %v2031, %v2110
        %v2131 = vadd.f32 %v2032, %v2111
        %v2132 = vadd.f32 %v2033, %v2112
        %v2133 = vadd.f32 %v2034, %v2113
        %v2134 = vadd.f32 %v2035, %v2114
        %v2135 = vadd.f32 %v2036, %v2115
        %v2136 = vadd.f32 %v2037, %v2116
        %v2137 = vadd.f32 %v2038, %v2117
        %s2138 = scalar_lea.vmem %s219, 66
        %v2139 = vld [vmem:[%s2138] sm:$0x1]
        %v2140 = vld [vmem:[%s2138 + $0x1] sm:$0x1]
        %v2141 = vld [vmem:[%s2138 + $0x2] sm:$0x1]
        %v2142 = vld [vmem:[%s2138 + $0x3] sm:$0x1]
        %v2143 = vld [vmem:[%s2138 + $0x4] sm:$0x1]
        %v2144 = vld [vmem:[%s932] sm:$0xff]
        %v2145 = vld [vmem:[%s932 + $0x8] sm:$0xff]
        %v2146 = vld [vmem:[%s932 + $0x10] sm:$0xff]
        %v2147 = vld [vmem:[%s932 + $0x18] sm:$0xff]
        %v2153 = vlaneseq
        %v2154 = vshrl.u32 %v2153, 7
        %v2155 = vsub.s32 0, %v2154
        %v2156 = vrot.slane %v2139, %v2155
        %v2157 = vlaneseq
        %v2158 = vshrl.u32 %v2157, 7
        %v2159 = vsub.s32 0, %v2158
        %v2160 = vrot.slane %v2140, %v2159
        %v2161 = vlaneseq
        %v2162 = vshrl.u32 %v2161, 7
        %v2163 = vsub.s32 0, %v2162
        %v2164 = vrot.slane %v2141, %v2163
        %v2165 = vlaneseq
        %v2166 = vshrl.u32 %v2165, 7
        %v2167 = vsub.s32 0, %v2166
        %v2168 = vrot.slane %v2142, %v2167
        %v2169 = vlaneseq
        %v2170 = vshrl.u32 %v2169, 7
        %v2171 = vsub.s32 0, %v2170
        %v2172 = vrot.slane %v2143, %v2171
        %2179 = vset.pattern.permute.xlu0 0
        %2180 = vperm.xlu0 %2179, %v2144
        %v2181 = vpop.permute.xlu0 %2180
        %2184 = vset.pattern.permute.xlu0 0
        %2185 = vperm.xlu0 %2184, %v2145
        %v2186 = vpop.permute.xlu0 %2185
        %2189 = vset.pattern.permute.xlu0 0
        %2190 = vperm.xlu0 %2189, %v2146
        %v2191 = vpop.permute.xlu0 %2190
        %2194 = vset.pattern.permute.xlu0 0
        %2195 = vperm.xlu0 %2194, %v2147
        %v2196 = vpop.permute.xlu0 %2195
        %v2198 = vmul.f32 %v2156, %v2181
        %v2199 = vmul.f32 %v2156, %v2186
        %v2200 = vmul.f32 %v2156, %v2191
        %v2201 = vmul.f32 %v2156, %v2196
        %v2202 = vmul.f32 %v2160, %v2181
        %v2203 = vmul.f32 %v2160, %v2186
        %v2204 = vmul.f32 %v2160, %v2191
        %v2205 = vmul.f32 %v2160, %v2196
        %v2206 = vmul.f32 %v2164, %v2181
        %v2207 = vmul.f32 %v2164, %v2186
        %v2208 = vmul.f32 %v2164, %v2191
        %v2209 = vmul.f32 %v2164, %v2196
        %v2210 = vmul.f32 %v2168, %v2181
        %v2211 = vmul.f32 %v2168, %v2186
        %v2212 = vmul.f32 %v2168, %v2191
        %v2213 = vmul.f32 %v2168, %v2196
        %v2214 = vmul.f32 %v2172, %v2181
        %v2215 = vmul.f32 %v2172, %v2186
        %v2216 = vmul.f32 %v2172, %v2191
        %v2217 = vmul.f32 %v2172, %v2196
        %v2218 = vadd.f32 %v2118, %v2198
        %v2219 = vadd.f32 %v2119, %v2199
        %v2220 = vadd.f32 %v2120, %v2200
        %v2221 = vadd.f32 %v2121, %v2201
        %v2222 = vadd.f32 %v2122, %v2202
        %v2223 = vadd.f32 %v2123, %v2203
        %v2224 = vadd.f32 %v2124, %v2204
        %v2225 = vadd.f32 %v2125, %v2205
        %v2226 = vadd.f32 %v2126, %v2206
        %v2227 = vadd.f32 %v2127, %v2207
        %v2228 = vadd.f32 %v2128, %v2208
        %v2229 = vadd.f32 %v2129, %v2209
        %v2230 = vadd.f32 %v2130, %v2210
        %v2231 = vadd.f32 %v2131, %v2211
        %v2232 = vadd.f32 %v2132, %v2212
        %v2233 = vadd.f32 %v2133, %v2213
        %v2234 = vadd.f32 %v2134, %v2214
        %v2235 = vadd.f32 %v2135, %v2215
        %v2236 = vadd.f32 %v2136, %v2216
        %v2237 = vadd.f32 %v2137, %v2217
        %v2238 = vld [vmem:[%s825] sm:$0x1]
        %v2239 = vld [vmem:[%s825 + $0x1] sm:$0x1]
        %v2240 = vld [vmem:[%s825 + $0x2] sm:$0x1]
        %v2241 = vld [vmem:[%s825 + $0x3] sm:$0x1]
        %v2242 = vld [vmem:[%s825 + $0x4] sm:$0x1]
        %v2243 = vld [vmem:[%s1033] sm:$0xff]
        %v2244 = vld [vmem:[%s1033 + $0x8] sm:$0xff]
        %v2245 = vld [vmem:[%s1033 + $0x10] sm:$0xff]
        %v2246 = vld [vmem:[%s1033 + $0x18] sm:$0xff]
        %v2252 = vlaneseq
        %v2253 = vshrl.u32 %v2252, 7
        %v2254 = vsub.s32 0, %v2253
        %v2255 = vrot.slane %v2238, %v2254
        %v2256 = vlaneseq
        %v2257 = vshrl.u32 %v2256, 7
        %v2258 = vsub.s32 0, %v2257
        %v2259 = vrot.slane %v2239, %v2258
        %v2260 = vlaneseq
        %v2261 = vshrl.u32 %v2260, 7
        %v2262 = vsub.s32 0, %v2261
        %v2263 = vrot.slane %v2240, %v2262
        %v2264 = vlaneseq
        %v2265 = vshrl.u32 %v2264, 7
        %v2266 = vsub.s32 0, %v2265
        %v2267 = vrot.slane %v2241, %v2266
        %v2268 = vlaneseq
        %v2269 = vshrl.u32 %v2268, 7
        %v2270 = vsub.s32 0, %v2269
        %v2271 = vrot.slane %v2242, %v2270
        %2278 = vset.pattern.permute.xlu0 0
        %2279 = vperm.xlu0 %2278, %v2243
        %v2280 = vpop.permute.xlu0 %2279
        %2283 = vset.pattern.permute.xlu0 0
        %2284 = vperm.xlu0 %2283, %v2244
        %v2285 = vpop.permute.xlu0 %2284
        %2288 = vset.pattern.permute.xlu0 0
        %2289 = vperm.xlu0 %2288, %v2245
        %v2290 = vpop.permute.xlu0 %2289
        %2293 = vset.pattern.permute.xlu0 0
        %2294 = vperm.xlu0 %2293, %v2246
        %v2295 = vpop.permute.xlu0 %2294
        %v2297 = vmul.f32 %v2255, %v2280
        %v2298 = vmul.f32 %v2255, %v2285
        %v2299 = vmul.f32 %v2255, %v2290
        %v2300 = vmul.f32 %v2255, %v2295
        %v2301 = vmul.f32 %v2259, %v2280
        %v2302 = vmul.f32 %v2259, %v2285
        %v2303 = vmul.f32 %v2259, %v2290
        %v2304 = vmul.f32 %v2259, %v2295
        %v2305 = vmul.f32 %v2263, %v2280
        %v2306 = vmul.f32 %v2263, %v2285
        %v2307 = vmul.f32 %v2263, %v2290
        %v2308 = vmul.f32 %v2263, %v2295
        %v2309 = vmul.f32 %v2267, %v2280
        %v2310 = vmul.f32 %v2267, %v2285
        %v2311 = vmul.f32 %v2267, %v2290
        %v2312 = vmul.f32 %v2267, %v2295
        %v2313 = vmul.f32 %v2271, %v2280
        %v2314 = vmul.f32 %v2271, %v2285
        %v2315 = vmul.f32 %v2271, %v2290
        %v2316 = vmul.f32 %v2271, %v2295
        %2337 = vrot.lane.b32.xlu0 %v2297, 127
        %v2338 = vpop.permute.xlu0 %2337
        %2339 = vrot.lane.b32.xlu0 %v2298, 127
        %v2340 = vpop.permute.xlu0 %2339
        %2341 = vrot.lane.b32.xlu0 %v2299, 127
        %v2342 = vpop.permute.xlu0 %2341
        %2343 = vrot.lane.b32.xlu0 %v2300, 127
        %v2344 = vpop.permute.xlu0 %2343
        %2345 = vrot.lane.b32.xlu0 %v2301, 127
        %v2346 = vpop.permute.xlu0 %2345
        %2347 = vrot.lane.b32.xlu0 %v2302, 127
        %v2348 = vpop.permute.xlu0 %2347
        %2349 = vrot.lane.b32.xlu0 %v2303, 127
        %v2350 = vpop.permute.xlu0 %2349
        %2351 = vrot.lane.b32.xlu0 %v2304, 127
        %v2352 = vpop.permute.xlu0 %2351
        %2353 = vrot.lane.b32.xlu0 %v2305, 127
        %v2354 = vpop.permute.xlu0 %2353
        %2355 = vrot.lane.b32.xlu0 %v2306, 127
        %v2356 = vpop.permute.xlu0 %2355
        %2357 = vrot.lane.b32.xlu0 %v2307, 127
        %v2358 = vpop.permute.xlu0 %2357
        %2359 = vrot.lane.b32.xlu0 %v2308, 127
        %v2360 = vpop.permute.xlu0 %2359
        %2361 = vrot.lane.b32.xlu0 %v2309, 127
        %v2362 = vpop.permute.xlu0 %2361
        %2363 = vrot.lane.b32.xlu0 %v2310, 127
        %v2364 = vpop.permute.xlu0 %2363
        %2365 = vrot.lane.b32.xlu0 %v2311, 127
        %v2366 = vpop.permute.xlu0 %2365
        %2367 = vrot.lane.b32.xlu0 %v2312, 127
        %v2368 = vpop.permute.xlu0 %2367
        %2369 = vrot.lane.b32.xlu0 %v2313, 127
        %v2370 = vpop.permute.xlu0 %2369
        %2371 = vrot.lane.b32.xlu0 %v2314, 127
        %v2372 = vpop.permute.xlu0 %2371
        %2373 = vrot.lane.b32.xlu0 %v2315, 127
        %v2374 = vpop.permute.xlu0 %2373
        %2375 = vrot.lane.b32.xlu0 %v2316, 127
        %v2376 = vpop.permute.xlu0 %2375
        %v2397 = vadd.f32 %v2218, %v2338
        %v2398 = vadd.f32 %v2219, %v2340
        %v2399 = vadd.f32 %v2220, %v2342
        %v2400 = vadd.f32 %v2221, %v2344
        %v2401 = vadd.f32 %v2222, %v2346
        %v2402 = vadd.f32 %v2223, %v2348
        %v2403 = vadd.f32 %v2224, %v2350
        %v2404 = vadd.f32 %v2225, %v2352
        %v2405 = vadd.f32 %v2226, %v2354
        %v2406 = vadd.f32 %v2227, %v2356
        %v2407 = vadd.f32 %v2228, %v2358
        %v2408 = vadd.f32 %v2229, %v2360
        %v2409 = vadd.f32 %v2230, %v2362
        %v2410 = vadd.f32 %v2231, %v2364
        %v2411 = vadd.f32 %v2232, %v2366
        %v2412 = vadd.f32 %v2233, %v2368
        %v2413 = vadd.f32 %v2234, %v2370
        %v2414 = vadd.f32 %v2235, %v2372
        %v2415 = vadd.f32 %v2236, %v2374
        %v2416 = vadd.f32 %v2237, %v2376
        %v2417 = vld [vmem:[%s2] sm:$0xff]
        %v2418 = vld [vmem:[%s2 + $0x8] sm:$0xff]
        %v2419 = vld [vmem:[%s2 + $0x10] sm:$0xff]
        %v2420 = vld [vmem:[%s2 + $0x18] sm:$0xff]
        %2422 = vset.pattern.permute.xlu0 0
        %2423 = vperm.xlu0 %2422, %v2417
        %v2424 = vpop.permute.xlu0 %2423
        %2427 = vset.pattern.permute.xlu0 0
        %2428 = vperm.xlu0 %2427, %v2418
        %v2429 = vpop.permute.xlu0 %2428
        %2432 = vset.pattern.permute.xlu0 0
        %2433 = vperm.xlu0 %2432, %v2419
        %v2434 = vpop.permute.xlu0 %2433
        %2437 = vset.pattern.permute.xlu0 0
        %2438 = vperm.xlu0 %2437, %v2420
        %v2439 = vpop.permute.xlu0 %2438
        %v2441 = vadd.f32 %v2397, %v2424
        %v2442 = vadd.f32 %v2398, %v2429
        %v2443 = vadd.f32 %v2399, %v2434
        %v2444 = vadd.f32 %v2400, %v2439
        %v2445 = vadd.f32 %v2401, %v2424
        %v2446 = vadd.f32 %v2402, %v2429
        %v2447 = vadd.f32 %v2403, %v2434
        %v2448 = vadd.f32 %v2404, %v2439
        %v2449 = vadd.f32 %v2405, %v2424
        %v2450 = vadd.f32 %v2406, %v2429
        %v2451 = vadd.f32 %v2407, %v2434
        %v2452 = vadd.f32 %v2408, %v2439
        %v2453 = vadd.f32 %v2409, %v2424
        %v2454 = vadd.f32 %v2410, %v2429
        %v2455 = vadd.f32 %v2411, %v2434
        %v2456 = vadd.f32 %v2412, %v2439
        %v2457 = vadd.f32 %v2413, %v2424
        %v2458 = vadd.f32 %v2414, %v2429
        %v2459 = vadd.f32 %v2415, %v2434
        %v2460 = vadd.f32 %v2416, %v2439
        %v2461 = vmax.f32 %v2441, 0.0
        %v2462 = vmax.f32 %v2442, 0.0
        %v2463 = vmax.f32 %v2443, 0.0
        %v2464 = vmax.f32 %v2444, 0.0
        %v2465 = vmax.f32 %v2445, 0.0
        %v2466 = vmax.f32 %v2446, 0.0
        %v2467 = vmax.f32 %v2447, 0.0
        %v2468 = vmax.f32 %v2448, 0.0
        %v2469 = vmax.f32 %v2449, 0.0
        %v2470 = vmax.f32 %v2450, 0.0
        %v2471 = vmax.f32 %v2451, 0.0
        %v2472 = vmax.f32 %v2452, 0.0
        %v2473 = vmax.f32 %v2453, 0.0
        %v2474 = vmax.f32 %v2454, 0.0
        %v2475 = vmax.f32 %v2455, 0.0
        %v2476 = vmax.f32 %v2456, 0.0
        %v2477 = vmax.f32 %v2457, 0.0
        %v2478 = vmax.f32 %v2458, 0.0
        %v2479 = vmax.f32 %v2459, 0.0
        %v2480 = vmax.f32 %v2460, 0.0
        %v2481 = vmin.f32 %v2461, 20.0
        %v2482 = vmin.f32 %v2462, 20.0
        %v2483 = vmin.f32 %v2463, 20.0
        %v2484 = vmin.f32 %v2464, 20.0
        %v2485 = vmin.f32 %v2465, 20.0
        %v2486 = vmin.f32 %v2466, 20.0
        %v2487 = vmin.f32 %v2467, 20.0
        %v2488 = vmin.f32 %v2468, 20.0
        %v2489 = vmin.f32 %v2469, 20.0
        %v2490 = vmin.f32 %v2470, 20.0
        %v2491 = vmin.f32 %v2471, 20.0
        %v2492 = vmin.f32 %v2472, 20.0
        %v2493 = vmin.f32 %v2473, 20.0
        %v2494 = vmin.f32 %v2474, 20.0
        %v2495 = vmin.f32 %v2475, 20.0
        %v2496 = vmin.f32 %v2476, 20.0
        %v2497 = vmin.f32 %v2477, 20.0
        %v2498 = vmin.f32 %v2478, 20.0
        %v2499 = vmin.f32 %v2479, 20.0
        %v2500 = vmin.f32 %v2480, 20.0
        %v2501 = vpack.c.bf16 %v2482, %v2481
        %v2502 = vpack.c.bf16 %v2484, %v2483
        %v2503 = vpack.c.bf16 %v2486, %v2485
        %v2504 = vpack.c.bf16 %v2488, %v2487
        %v2505 = vpack.c.bf16 %v2490, %v2489
        %v2506 = vpack.c.bf16 %v2492, %v2491
        %v2507 = vpack.c.bf16 %v2494, %v2493
        %v2508 = vpack.c.bf16 %v2496, %v2495
        %v2509 = vpack.c.bf16 %v2498, %v2497
        %v2510 = vpack.c.bf16 %v2500, %v2499
        %2511 = vst.msk [vmem:[#allocation2 + $0xa0] sm:$0xff] %vm1222, %v2501
        %2512 = vst.msk [vmem:[#allocation2 + $0xa8] sm:$0xff] %vm1222, %v2502
        %2513 = vst.msk [vmem:[#allocation2 + $0xb0] sm:$0xff] %vm1222, %v2503
        %2514 = vst.msk [vmem:[#allocation2 + $0xb8] sm:$0xff] %vm1222, %v2504
        %2515 = vst.msk [vmem:[#allocation2 + $0xc0] sm:$0xff] %vm1222, %v2505
        %2516 = vst.msk [vmem:[#allocation2 + $0xc8] sm:$0xff] %vm1222, %v2506
        %2517 = vst.msk [vmem:[#allocation2 + $0xd0] sm:$0xff] %vm1222, %v2507
        %2518 = vst.msk [vmem:[#allocation2 + $0xd8] sm:$0xff] %vm1222, %v2508
        %2519 = vst.msk [vmem:[#allocation2 + $0xe0] sm:$0xff] %vm1222, %v2509
        %2520 = vst.msk [vmem:[#allocation2 + $0xe8] sm:$0xff] %vm1222, %v2510
        %v2521 = vld [vmem:[%s825] sm:$0x1]
        %v2522 = vld [vmem:[%s825 + $0x1] sm:$0x1]
        %v2523 = vld [vmem:[%s825 + $0x2] sm:$0x1]
        %v2524 = vld [vmem:[%s825 + $0x3] sm:$0x1]
        %v2525 = vld [vmem:[%s825 + $0x4] sm:$0x1]
        %v2526 = vld [vmem:[%s1] sm:$0xff]
        %v2527 = vld [vmem:[%s1 + $0x8] sm:$0xff]
        %v2528 = vld [vmem:[%s1 + $0x10] sm:$0xff]
        %v2529 = vld [vmem:[%s1 + $0x18] sm:$0xff]
        %v2535 = vlaneseq
        %v2536 = vshrl.u32 %v2535, 7
        %v2537 = vsub.s32 0, %v2536
        %v2538 = vrot.slane %v2521, %v2537
        %v2539 = vlaneseq
        %v2540 = vshrl.u32 %v2539, 7
        %v2541 = vsub.s32 0, %v2540
        %v2542 = vrot.slane %v2522, %v2541
        %v2543 = vlaneseq
        %v2544 = vshrl.u32 %v2543, 7
        %v2545 = vsub.s32 0, %v2544
        %v2546 = vrot.slane %v2523, %v2545
        %v2547 = vlaneseq
        %v2548 = vshrl.u32 %v2547, 7
        %v2549 = vsub.s32 0, %v2548
        %v2550 = vrot.slane %v2524, %v2549
        %v2551 = vlaneseq
        %v2552 = vshrl.u32 %v2551, 7
        %v2553 = vsub.s32 0, %v2552
        %v2554 = vrot.slane %v2525, %v2553
        %2561 = vset.pattern.permute.xlu0 0
        %2562 = vperm.xlu0 %2561, %v2526
        %v2563 = vpop.permute.xlu0 %2562
        %2566 = vset.pattern.permute.xlu0 0
        %2567 = vperm.xlu0 %2566, %v2527
        %v2568 = vpop.permute.xlu0 %2567
        %2571 = vset.pattern.permute.xlu0 0
        %2572 = vperm.xlu0 %2571, %v2528
        %v2573 = vpop.permute.xlu0 %2572
        %2576 = vset.pattern.permute.xlu0 0
        %2577 = vperm.xlu0 %2576, %v2529
        %v2578 = vpop.permute.xlu0 %2577
        %v2580 = vmul.f32 %v2538, %v2563
        %v2581 = vmul.f32 %v2538, %v2568
        %v2582 = vmul.f32 %v2538, %v2573
        %v2583 = vmul.f32 %v2538, %v2578
        %v2584 = vmul.f32 %v2542, %v2563
        %v2585 = vmul.f32 %v2542, %v2568
        %v2586 = vmul.f32 %v2542, %v2573
        %v2587 = vmul.f32 %v2542, %v2578
        %v2588 = vmul.f32 %v2546, %v2563
        %v2589 = vmul.f32 %v2546, %v2568
        %v2590 = vmul.f32 %v2546, %v2573
        %v2591 = vmul.f32 %v2546, %v2578
        %v2592 = vmul.f32 %v2550, %v2563
        %v2593 = vmul.f32 %v2550, %v2568
        %v2594 = vmul.f32 %v2550, %v2573
        %v2595 = vmul.f32 %v2550, %v2578
        %v2596 = vmul.f32 %v2554, %v2563
        %v2597 = vmul.f32 %v2554, %v2568
        %v2598 = vmul.f32 %v2554, %v2573
        %v2599 = vmul.f32 %v2554, %v2578
        %v2600 = vadd.f32 %v2580, 0.0
        %v2601 = vadd.f32 %v2581, 0.0
        %v2602 = vadd.f32 %v2582, 0.0
        %v2603 = vadd.f32 %v2583, 0.0
        %v2604 = vadd.f32 %v2584, 0.0
        %v2605 = vadd.f32 %v2585, 0.0
        %v2606 = vadd.f32 %v2586, 0.0
        %v2607 = vadd.f32 %v2587, 0.0
        %v2608 = vadd.f32 %v2588, 0.0
        %v2609 = vadd.f32 %v2589, 0.0
        %v2610 = vadd.f32 %v2590, 0.0
        %v2611 = vadd.f32 %v2591, 0.0
        %v2612 = vadd.f32 %v2592, 0.0
        %v2613 = vadd.f32 %v2593, 0.0
        %v2614 = vadd.f32 %v2594, 0.0
        %v2615 = vadd.f32 %v2595, 0.0
        %v2616 = vadd.f32 %v2596, 0.0
        %v2617 = vadd.f32 %v2597, 0.0
        %v2618 = vadd.f32 %v2598, 0.0
        %v2619 = vadd.f32 %v2599, 0.0
        %v2620 = vld [vmem:[%s926] sm:$0x1]
        %v2621 = vld [vmem:[%s926 + $0x1] sm:$0x1]
        %v2622 = vld [vmem:[%s926 + $0x2] sm:$0x1]
        %v2623 = vld [vmem:[%s926 + $0x3] sm:$0x1]
        %v2624 = vld [vmem:[%s926 + $0x4] sm:$0x1]
        %v2625 = vld [vmem:[%s326] sm:$0xff]
        %v2626 = vld [vmem:[%s326 + $0x8] sm:$0xff]
        %v2627 = vld [vmem:[%s326 + $0x10] sm:$0xff]
        %v2628 = vld [vmem:[%s326 + $0x18] sm:$0xff]
        %v2634 = vlaneseq
        %v2635 = vshrl.u32 %v2634, 7
        %v2636 = vsub.s32 0, %v2635
        %v2637 = vrot.slane %v2620, %v2636
        %v2638 = vlaneseq
        %v2639 = vshrl.u32 %v2638, 7
        %v2640 = vsub.s32 0, %v2639
        %v2641 = vrot.slane %v2621, %v2640
        %v2642 = vlaneseq
        %v2643 = vshrl.u32 %v2642, 7
        %v2644 = vsub.s32 0, %v2643
        %v2645 = vrot.slane %v2622, %v2644
        %v2646 = vlaneseq
        %v2647 = vshrl.u32 %v2646, 7
        %v2648 = vsub.s32 0, %v2647
        %v2649 = vrot.slane %v2623, %v2648
        %v2650 = vlaneseq
        %v2651 = vshrl.u32 %v2650, 7
        %v2652 = vsub.s32 0, %v2651
        %v2653 = vrot.slane %v2624, %v2652
        %2660 = vset.pattern.permute.xlu0 0
        %2661 = vperm.xlu0 %2660, %v2625
        %v2662 = vpop.permute.xlu0 %2661
        %2665 = vset.pattern.permute.xlu0 0
        %2666 = vperm.xlu0 %2665, %v2626
        %v2667 = vpop.permute.xlu0 %2666
        %2670 = vset.pattern.permute.xlu0 0
        %2671 = vperm.xlu0 %2670, %v2627
        %v2672 = vpop.permute.xlu0 %2671
        %2675 = vset.pattern.permute.xlu0 0
        %2676 = vperm.xlu0 %2675, %v2628
        %v2677 = vpop.permute.xlu0 %2676
        %v2679 = vmul.f32 %v2637, %v2662
        %v2680 = vmul.f32 %v2637, %v2667
        %v2681 = vmul.f32 %v2637, %v2672
        %v2682 = vmul.f32 %v2637, %v2677
        %v2683 = vmul.f32 %v2641, %v2662
        %v2684 = vmul.f32 %v2641, %v2667
        %v2685 = vmul.f32 %v2641, %v2672
        %v2686 = vmul.f32 %v2641, %v2677
        %v2687 = vmul.f32 %v2645, %v2662
        %v2688 = vmul.f32 %v2645, %v2667
        %v2689 = vmul.f32 %v2645, %v2672
        %v2690 = vmul.f32 %v2645, %v2677
        %v2691 = vmul.f32 %v2649, %v2662
        %v2692 = vmul.f32 %v2649, %v2667
        %v2693 = vmul.f32 %v2649, %v2672
        %v2694 = vmul.f32 %v2649, %v2677
        %v2695 = vmul.f32 %v2653, %v2662
        %v2696 = vmul.f32 %v2653, %v2667
        %v2697 = vmul.f32 %v2653, %v2672
        %v2698 = vmul.f32 %v2653, %v2677
        %v2699 = vadd.f32 %v2600, %v2679
        %v2700 = vadd.f32 %v2601, %v2680
        %v2701 = vadd.f32 %v2602, %v2681
        %v2702 = vadd.f32 %v2603, %v2682
        %v2703 = vadd.f32 %v2604, %v2683
        %v2704 = vadd.f32 %v2605, %v2684
        %v2705 = vadd.f32 %v2606, %v2685
        %v2706 = vadd.f32 %v2607, %v2686
        %v2707 = vadd.f32 %v2608, %v2687
        %v2708 = vadd.f32 %v2609, %v2688
        %v2709 = vadd.f32 %v2610, %v2689
        %v2710 = vadd.f32 %v2611, %v2690
        %v2711 = vadd.f32 %v2612, %v2691
        %v2712 = vadd.f32 %v2613, %v2692
        %v2713 = vadd.f32 %v2614, %v2693
        %v2714 = vadd.f32 %v2615, %v2694
        %v2715 = vadd.f32 %v2616, %v2695
        %v2716 = vadd.f32 %v2617, %v2696
        %v2717 = vadd.f32 %v2618, %v2697
        %v2718 = vadd.f32 %v2619, %v2698
        %v2719 = vld [vmem:[%s1027] sm:$0x1]
        %v2720 = vld [vmem:[%s1027 + $0x1] sm:$0x1]
        %v2721 = vld [vmem:[%s1027 + $0x2] sm:$0x1]
        %v2722 = vld [vmem:[%s1027 + $0x3] sm:$0x1]
        %v2723 = vld [vmem:[%s1027 + $0x4] sm:$0x1]
        %v2724 = vld [vmem:[%s427] sm:$0xff]
        %v2725 = vld [vmem:[%s427 + $0x8] sm:$0xff]
        %v2726 = vld [vmem:[%s427 + $0x10] sm:$0xff]
        %v2727 = vld [vmem:[%s427 + $0x18] sm:$0xff]
        %v2733 = vlaneseq
        %v2734 = vshrl.u32 %v2733, 7
        %v2735 = vsub.s32 0, %v2734
        %v2736 = vrot.slane %v2719, %v2735
        %v2737 = vlaneseq
        %v2738 = vshrl.u32 %v2737, 7
        %v2739 = vsub.s32 0, %v2738
        %v2740 = vrot.slane %v2720, %v2739
        %v2741 = vlaneseq
        %v2742 = vshrl.u32 %v2741, 7
        %v2743 = vsub.s32 0, %v2742
        %v2744 = vrot.slane %v2721, %v2743
        %v2745 = vlaneseq
        %v2746 = vshrl.u32 %v2745, 7
        %v2747 = vsub.s32 0, %v2746
        %v2748 = vrot.slane %v2722, %v2747
        %v2749 = vlaneseq
        %v2750 = vshrl.u32 %v2749, 7
        %v2751 = vsub.s32 0, %v2750
        %v2752 = vrot.slane %v2723, %v2751
        %2759 = vset.pattern.permute.xlu0 0
        %2760 = vperm.xlu0 %2759, %v2724
        %v2761 = vpop.permute.xlu0 %2760
        %2764 = vset.pattern.permute.xlu0 0
        %2765 = vperm.xlu0 %2764, %v2725
        %v2766 = vpop.permute.xlu0 %2765
        %2769 = vset.pattern.permute.xlu0 0
        %2770 = vperm.xlu0 %2769, %v2726
        %v2771 = vpop.permute.xlu0 %2770
        %2774 = vset.pattern.permute.xlu0 0
        %2775 = vperm.xlu0 %2774, %v2727
        %v2776 = vpop.permute.xlu0 %2775
        %v2778 = vmul.f32 %v2736, %v2761
        %v2779 = vmul.f32 %v2736, %v2766
        %v2780 = vmul.f32 %v2736, %v2771
        %v2781 = vmul.f32 %v2736, %v2776
        %v2782 = vmul.f32 %v2740, %v2761
        %v2783 = vmul.f32 %v2740, %v2766
        %v2784 = vmul.f32 %v2740, %v2771
        %v2785 = vmul.f32 %v2740, %v2776
        %v2786 = vmul.f32 %v2744, %v2761
        %v2787 = vmul.f32 %v2744, %v2766
        %v2788 = vmul.f32 %v2744, %v2771
        %v2789 = vmul.f32 %v2744, %v2776
        %v2790 = vmul.f32 %v2748, %v2761
        %v2791 = vmul.f32 %v2748, %v2766
        %v2792 = vmul.f32 %v2748, %v2771
        %v2793 = vmul.f32 %v2748, %v2776
        %v2794 = vmul.f32 %v2752, %v2761
        %v2795 = vmul.f32 %v2752, %v2766
        %v2796 = vmul.f32 %v2752, %v2771
        %v2797 = vmul.f32 %v2752, %v2776
        %v2798 = vadd.f32 %v2699, %v2778
        %v2799 = vadd.f32 %v2700, %v2779
        %v2800 = vadd.f32 %v2701, %v2780
        %v2801 = vadd.f32 %v2702, %v2781
        %v2802 = vadd.f32 %v2703, %v2782
        %v2803 = vadd.f32 %v2704, %v2783
        %v2804 = vadd.f32 %v2705, %v2784
        %v2805 = vadd.f32 %v2706, %v2785
        %v2806 = vadd.f32 %v2707, %v2786
        %v2807 = vadd.f32 %v2708, %v2787
        %v2808 = vadd.f32 %v2709, %v2788
        %v2809 = vadd.f32 %v2710, %v2789
        %v2810 = vadd.f32 %v2711, %v2790
        %v2811 = vadd.f32 %v2712, %v2791
        %v2812 = vadd.f32 %v2713, %v2792
        %v2813 = vadd.f32 %v2714, %v2793
        %v2814 = vadd.f32 %v2715, %v2794
        %v2815 = vadd.f32 %v2716, %v2795
        %v2816 = vadd.f32 %v2717, %v2796
        %v2817 = vadd.f32 %v2718, %v2797
        %s2818 = scalar_lea.vmem %s219, 72
        %v2819 = vld [vmem:[%s2818] sm:$0x1]
        %v2820 = vld [vmem:[%s2818 + $0x1] sm:$0x1]
        %v2821 = vld [vmem:[%s2818 + $0x2] sm:$0x1]
        %v2822 = vld [vmem:[%s2818 + $0x3] sm:$0x1]
        %v2823 = vld [vmem:[%s2818 + $0x4] sm:$0x1]
        %v2824 = vld [vmem:[%s528] sm:$0xff]
        %v2825 = vld [vmem:[%s528 + $0x8] sm:$0xff]
        %v2826 = vld [vmem:[%s528 + $0x10] sm:$0xff]
        %v2827 = vld [vmem:[%s528 + $0x18] sm:$0xff]
        %v2833 = vlaneseq
        %v2834 = vshrl.u32 %v2833, 7
        %v2835 = vsub.s32 0, %v2834
        %v2836 = vrot.slane %v2819, %v2835
        %v2837 = vlaneseq
        %v2838 = vshrl.u32 %v2837, 7
        %v2839 = vsub.s32 0, %v2838
        %v2840 = vrot.slane %v2820, %v2839
        %v2841 = vlaneseq
        %v2842 = vshrl.u32 %v2841, 7
        %v2843 = vsub.s32 0, %v2842
        %v2844 = vrot.slane %v2821, %v2843
        %v2845 = vlaneseq
        %v2846 = vshrl.u32 %v2845, 7
        %v2847 = vsub.s32 0, %v2846
        %v2848 = vrot.slane %v2822, %v2847
        %v2849 = vlaneseq
        %v2850 = vshrl.u32 %v2849, 7
        %v2851 = vsub.s32 0, %v2850
        %v2852 = vrot.slane %v2823, %v2851
        %2859 = vset.pattern.permute.xlu0 0
        %2860 = vperm.xlu0 %2859, %v2824
        %v2861 = vpop.permute.xlu0 %2860
        %2864 = vset.pattern.permute.xlu0 0
        %2865 = vperm.xlu0 %2864, %v2825
        %v2866 = vpop.permute.xlu0 %2865
        %2869 = vset.pattern.permute.xlu0 0
        %2870 = vperm.xlu0 %2869, %v2826
        %v2871 = vpop.permute.xlu0 %2870
        %2874 = vset.pattern.permute.xlu0 0
        %2875 = vperm.xlu0 %2874, %v2827
        %v2876 = vpop.permute.xlu0 %2875
        %v2878 = vmul.f32 %v2836, %v2861
        %v2879 = vmul.f32 %v2836, %v2866
        %v2880 = vmul.f32 %v2836, %v2871
        %v2881 = vmul.f32 %v2836, %v2876
        %v2882 = vmul.f32 %v2840, %v2861
        %v2883 = vmul.f32 %v2840, %v2866
        %v2884 = vmul.f32 %v2840, %v2871
        %v2885 = vmul.f32 %v2840, %v2876
        %v2886 = vmul.f32 %v2844, %v2861
        %v2887 = vmul.f32 %v2844, %v2866
        %v2888 = vmul.f32 %v2844, %v2871
        %v2889 = vmul.f32 %v2844, %v2876
        %v2890 = vmul.f32 %v2848, %v2861
        %v2891 = vmul.f32 %v2848, %v2866
        %v2892 = vmul.f32 %v2848, %v2871
        %v2893 = vmul.f32 %v2848, %v2876
        %v2894 = vmul.f32 %v2852, %v2861
        %v2895 = vmul.f32 %v2852, %v2866
        %v2896 = vmul.f32 %v2852, %v2871
        %v2897 = vmul.f32 %v2852, %v2876
        %v2898 = vadd.f32 %v2798, %v2878
        %v2899 = vadd.f32 %v2799, %v2879
        %v2900 = vadd.f32 %v2800, %v2880
        %v2901 = vadd.f32 %v2801, %v2881
        %v2902 = vadd.f32 %v2802, %v2882
        %v2903 = vadd.f32 %v2803, %v2883
        %v2904 = vadd.f32 %v2804, %v2884
        %v2905 = vadd.f32 %v2805, %v2885
        %v2906 = vadd.f32 %v2806, %v2886
        %v2907 = vadd.f32 %v2807, %v2887
        %v2908 = vadd.f32 %v2808, %v2888
        %v2909 = vadd.f32 %v2809, %v2889
        %v2910 = vadd.f32 %v2810, %v2890
        %v2911 = vadd.f32 %v2811, %v2891
        %v2912 = vadd.f32 %v2812, %v2892
        %v2913 = vadd.f32 %v2813, %v2893
        %v2914 = vadd.f32 %v2814, %v2894
        %v2915 = vadd.f32 %v2815, %v2895
        %v2916 = vadd.f32 %v2816, %v2896
        %v2917 = vadd.f32 %v2817, %v2897
        %s2918 = scalar_lea.vmem %s219, 78
        %v2919 = vld [vmem:[%s2918] sm:$0x1]
        %v2920 = vld [vmem:[%s2918 + $0x1] sm:$0x1]
        %v2921 = vld [vmem:[%s2918 + $0x2] sm:$0x1]
        %v2922 = vld [vmem:[%s2918 + $0x3] sm:$0x1]
        %v2923 = vld [vmem:[%s2918 + $0x4] sm:$0x1]
        %v2924 = vld [vmem:[%s629] sm:$0xff]
        %v2925 = vld [vmem:[%s629 + $0x8] sm:$0xff]
        %v2926 = vld [vmem:[%s629 + $0x10] sm:$0xff]
        %v2927 = vld [vmem:[%s629 + $0x18] sm:$0xff]
        %v2933 = vlaneseq
        %v2934 = vshrl.u32 %v2933, 7
        %v2935 = vsub.s32 0, %v2934
        %v2936 = vrot.slane %v2919, %v2935
        %v2937 = vlaneseq
        %v2938 = vshrl.u32 %v2937, 7
        %v2939 = vsub.s32 0, %v2938
        %v2940 = vrot.slane %v2920, %v2939
        %v2941 = vlaneseq
        %v2942 = vshrl.u32 %v2941, 7
        %v2943 = vsub.s32 0, %v2942
        %v2944 = vrot.slane %v2921, %v2943
        %v2945 = vlaneseq
        %v2946 = vshrl.u32 %v2945, 7
        %v2947 = vsub.s32 0, %v2946
        %v2948 = vrot.slane %v2922, %v2947
        %v2949 = vlaneseq
        %v2950 = vshrl.u32 %v2949, 7
        %v2951 = vsub.s32 0, %v2950
        %v2952 = vrot.slane %v2923, %v2951
        %2959 = vset.pattern.permute.xlu0 0
        %2960 = vperm.xlu0 %2959, %v2924
        %v2961 = vpop.permute.xlu0 %2960
        %2964 = vset.pattern.permute.xlu0 0
        %2965 = vperm.xlu0 %2964, %v2925
        %v2966 = vpop.permute.xlu0 %2965
        %2969 = vset.pattern.permute.xlu0 0
        %2970 = vperm.xlu0 %2969, %v2926
        %v2971 = vpop.permute.xlu0 %2970
        %2974 = vset.pattern.permute.xlu0 0
        %2975 = vperm.xlu0 %2974, %v2927
        %v2976 = vpop.permute.xlu0 %2975
        %v2978 = vmul.f32 %v2936, %v2961
        %v2979 = vmul.f32 %v2936, %v2966
        %v2980 = vmul.f32 %v2936, %v2971
        %v2981 = vmul.f32 %v2936, %v2976
        %v2982 = vmul.f32 %v2940, %v2961
        %v2983 = vmul.f32 %v2940, %v2966
        %v2984 = vmul.f32 %v2940, %v2971
        %v2985 = vmul.f32 %v2940, %v2976
        %v2986 = vmul.f32 %v2944, %v2961
        %v2987 = vmul.f32 %v2944, %v2966
        %v2988 = vmul.f32 %v2944, %v2971
        %v2989 = vmul.f32 %v2944, %v2976
        %v2990 = vmul.f32 %v2948, %v2961
        %v2991 = vmul.f32 %v2948, %v2966
        %v2992 = vmul.f32 %v2948, %v2971
        %v2993 = vmul.f32 %v2948, %v2976
        %v2994 = vmul.f32 %v2952, %v2961
        %v2995 = vmul.f32 %v2952, %v2966
        %v2996 = vmul.f32 %v2952, %v2971
        %v2997 = vmul.f32 %v2952, %v2976
        %v2998 = vadd.f32 %v2898, %v2978
        %v2999 = vadd.f32 %v2899, %v2979
        %v3000 = vadd.f32 %v2900, %v2980
        %v3001 = vadd.f32 %v2901, %v2981
        %v3002 = vadd.f32 %v2902, %v2982
        %v3003 = vadd.f32 %v2903, %v2983
        %v3004 = vadd.f32 %v2904, %v2984
        %v3005 = vadd.f32 %v2905, %v2985
        %v3006 = vadd.f32 %v2906, %v2986
        %v3007 = vadd.f32 %v2907, %v2987
        %v3008 = vadd.f32 %v2908, %v2988
        %v3009 = vadd.f32 %v2909, %v2989
        %v3010 = vadd.f32 %v2910, %v2990
        %v3011 = vadd.f32 %v2911, %v2991
        %v3012 = vadd.f32 %v2912, %v2992
        %v3013 = vadd.f32 %v2913, %v2993
        %v3014 = vadd.f32 %v2914, %v2994
        %v3015 = vadd.f32 %v2915, %v2995
        %v3016 = vadd.f32 %v2916, %v2996
        %v3017 = vadd.f32 %v2917, %v2997
        %s3018 = scalar_lea.vmem %s219, 84
        %v3019 = vld [vmem:[%s3018] sm:$0x1]
        %v3020 = vld [vmem:[%s3018 + $0x1] sm:$0x1]
        %v3021 = vld [vmem:[%s3018 + $0x2] sm:$0x1]
        %v3022 = vld [vmem:[%s3018 + $0x3] sm:$0x1]
        %v3023 = vld [vmem:[%s3018 + $0x4] sm:$0x1]
        %v3024 = vld [vmem:[%s730] sm:$0xff]
        %v3025 = vld [vmem:[%s730 + $0x8] sm:$0xff]
        %v3026 = vld [vmem:[%s730 + $0x10] sm:$0xff]
        %v3027 = vld [vmem:[%s730 + $0x18] sm:$0xff]
        %v3033 = vlaneseq
        %v3034 = vshrl.u32 %v3033, 7
        %v3035 = vsub.s32 0, %v3034
        %v3036 = vrot.slane %v3019, %v3035
        %v3037 = vlaneseq
        %v3038 = vshrl.u32 %v3037, 7
        %v3039 = vsub.s32 0, %v3038
        %v3040 = vrot.slane %v3020, %v3039
        %v3041 = vlaneseq
        %v3042 = vshrl.u32 %v3041, 7
        %v3043 = vsub.s32 0, %v3042
        %v3044 = vrot.slane %v3021, %v3043
        %v3045 = vlaneseq
        %v3046 = vshrl.u32 %v3045, 7
        %v3047 = vsub.s32 0, %v3046
        %v3048 = vrot.slane %v3022, %v3047
        %v3049 = vlaneseq
        %v3050 = vshrl.u32 %v3049, 7
        %v3051 = vsub.s32 0, %v3050
        %v3052 = vrot.slane %v3023, %v3051
        %3059 = vset.pattern.permute.xlu0 0
        %3060 = vperm.xlu0 %3059, %v3024
        %v3061 = vpop.permute.xlu0 %3060
        %3064 = vset.pattern.permute.xlu0 0
        %3065 = vperm.xlu0 %3064, %v3025
        %v3066 = vpop.permute.xlu0 %3065
        %3069 = vset.pattern.permute.xlu0 0
        %3070 = vperm.xlu0 %3069, %v3026
        %v3071 = vpop.permute.xlu0 %3070
        %3074 = vset.pattern.permute.xlu0 0
        %3075 = vperm.xlu0 %3074, %v3027
        %v3076 = vpop.permute.xlu0 %3075
        %v3078 = vmul.f32 %v3036, %v3061
        %v3079 = vmul.f32 %v3036, %v3066
        %v3080 = vmul.f32 %v3036, %v3071
        %v3081 = vmul.f32 %v3036, %v3076
        %v3082 = vmul.f32 %v3040, %v3061
        %v3083 = vmul.f32 %v3040, %v3066
        %v3084 = vmul.f32 %v3040, %v3071
        %v3085 = vmul.f32 %v3040, %v3076
        %v3086 = vmul.f32 %v3044, %v3061
        %v3087 = vmul.f32 %v3044, %v3066
        %v3088 = vmul.f32 %v3044, %v3071
        %v3089 = vmul.f32 %v3044, %v3076
        %v3090 = vmul.f32 %v3048, %v3061
        %v3091 = vmul.f32 %v3048, %v3066
        %v3092 = vmul.f32 %v3048, %v3071
        %v3093 = vmul.f32 %v3048, %v3076
        %v3094 = vmul.f32 %v3052, %v3061
        %v3095 = vmul.f32 %v3052, %v3066
        %v3096 = vmul.f32 %v3052, %v3071
        %v3097 = vmul.f32 %v3052, %v3076
        %v3098 = vadd.f32 %v2998, %v3078
        %v3099 = vadd.f32 %v2999, %v3079
        %v3100 = vadd.f32 %v3000, %v3080
        %v3101 = vadd.f32 %v3001, %v3081
        %v3102 = vadd.f32 %v3002, %v3082
        %v3103 = vadd.f32 %v3003, %v3083
        %v3104 = vadd.f32 %v3004, %v3084
        %v3105 = vadd.f32 %v3005, %v3085
        %v3106 = vadd.f32 %v3006, %v3086
        %v3107 = vadd.f32 %v3007, %v3087
        %v3108 = vadd.f32 %v3008, %v3088
        %v3109 = vadd.f32 %v3009, %v3089
        %v3110 = vadd.f32 %v3010, %v3090
        %v3111 = vadd.f32 %v3011, %v3091
        %v3112 = vadd.f32 %v3012, %v3092
        %v3113 = vadd.f32 %v3013, %v3093
        %v3114 = vadd.f32 %v3014, %v3094
        %v3115 = vadd.f32 %v3015, %v3095
        %v3116 = vadd.f32 %v3016, %v3096
        %v3117 = vadd.f32 %v3017, %v3097
        %s3118 = scalar_lea.vmem %s219, 1
        %v3119 = vld [vmem:[%s3118] sm:$0x1]
        %v3120 = vld [vmem:[%s3118 + $0x1] sm:$0x1]
        %v3121 = vld [vmem:[%s3118 + $0x2] sm:$0x1]
        %v3122 = vld [vmem:[%s3118 + $0x3] sm:$0x1]
        %v3123 = vld [vmem:[%s3118 + $0x4] sm:$0x1]
        %v3124 = vld [vmem:[%s831] sm:$0xff]
        %v3125 = vld [vmem:[%s831 + $0x8] sm:$0xff]
        %v3126 = vld [vmem:[%s831 + $0x10] sm:$0xff]
        %v3127 = vld [vmem:[%s831 + $0x18] sm:$0xff]
        %v3133 = vlaneseq
        %v3134 = vshrl.u32 %v3133, 7
        %v3135 = vsub.s32 0, %v3134
        %v3136 = vrot.slane %v3119, %v3135
        %v3137 = vlaneseq
        %v3138 = vshrl.u32 %v3137, 7
        %v3139 = vsub.s32 0, %v3138
        %v3140 = vrot.slane %v3120, %v3139
        %v3141 = vlaneseq
        %v3142 = vshrl.u32 %v3141, 7
        %v3143 = vsub.s32 0, %v3142
        %v3144 = vrot.slane %v3121, %v3143
        %v3145 = vlaneseq
        %v3146 = vshrl.u32 %v3145, 7
        %v3147 = vsub.s32 0, %v3146
        %v3148 = vrot.slane %v3122, %v3147
        %v3149 = vlaneseq
        %v3150 = vshrl.u32 %v3149, 7
        %v3151 = vsub.s32 0, %v3150
        %v3152 = vrot.slane %v3123, %v3151
        %3159 = vset.pattern.permute.xlu0 0
        %3160 = vperm.xlu0 %3159, %v3124
        %v3161 = vpop.permute.xlu0 %3160
        %3164 = vset.pattern.permute.xlu0 0
        %3165 = vperm.xlu0 %3164, %v3125
        %v3166 = vpop.permute.xlu0 %3165
        %3169 = vset.pattern.permute.xlu0 0
        %3170 = vperm.xlu0 %3169, %v3126
        %v3171 = vpop.permute.xlu0 %3170
        %3174 = vset.pattern.permute.xlu0 0
        %3175 = vperm.xlu0 %3174, %v3127
        %v3176 = vpop.permute.xlu0 %3175
        %v3178 = vmul.f32 %v3136, %v3161
        %v3179 = vmul.f32 %v3136, %v3166
        %v3180 = vmul.f32 %v3136, %v3171
        %v3181 = vmul.f32 %v3136, %v3176
        %v3182 = vmul.f32 %v3140, %v3161
        %v3183 = vmul.f32 %v3140, %v3166
        %v3184 = vmul.f32 %v3140, %v3171
        %v3185 = vmul.f32 %v3140, %v3176
        %v3186 = vmul.f32 %v3144, %v3161
        %v3187 = vmul.f32 %v3144, %v3166
        %v3188 = vmul.f32 %v3144, %v3171
        %v3189 = vmul.f32 %v3144, %v3176
        %v3190 = vmul.f32 %v3148, %v3161
        %v3191 = vmul.f32 %v3148, %v3166
        %v3192 = vmul.f32 %v3148, %v3171
        %v3193 = vmul.f32 %v3148, %v3176
        %v3194 = vmul.f32 %v3152, %v3161
        %v3195 = vmul.f32 %v3152, %v3166
        %v3196 = vmul.f32 %v3152, %v3171
        %v3197 = vmul.f32 %v3152, %v3176
        %v3198 = vadd.f32 %v3098, %v3178
        %v3199 = vadd.f32 %v3099, %v3179
        %v3200 = vadd.f32 %v3100, %v3180
        %v3201 = vadd.f32 %v3101, %v3181
        %v3202 = vadd.f32 %v3102, %v3182
        %v3203 = vadd.f32 %v3103, %v3183
        %v3204 = vadd.f32 %v3104, %v3184
        %v3205 = vadd.f32 %v3105, %v3185
        %v3206 = vadd.f32 %v3106, %v3186
        %v3207 = vadd.f32 %v3107, %v3187
        %v3208 = vadd.f32 %v3108, %v3188
        %v3209 = vadd.f32 %v3109, %v3189
        %v3210 = vadd.f32 %v3110, %v3190
        %v3211 = vadd.f32 %v3111, %v3191
        %v3212 = vadd.f32 %v3112, %v3192
        %v3213 = vadd.f32 %v3113, %v3193
        %v3214 = vadd.f32 %v3114, %v3194
        %v3215 = vadd.f32 %v3115, %v3195
        %v3216 = vadd.f32 %v3116, %v3196
        %v3217 = vadd.f32 %v3117, %v3197
        %s3218 = scalar_lea.vmem %s219, 7
        %v3219 = vld [vmem:[%s3218] sm:$0x1]
        %v3220 = vld [vmem:[%s3218 + $0x1] sm:$0x1]
        %v3221 = vld [vmem:[%s3218 + $0x2] sm:$0x1]
        %v3222 = vld [vmem:[%s3218 + $0x3] sm:$0x1]
        %v3223 = vld [vmem:[%s3218 + $0x4] sm:$0x1]
        %v3224 = vld [vmem:[%s932] sm:$0xff]
        %v3225 = vld [vmem:[%s932 + $0x8] sm:$0xff]
        %v3226 = vld [vmem:[%s932 + $0x10] sm:$0xff]
        %v3227 = vld [vmem:[%s932 + $0x18] sm:$0xff]
        %v3233 = vlaneseq
        %v3234 = vshrl.u32 %v3233, 7
        %v3235 = vsub.s32 0, %v3234
        %v3236 = vrot.slane %v3219, %v3235
        %v3237 = vlaneseq
        %v3238 = vshrl.u32 %v3237, 7
        %v3239 = vsub.s32 0, %v3238
        %v3240 = vrot.slane %v3220, %v3239
        %v3241 = vlaneseq
        %v3242 = vshrl.u32 %v3241, 7
        %v3243 = vsub.s32 0, %v3242
        %v3244 = vrot.slane %v3221, %v3243
        %v3245 = vlaneseq
        %v3246 = vshrl.u32 %v3245, 7
        %v3247 = vsub.s32 0, %v3246
        %v3248 = vrot.slane %v3222, %v3247
        %v3249 = vlaneseq
        %v3250 = vshrl.u32 %v3249, 7
        %v3251 = vsub.s32 0, %v3250
        %v3252 = vrot.slane %v3223, %v3251
        %3259 = vset.pattern.permute.xlu0 0
        %3260 = vperm.xlu0 %3259, %v3224
        %v3261 = vpop.permute.xlu0 %3260
        %3264 = vset.pattern.permute.xlu0 0
        %3265 = vperm.xlu0 %3264, %v3225
        %v3266 = vpop.permute.xlu0 %3265
        %3269 = vset.pattern.permute.xlu0 0
        %3270 = vperm.xlu0 %3269, %v3226
        %v3271 = vpop.permute.xlu0 %3270
        %3274 = vset.pattern.permute.xlu0 0
        %3275 = vperm.xlu0 %3274, %v3227
        %v3276 = vpop.permute.xlu0 %3275
        %v3278 = vmul.f32 %v3236, %v3261
        %v3279 = vmul.f32 %v3236, %v3266
        %v3280 = vmul.f32 %v3236, %v3271
        %v3281 = vmul.f32 %v3236, %v3276
        %v3282 = vmul.f32 %v3240, %v3261
        %v3283 = vmul.f32 %v3240, %v3266
        %v3284 = vmul.f32 %v3240, %v3271
        %v3285 = vmul.f32 %v3240, %v3276
        %v3286 = vmul.f32 %v3244, %v3261
        %v3287 = vmul.f32 %v3244, %v3266
        %v3288 = vmul.f32 %v3244, %v3271
        %v3289 = vmul.f32 %v3244, %v3276
        %v3290 = vmul.f32 %v3248, %v3261
        %v3291 = vmul.f32 %v3248, %v3266
        %v3292 = vmul.f32 %v3248, %v3271
        %v3293 = vmul.f32 %v3248, %v3276
        %v3294 = vmul.f32 %v3252, %v3261
        %v3295 = vmul.f32 %v3252, %v3266
        %v3296 = vmul.f32 %v3252, %v3271
        %v3297 = vmul.f32 %v3252, %v3276
        %v3298 = vadd.f32 %v3198, %v3278
        %v3299 = vadd.f32 %v3199, %v3279
        %v3300 = vadd.f32 %v3200, %v3280
        %v3301 = vadd.f32 %v3201, %v3281
        %v3302 = vadd.f32 %v3202, %v3282
        %v3303 = vadd.f32 %v3203, %v3283
        %v3304 = vadd.f32 %v3204, %v3284
        %v3305 = vadd.f32 %v3205, %v3285
        %v3306 = vadd.f32 %v3206, %v3286
        %v3307 = vadd.f32 %v3207, %v3287
        %v3308 = vadd.f32 %v3208, %v3288
        %v3309 = vadd.f32 %v3209, %v3289
        %v3310 = vadd.f32 %v3210, %v3290
        %v3311 = vadd.f32 %v3211, %v3291
        %v3312 = vadd.f32 %v3212, %v3292
        %v3313 = vadd.f32 %v3213, %v3293
        %v3314 = vadd.f32 %v3214, %v3294
        %v3315 = vadd.f32 %v3215, %v3295
        %v3316 = vadd.f32 %v3216, %v3296
        %v3317 = vadd.f32 %v3217, %v3297
        %s3318 = scalar_lea.vmem %s219, 13
        %v3319 = vld [vmem:[%s3318] sm:$0x1]
        %v3320 = vld [vmem:[%s3318 + $0x1] sm:$0x1]
        %v3321 = vld [vmem:[%s3318 + $0x2] sm:$0x1]
        %v3322 = vld [vmem:[%s3318 + $0x3] sm:$0x1]
        %v3323 = vld [vmem:[%s3318 + $0x4] sm:$0x1]
        %v3324 = vld [vmem:[%s1033] sm:$0xff]
        %v3325 = vld [vmem:[%s1033 + $0x8] sm:$0xff]
        %v3326 = vld [vmem:[%s1033 + $0x10] sm:$0xff]
        %v3327 = vld [vmem:[%s1033 + $0x18] sm:$0xff]
        %v3333 = vlaneseq
        %v3334 = vshrl.u32 %v3333, 7
        %v3335 = vsub.s32 0, %v3334
        %v3336 = vrot.slane %v3319, %v3335
        %v3337 = vlaneseq
        %v3338 = vshrl.u32 %v3337, 7
        %v3339 = vsub.s32 0, %v3338
        %v3340 = vrot.slane %v3320, %v3339
        %v3341 = vlaneseq
        %v3342 = vshrl.u32 %v3341, 7
        %v3343 = vsub.s32 0, %v3342
        %v3344 = vrot.slane %v3321, %v3343
        %v3345 = vlaneseq
        %v3346 = vshrl.u32 %v3345, 7
        %v3347 = vsub.s32 0, %v3346
        %v3348 = vrot.slane %v3322, %v3347
        %v3349 = vlaneseq
        %v3350 = vshrl.u32 %v3349, 7
        %v3351 = vsub.s32 0, %v3350
        %v3352 = vrot.slane %v3323, %v3351
        %3359 = vset.pattern.permute.xlu0 0
        %3360 = vperm.xlu0 %3359, %v3324
        %v3361 = vpop.permute.xlu0 %3360
        %3364 = vset.pattern.permute.xlu0 0
        %3365 = vperm.xlu0 %3364, %v3325
        %v3366 = vpop.permute.xlu0 %3365
        %3369 = vset.pattern.permute.xlu0 0
        %3370 = vperm.xlu0 %3369, %v3326
        %v3371 = vpop.permute.xlu0 %3370
        %3374 = vset.pattern.permute.xlu0 0
        %3375 = vperm.xlu0 %3374, %v3327
        %v3376 = vpop.permute.xlu0 %3375
        %v3378 = vmul.f32 %v3336, %v3361
        %v3379 = vmul.f32 %v3336, %v3366
        %v3380 = vmul.f32 %v3336, %v3371
        %v3381 = vmul.f32 %v3336, %v3376
        %v3382 = vmul.f32 %v3340, %v3361
        %v3383 = vmul.f32 %v3340, %v3366
        %v3384 = vmul.f32 %v3340, %v3371
        %v3385 = vmul.f32 %v3340, %v3376
        %v3386 = vmul.f32 %v3344, %v3361
        %v3387 = vmul.f32 %v3344, %v3366
        %v3388 = vmul.f32 %v3344, %v3371
        %v3389 = vmul.f32 %v3344, %v3376
        %v3390 = vmul.f32 %v3348, %v3361
        %v3391 = vmul.f32 %v3348, %v3366
        %v3392 = vmul.f32 %v3348, %v3371
        %v3393 = vmul.f32 %v3348, %v3376
        %v3394 = vmul.f32 %v3352, %v3361
        %v3395 = vmul.f32 %v3352, %v3366
        %v3396 = vmul.f32 %v3352, %v3371
        %v3397 = vmul.f32 %v3352, %v3376
        %v3398 = vadd.f32 %v3298, %v3378
        %v3399 = vadd.f32 %v3299, %v3379
        %v3400 = vadd.f32 %v3300, %v3380
        %v3401 = vadd.f32 %v3301, %v3381
        %v3402 = vadd.f32 %v3302, %v3382
        %v3403 = vadd.f32 %v3303, %v3383
        %v3404 = vadd.f32 %v3304, %v3384
        %v3405 = vadd.f32 %v3305, %v3385
        %v3406 = vadd.f32 %v3306, %v3386
        %v3407 = vadd.f32 %v3307, %v3387
        %v3408 = vadd.f32 %v3308, %v3388
        %v3409 = vadd.f32 %v3309, %v3389
        %v3410 = vadd.f32 %v3310, %v3390
        %v3411 = vadd.f32 %v3311, %v3391
        %v3412 = vadd.f32 %v3312, %v3392
        %v3413 = vadd.f32 %v3313, %v3393
        %v3414 = vadd.f32 %v3314, %v3394
        %v3415 = vadd.f32 %v3315, %v3395
        %v3416 = vadd.f32 %v3316, %v3396
        %v3417 = vadd.f32 %v3317, %v3397
        %v3418 = vld [vmem:[%s2] sm:$0xff]
        %v3419 = vld [vmem:[%s2 + $0x8] sm:$0xff]
        %v3420 = vld [vmem:[%s2 + $0x10] sm:$0xff]
        %v3421 = vld [vmem:[%s2 + $0x18] sm:$0xff]
        %3423 = vset.pattern.permute.xlu0 0
        %3424 = vperm.xlu0 %3423, %v3418
        %v3425 = vpop.permute.xlu0 %3424
        %3428 = vset.pattern.permute.xlu0 0
        %3429 = vperm.xlu0 %3428, %v3419
        %v3430 = vpop.permute.xlu0 %3429
        %3433 = vset.pattern.permute.xlu0 0
        %3434 = vperm.xlu0 %3433, %v3420
        %v3435 = vpop.permute.xlu0 %3434
        %3438 = vset.pattern.permute.xlu0 0
        %3439 = vperm.xlu0 %3438, %v3421
        %v3440 = vpop.permute.xlu0 %3439
        %v3442 = vadd.f32 %v3398, %v3425
        %v3443 = vadd.f32 %v3399, %v3430
        %v3444 = vadd.f32 %v3400, %v3435
        %v3445 = vadd.f32 %v3401, %v3440
        %v3446 = vadd.f32 %v3402, %v3425
        %v3447 = vadd.f32 %v3403, %v3430
        %v3448 = vadd.f32 %v3404, %v3435
        %v3449 = vadd.f32 %v3405, %v3440
        %v3450 = vadd.f32 %v3406, %v3425
        %v3451 = vadd.f32 %v3407, %v3430
        %v3452 = vadd.f32 %v3408, %v3435
        %v3453 = vadd.f32 %v3409, %v3440
        %v3454 = vadd.f32 %v3410, %v3425
        %v3455 = vadd.f32 %v3411, %v3430
        %v3456 = vadd.f32 %v3412, %v3435
        %v3457 = vadd.f32 %v3413, %v3440
        %v3458 = vadd.f32 %v3414, %v3425
        %v3459 = vadd.f32 %v3415, %v3430
        %v3460 = vadd.f32 %v3416, %v3435
        %v3461 = vadd.f32 %v3417, %v3440
        %v3462 = vmax.f32 %v3442, 0.0
        %v3463 = vmax.f32 %v3443, 0.0
        %v3464 = vmax.f32 %v3444, 0.0
        %v3465 = vmax.f32 %v3445, 0.0
        %v3466 = vmax.f32 %v3446, 0.0
        %v3467 = vmax.f32 %v3447, 0.0
        %v3468 = vmax.f32 %v3448, 0.0
        %v3469 = vmax.f32 %v3449, 0.0
        %v3470 = vmax.f32 %v3450, 0.0
        %v3471 = vmax.f32 %v3451, 0.0
        %v3472 = vmax.f32 %v3452, 0.0
        %v3473 = vmax.f32 %v3453, 0.0
        %v3474 = vmax.f32 %v3454, 0.0
        %v3475 = vmax.f32 %v3455, 0.0
        %v3476 = vmax.f32 %v3456, 0.0
        %v3477 = vmax.f32 %v3457, 0.0
        %v3478 = vmax.f32 %v3458, 0.0
        %v3479 = vmax.f32 %v3459, 0.0
        %v3480 = vmax.f32 %v3460, 0.0
        %v3481 = vmax.f32 %v3461, 0.0
        %v3482 = vmin.f32 %v3462, 20.0
        %v3483 = vmin.f32 %v3463, 20.0
        %v3484 = vmin.f32 %v3464, 20.0
        %v3485 = vmin.f32 %v3465, 20.0
        %v3486 = vmin.f32 %v3466, 20.0
        %v3487 = vmin.f32 %v3467, 20.0
        %v3488 = vmin.f32 %v3468, 20.0
        %v3489 = vmin.f32 %v3469, 20.0
        %v3490 = vmin.f32 %v3470, 20.0
        %v3491 = vmin.f32 %v3471, 20.0
        %v3492 = vmin.f32 %v3472, 20.0
        %v3493 = vmin.f32 %v3473, 20.0
        %v3494 = vmin.f32 %v3474, 20.0
        %v3495 = vmin.f32 %v3475, 20.0
        %v3496 = vmin.f32 %v3476, 20.0
        %v3497 = vmin.f32 %v3477, 20.0
        %v3498 = vmin.f32 %v3478, 20.0
        %v3499 = vmin.f32 %v3479, 20.0
        %v3500 = vmin.f32 %v3480, 20.0
        %v3501 = vmin.f32 %v3481, 20.0
        %v3502 = vpack.c.bf16 %v3483, %v3482
        %v3503 = vpack.c.bf16 %v3485, %v3484
        %v3504 = vpack.c.bf16 %v3487, %v3486
        %v3505 = vpack.c.bf16 %v3489, %v3488
        %v3506 = vpack.c.bf16 %v3491, %v3490
        %v3507 = vpack.c.bf16 %v3493, %v3492
        %v3508 = vpack.c.bf16 %v3495, %v3494
        %v3509 = vpack.c.bf16 %v3497, %v3496
        %v3510 = vpack.c.bf16 %v3499, %v3498
        %v3511 = vpack.c.bf16 %v3501, %v3500
        %3512 = vst.msk [vmem:[#allocation2 + $0x50] sm:$0xff] %vm1222, %v3502
        %3513 = vst.msk [vmem:[#allocation2 + $0x58] sm:$0xff] %vm1222, %v3503
        %3514 = vst.msk [vmem:[#allocation2 + $0x60] sm:$0xff] %vm1222, %v3504
        %3515 = vst.msk [vmem:[#allocation2 + $0x68] sm:$0xff] %vm1222, %v3505
        %3516 = vst.msk [vmem:[#allocation2 + $0x70] sm:$0xff] %vm1222, %v3506
        %3517 = vst.msk [vmem:[#allocation2 + $0x78] sm:$0xff] %vm1222, %v3507
        %3518 = vst.msk [vmem:[#allocation2 + $0x80] sm:$0xff] %vm1222, %v3508
        %3519 = vst.msk [vmem:[#allocation2 + $0x88] sm:$0xff] %vm1222, %v3509
        %3520 = vst.msk [vmem:[#allocation2 + $0x90] sm:$0xff] %vm1222, %v3510
        %3521 = vst.msk [vmem:[#allocation2 + $0x98] sm:$0xff] %vm1222, %v3511
        %3524 = vrot.lane.b32.xlu0 %v3502, 127
        %v3525 = vpop.permute.xlu0 %3524
        %3526 = vrot.lane.b32.xlu0 %v3503, 127
        %v3527 = vpop.permute.xlu0 %3526
        %3530 = vst.msk [vmem:[#allocation2 + $0x190] sm:$0xff] %vm1222, %v3525
        %3531 = vst.msk [vmem:[#allocation2 + $0x198] sm:$0xff] %vm1222, %v3527
        %3534 = vrot.lane.b32.xlu0 %v3504, 127
        %v3535 = vpop.permute.xlu0 %3534
        %3536 = vrot.lane.b32.xlu0 %v3505, 127
        %v3537 = vpop.permute.xlu0 %3536
        %3540 = vst.msk [vmem:[#allocation2 + $0x1a0] sm:$0xff] %vm1222, %v3535
        %3541 = vst.msk [vmem:[#allocation2 + $0x1a8] sm:$0xff] %vm1222, %v3537
        %3544 = vrot.lane.b32.xlu0 %v3506, 127
        %v3545 = vpop.permute.xlu0 %3544
        %3546 = vrot.lane.b32.xlu0 %v3507, 127
        %v3547 = vpop.permute.xlu0 %3546
        %3550 = vst.msk [vmem:[#allocation2 + $0x1b0] sm:$0xff] %vm1222, %v3545
        %3551 = vst.msk [vmem:[#allocation2 + $0x1b8] sm:$0xff] %vm1222, %v3547
        %3554 = vrot.lane.b32.xlu0 %v3508, 127
        %v3555 = vpop.permute.xlu0 %3554
        %3556 = vrot.lane.b32.xlu0 %v3509, 127
        %v3557 = vpop.permute.xlu0 %3556
        %3560 = vst.msk [vmem:[#allocation2 + $0x1c0] sm:$0xff] %vm1222, %v3555
        %3561 = vst.msk [vmem:[#allocation2 + $0x1c8] sm:$0xff] %vm1222, %v3557
        %3564 = vrot.lane.b32.xlu0 %v3510, 127
        %v3565 = vpop.permute.xlu0 %3564
        %3566 = vrot.lane.b32.xlu0 %v3511, 127
        %v3567 = vpop.permute.xlu0 %3566
        %3570 = vst.msk [vmem:[#allocation2 + $0x1d0] sm:$0xff] %vm1222, %v3565
        %3571 = vst.msk [vmem:[#allocation2 + $0x1d8] sm:$0xff] %vm1222, %v3567
        %v3572 = vld [vmem:[%s1027] sm:$0x1]
        %v3573 = vld [vmem:[%s1027 + $0x1] sm:$0x1]
        %v3574 = vld [vmem:[%s1027 + $0x2] sm:$0x1]
        %v3575 = vld [vmem:[%s1027 + $0x3] sm:$0x1]
        %v3576 = vld [vmem:[%s1027 + $0x4] sm:$0x1]
        %v3577 = vld [vmem:[%s1] sm:$0xff]
        %v3578 = vld [vmem:[%s1 + $0x8] sm:$0xff]
        %v3579 = vld [vmem:[%s1 + $0x10] sm:$0xff]
        %v3580 = vld [vmem:[%s1 + $0x18] sm:$0xff]
        %v3586 = vlaneseq
        %v3587 = vshrl.u32 %v3586, 7
        %v3588 = vsub.s32 0, %v3587
        %v3589 = vrot.slane %v3572, %v3588
        %v3590 = vlaneseq
        %v3591 = vshrl.u32 %v3590, 7
        %v3592 = vsub.s32 0, %v3591
        %v3593 = vrot.slane %v3573, %v3592
        %v3594 = vlaneseq
        %v3595 = vshrl.u32 %v3594, 7
        %v3596 = vsub.s32 0, %v3595
        %v3597 = vrot.slane %v3574, %v3596
        %v3598 = vlaneseq
        %v3599 = vshrl.u32 %v3598, 7
        %v3600 = vsub.s32 0, %v3599
        %v3601 = vrot.slane %v3575, %v3600
        %v3602 = vlaneseq
        %v3603 = vshrl.u32 %v3602, 7
        %v3604 = vsub.s32 0, %v3603
        %v3605 = vrot.slane %v3576, %v3604
        %3612 = vset.pattern.permute.xlu0 0
        %3613 = vperm.xlu0 %3612, %v3577
        %v3614 = vpop.permute.xlu0 %3613
        %3617 = vset.pattern.permute.xlu0 0
        %3618 = vperm.xlu0 %3617, %v3578
        %v3619 = vpop.permute.xlu0 %3618
        %3622 = vset.pattern.permute.xlu0 0
        %3623 = vperm.xlu0 %3622, %v3579
        %v3624 = vpop.permute.xlu0 %3623
        %3627 = vset.pattern.permute.xlu0 0
        %3628 = vperm.xlu0 %3627, %v3580
        %v3629 = vpop.permute.xlu0 %3628
        %v3631 = vmul.f32 %v3589, %v3614
        %v3632 = vmul.f32 %v3589, %v3619
        %v3633 = vmul.f32 %v3589, %v3624
        %v3634 = vmul.f32 %v3589, %v3629
        %v3635 = vmul.f32 %v3593, %v3614
        %v3636 = vmul.f32 %v3593, %v3619
        %v3637 = vmul.f32 %v3593, %v3624
        %v3638 = vmul.f32 %v3593, %v3629
        %v3639 = vmul.f32 %v3597, %v3614
        %v3640 = vmul.f32 %v3597, %v3619
        %v3641 = vmul.f32 %v3597, %v3624
        %v3642 = vmul.f32 %v3597, %v3629
        %v3643 = vmul.f32 %v3601, %v3614
        %v3644 = vmul.f32 %v3601, %v3619
        %v3645 = vmul.f32 %v3601, %v3624
        %v3646 = vmul.f32 %v3601, %v3629
        %v3647 = vmul.f32 %v3605, %v3614
        %v3648 = vmul.f32 %v3605, %v3619
        %v3649 = vmul.f32 %v3605, %v3624
        %v3650 = vmul.f32 %v3605, %v3629
        %v3651 = vadd.f32 %v3631, 0.0
        %v3652 = vadd.f32 %v3632, 0.0
        %v3653 = vadd.f32 %v3633, 0.0
        %v3654 = vadd.f32 %v3634, 0.0
        %v3655 = vadd.f32 %v3635, 0.0
        %v3656 = vadd.f32 %v3636, 0.0
        %v3657 = vadd.f32 %v3637, 0.0
        %v3658 = vadd.f32 %v3638, 0.0
        %v3659 = vadd.f32 %v3639, 0.0
        %v3660 = vadd.f32 %v3640, 0.0
        %v3661 = vadd.f32 %v3641, 0.0
        %v3662 = vadd.f32 %v3642, 0.0
        %v3663 = vadd.f32 %v3643, 0.0
        %v3664 = vadd.f32 %v3644, 0.0
        %v3665 = vadd.f32 %v3645, 0.0
        %v3666 = vadd.f32 %v3646, 0.0
        %v3667 = vadd.f32 %v3647, 0.0
        %v3668 = vadd.f32 %v3648, 0.0
        %v3669 = vadd.f32 %v3649, 0.0
        %v3670 = vadd.f32 %v3650, 0.0
        %v3671 = vld [vmem:[%s2138] sm:$0x1]
        %v3672 = vld [vmem:[%s2138 + $0x1] sm:$0x1]
        %v3673 = vld [vmem:[%s2138 + $0x2] sm:$0x1]
        %v3674 = vld [vmem:[%s2138 + $0x3] sm:$0x1]
        %v3675 = vld [vmem:[%s2138 + $0x4] sm:$0x1]
        %v3676 = vld [vmem:[%s326] sm:$0xff]
        %v3677 = vld [vmem:[%s326 + $0x8] sm:$0xff]
        %v3678 = vld [vmem:[%s326 + $0x10] sm:$0xff]
        %v3679 = vld [vmem:[%s326 + $0x18] sm:$0xff]
        %v3685 = vlaneseq
        %v3686 = vshrl.u32 %v3685, 7
        %v3687 = vsub.s32 0, %v3686
        %v3688 = vrot.slane %v3671, %v3687
        %v3689 = vlaneseq
        %v3690 = vshrl.u32 %v3689, 7
        %v3691 = vsub.s32 0, %v3690
        %v3692 = vrot.slane %v3672, %v3691
        %v3693 = vlaneseq
        %v3694 = vshrl.u32 %v3693, 7
        %v3695 = vsub.s32 0, %v3694
        %v3696 = vrot.slane %v3673, %v3695
        %v3697 = vlaneseq
        %v3698 = vshrl.u32 %v3697, 7
        %v3699 = vsub.s32 0, %v3698
        %v3700 = vrot.slane %v3674, %v3699
        %v3701 = vlaneseq
        %v3702 = vshrl.u32 %v3701, 7
        %v3703 = vsub.s32 0, %v3702
        %v3704 = vrot.slane %v3675, %v3703
        %3711 = vset.pattern.permute.xlu0 0
        %3712 = vperm.xlu0 %3711, %v3676
        %v3713 = vpop.permute.xlu0 %3712
        %3716 = vset.pattern.permute.xlu0 0
        %3717 = vperm.xlu0 %3716, %v3677
        %v3718 = vpop.permute.xlu0 %3717
        %3721 = vset.pattern.permute.xlu0 0
        %3722 = vperm.xlu0 %3721, %v3678
        %v3723 = vpop.permute.xlu0 %3722
        %3726 = vset.pattern.permute.xlu0 0
        %3727 = vperm.xlu0 %3726, %v3679
        %v3728 = vpop.permute.xlu0 %3727
        %v3730 = vmul.f32 %v3688, %v3713
        %v3731 = vmul.f32 %v3688, %v3718
        %v3732 = vmul.f32 %v3688, %v3723
        %v3733 = vmul.f32 %v3688, %v3728
        %v3734 = vmul.f32 %v3692, %v3713
        %v3735 = vmul.f32 %v3692, %v3718
        %v3736 = vmul.f32 %v3692, %v3723
        %v3737 = vmul.f32 %v3692, %v3728
        %v3738 = vmul.f32 %v3696, %v3713
        %v3739 = vmul.f32 %v3696, %v3718
        %v3740 = vmul.f32 %v3696, %v3723
        %v3741 = vmul.f32 %v3696, %v3728
        %v3742 = vmul.f32 %v3700, %v3713
        %v3743 = vmul.f32 %v3700, %v3718
        %v3744 = vmul.f32 %v3700, %v3723
        %v3745 = vmul.f32 %v3700, %v3728
        %v3746 = vmul.f32 %v3704, %v3713
        %v3747 = vmul.f32 %v3704, %v3718
        %v3748 = vmul.f32 %v3704, %v3723
        %v3749 = vmul.f32 %v3704, %v3728
        %v3750 = vadd.f32 %v3651, %v3730
        %v3751 = vadd.f32 %v3652, %v3731
        %v3752 = vadd.f32 %v3653, %v3732
        %v3753 = vadd.f32 %v3654, %v3733
        %v3754 = vadd.f32 %v3655, %v3734
        %v3755 = vadd.f32 %v3656, %v3735
        %v3756 = vadd.f32 %v3657, %v3736
        %v3757 = vadd.f32 %v3658, %v3737
        %v3758 = vadd.f32 %v3659, %v3738
        %v3759 = vadd.f32 %v3660, %v3739
        %v3760 = vadd.f32 %v3661, %v3740
        %v3761 = vadd.f32 %v3662, %v3741
        %v3762 = vadd.f32 %v3663, %v3742
        %v3763 = vadd.f32 %v3664, %v3743
        %v3764 = vadd.f32 %v3665, %v3744
        %v3765 = vadd.f32 %v3666, %v3745
        %v3766 = vadd.f32 %v3667, %v3746
        %v3767 = vadd.f32 %v3668, %v3747
        %v3768 = vadd.f32 %v3669, %v3748
        %v3769 = vadd.f32 %v3670, %v3749
        %v3770 = vld [vmem:[%s825] sm:$0x1]
        %v3771 = vld [vmem:[%s825 + $0x1] sm:$0x1]
        %v3772 = vld [vmem:[%s825 + $0x2] sm:$0x1]
        %v3773 = vld [vmem:[%s825 + $0x3] sm:$0x1]
        %v3774 = vld [vmem:[%s825 + $0x4] sm:$0x1]
        %v3775 = vld [vmem:[%s427] sm:$0xff]
        %v3776 = vld [vmem:[%s427 + $0x8] sm:$0xff]
        %v3777 = vld [vmem:[%s427 + $0x10] sm:$0xff]
        %v3778 = vld [vmem:[%s427 + $0x18] sm:$0xff]
        %v3784 = vlaneseq
        %v3785 = vshrl.u32 %v3784, 7
        %v3786 = vsub.s32 0, %v3785
        %v3787 = vrot.slane %v3770, %v3786
        %v3788 = vlaneseq
        %v3789 = vshrl.u32 %v3788, 7
        %v3790 = vsub.s32 0, %v3789
        %v3791 = vrot.slane %v3771, %v3790
        %v3792 = vlaneseq
        %v3793 = vshrl.u32 %v3792, 7
        %v3794 = vsub.s32 0, %v3793
        %v3795 = vrot.slane %v3772, %v3794
        %v3796 = vlaneseq
        %v3797 = vshrl.u32 %v3796, 7
        %v3798 = vsub.s32 0, %v3797
        %v3799 = vrot.slane %v3773, %v3798
        %v3800 = vlaneseq
        %v3801 = vshrl.u32 %v3800, 7
        %v3802 = vsub.s32 0, %v3801
        %v3803 = vrot.slane %v3774, %v3802
        %3810 = vset.pattern.permute.xlu0 0
        %3811 = vperm.xlu0 %3810, %v3775
        %v3812 = vpop.permute.xlu0 %3811
        %3815 = vset.pattern.permute.xlu0 0
        %3816 = vperm.xlu0 %3815, %v3776
        %v3817 = vpop.permute.xlu0 %3816
        %3820 = vset.pattern.permute.xlu0 0
        %3821 = vperm.xlu0 %3820, %v3777
        %v3822 = vpop.permute.xlu0 %3821
        %3825 = vset.pattern.permute.xlu0 0
        %3826 = vperm.xlu0 %3825, %v3778
        %v3827 = vpop.permute.xlu0 %3826
        %v3829 = vmul.f32 %v3787, %v3812
        %v3830 = vmul.f32 %v3787, %v3817
        %v3831 = vmul.f32 %v3787, %v3822
        %v3832 = vmul.f32 %v3787, %v3827
        %v3833 = vmul.f32 %v3791, %v3812
        %v3834 = vmul.f32 %v3791, %v3817
        %v3835 = vmul.f32 %v3791, %v3822
        %v3836 = vmul.f32 %v3791, %v3827
        %v3837 = vmul.f32 %v3795, %v3812
        %v3838 = vmul.f32 %v3795, %v3817
        %v3839 = vmul.f32 %v3795, %v3822
        %v3840 = vmul.f32 %v3795, %v3827
        %v3841 = vmul.f32 %v3799, %v3812
        %v3842 = vmul.f32 %v3799, %v3817
        %v3843 = vmul.f32 %v3799, %v3822
        %v3844 = vmul.f32 %v3799, %v3827
        %v3845 = vmul.f32 %v3803, %v3812
        %v3846 = vmul.f32 %v3803, %v3817
        %v3847 = vmul.f32 %v3803, %v3822
        %v3848 = vmul.f32 %v3803, %v3827
        %3869 = vrot.lane.b32.xlu0 %v3829, 127
        %v3870 = vpop.permute.xlu0 %3869
        %3871 = vrot.lane.b32.xlu0 %v3830, 127
        %v3872 = vpop.permute.xlu0 %3871
        %3873 = vrot.lane.b32.xlu0 %v3831, 127
        %v3874 = vpop.permute.xlu0 %3873
        %3875 = vrot.lane.b32.xlu0 %v3832, 127
        %v3876 = vpop.permute.xlu0 %3875
        %3877 = vrot.lane.b32.xlu0 %v3833, 127
        %v3878 = vpop.permute.xlu0 %3877
        %3879 = vrot.lane.b32.xlu0 %v3834, 127
        %v3880 = vpop.permute.xlu0 %3879
        %3881 = vrot.lane.b32.xlu0 %v3835, 127
        %v3882 = vpop.permute.xlu0 %3881
        %3883 = vrot.lane.b32.xlu0 %v3836, 127
        %v3884 = vpop.permute.xlu0 %3883
        %3885 = vrot.lane.b32.xlu0 %v3837, 127
        %v3886 = vpop.permute.xlu0 %3885
        %3887 = vrot.lane.b32.xlu0 %v3838, 127
        %v3888 = vpop.permute.xlu0 %3887
        %3889 = vrot.lane.b32.xlu0 %v3839, 127
        %v3890 = vpop.permute.xlu0 %3889
        %3891 = vrot.lane.b32.xlu0 %v3840, 127
        %v3892 = vpop.permute.xlu0 %3891
        %3893 = vrot.lane.b32.xlu0 %v3841, 127
        %v3894 = vpop.permute.xlu0 %3893
        %3895 = vrot.lane.b32.xlu0 %v3842, 127
        %v3896 = vpop.permute.xlu0 %3895
        %3897 = vrot.lane.b32.xlu0 %v3843, 127
        %v3898 = vpop.permute.xlu0 %3897
        %3899 = vrot.lane.b32.xlu0 %v3844, 127
        %v3900 = vpop.permute.xlu0 %3899
        %3901 = vrot.lane.b32.xlu0 %v3845, 127
        %v3902 = vpop.permute.xlu0 %3901
        %3903 = vrot.lane.b32.xlu0 %v3846, 127
        %v3904 = vpop.permute.xlu0 %3903
        %3905 = vrot.lane.b32.xlu0 %v3847, 127
        %v3906 = vpop.permute.xlu0 %3905
        %3907 = vrot.lane.b32.xlu0 %v3848, 127
        %v3908 = vpop.permute.xlu0 %3907
        %v3929 = vadd.f32 %v3750, %v3870
        %v3930 = vadd.f32 %v3751, %v3872
        %v3931 = vadd.f32 %v3752, %v3874
        %v3932 = vadd.f32 %v3753, %v3876
        %v3933 = vadd.f32 %v3754, %v3878
        %v3934 = vadd.f32 %v3755, %v3880
        %v3935 = vadd.f32 %v3756, %v3882
        %v3936 = vadd.f32 %v3757, %v3884
        %v3937 = vadd.f32 %v3758, %v3886
        %v3938 = vadd.f32 %v3759, %v3888
        %v3939 = vadd.f32 %v3760, %v3890
        %v3940 = vadd.f32 %v3761, %v3892
        %v3941 = vadd.f32 %v3762, %v3894
        %v3942 = vadd.f32 %v3763, %v3896
        %v3943 = vadd.f32 %v3764, %v3898
        %v3944 = vadd.f32 %v3765, %v3900
        %v3945 = vadd.f32 %v3766, %v3902
        %v3946 = vadd.f32 %v3767, %v3904
        %v3947 = vadd.f32 %v3768, %v3906
        %v3948 = vadd.f32 %v3769, %v3908
        %v3949 = vld [vmem:[%s3018] sm:$0x1]
        %v3950 = vld [vmem:[%s3018 + $0x1] sm:$0x1]
        %v3951 = vld [vmem:[%s3018 + $0x2] sm:$0x1]
        %v3952 = vld [vmem:[%s3018 + $0x3] sm:$0x1]
        %v3953 = vld [vmem:[%s3018 + $0x4] sm:$0x1]
        %v3954 = vld [vmem:[%s528] sm:$0xff]
        %v3955 = vld [vmem:[%s528 + $0x8] sm:$0xff]
        %v3956 = vld [vmem:[%s528 + $0x10] sm:$0xff]
        %v3957 = vld [vmem:[%s528 + $0x18] sm:$0xff]
        %v3963 = vlaneseq
        %v3964 = vshrl.u32 %v3963, 7
        %v3965 = vsub.s32 0, %v3964
        %v3966 = vrot.slane %v3949, %v3965
        %v3967 = vlaneseq
        %v3968 = vshrl.u32 %v3967, 7
        %v3969 = vsub.s32 0, %v3968
        %v3970 = vrot.slane %v3950, %v3969
        %v3971 = vlaneseq
        %v3972 = vshrl.u32 %v3971, 7
        %v3973 = vsub.s32 0, %v3972
        %v3974 = vrot.slane %v3951, %v3973
        %v3975 = vlaneseq
        %v3976 = vshrl.u32 %v3975, 7
        %v3977 = vsub.s32 0, %v3976
        %v3978 = vrot.slane %v3952, %v3977
        %v3979 = vlaneseq
        %v3980 = vshrl.u32 %v3979, 7
        %v3981 = vsub.s32 0, %v3980
        %v3982 = vrot.slane %v3953, %v3981
        %3989 = vset.pattern.permute.xlu0 0
        %3990 = vperm.xlu0 %3989, %v3954
        %v3991 = vpop.permute.xlu0 %3990
        %3994 = vset.pattern.permute.xlu0 0
        %3995 = vperm.xlu0 %3994, %v3955
        %v3996 = vpop.permute.xlu0 %3995
        %3999 = vset.pattern.permute.xlu0 0
        %4000 = vperm.xlu0 %3999, %v3956
        %v4001 = vpop.permute.xlu0 %4000
        %4004 = vset.pattern.permute.xlu0 0
        %4005 = vperm.xlu0 %4004, %v3957
        %v4006 = vpop.permute.xlu0 %4005
        %v4008 = vmul.f32 %v3966, %v3991
        %v4009 = vmul.f32 %v3966, %v3996
        %v4010 = vmul.f32 %v3966, %v4001
        %v4011 = vmul.f32 %v3966, %v4006
        %v4012 = vmul.f32 %v3970, %v3991
        %v4013 = vmul.f32 %v3970, %v3996
        %v4014 = vmul.f32 %v3970, %v4001
        %v4015 = vmul.f32 %v3970, %v4006
        %v4016 = vmul.f32 %v3974, %v3991
        %v4017 = vmul.f32 %v3974, %v3996
        %v4018 = vmul.f32 %v3974, %v4001
        %v4019 = vmul.f32 %v3974, %v4006
        %v4020 = vmul.f32 %v3978, %v3991
        %v4021 = vmul.f32 %v3978, %v3996
        %v4022 = vmul.f32 %v3978, %v4001
        %v4023 = vmul.f32 %v3978, %v4006
        %v4024 = vmul.f32 %v3982, %v3991
        %v4025 = vmul.f32 %v3982, %v3996
        %v4026 = vmul.f32 %v3982, %v4001
        %v4027 = vmul.f32 %v3982, %v4006
        %v4028 = vadd.f32 %v3929, %v4008
        %v4029 = vadd.f32 %v3930, %v4009
        %v4030 = vadd.f32 %v3931, %v4010
        %v4031 = vadd.f32 %v3932, %v4011
        %v4032 = vadd.f32 %v3933, %v4012
        %v4033 = vadd.f32 %v3934, %v4013
        %v4034 = vadd.f32 %v3935, %v4014
        %v4035 = vadd.f32 %v3936, %v4015
        %v4036 = vadd.f32 %v3937, %v4016
        %v4037 = vadd.f32 %v3938, %v4017
        %v4038 = vadd.f32 %v3939, %v4018
        %v4039 = vadd.f32 %v3940, %v4019
        %v4040 = vadd.f32 %v3941, %v4020
        %v4041 = vadd.f32 %v3942, %v4021
        %v4042 = vadd.f32 %v3943, %v4022
        %v4043 = vadd.f32 %v3944, %v4023
        %v4044 = vadd.f32 %v3945, %v4024
        %v4045 = vadd.f32 %v3946, %v4025
        %v4046 = vadd.f32 %v3947, %v4026
        %v4047 = vadd.f32 %v3948, %v4027
        %s4048 = scalar_lea.vmem %s219, 90
        %v4049 = vld [vmem:[%s4048] sm:$0x1]
        %v4050 = vld [vmem:[%s4048 + $0x1] sm:$0x1]
        %v4051 = vld [vmem:[%s4048 + $0x2] sm:$0x1]
        %v4052 = vld [vmem:[%s4048 + $0x3] sm:$0x1]
        %v4053 = vld [vmem:[%s4048 + $0x4] sm:$0x1]
        %v4054 = vld [vmem:[%s629] sm:$0xff]
        %v4055 = vld [vmem:[%s629 + $0x8] sm:$0xff]
        %v4056 = vld [vmem:[%s629 + $0x10] sm:$0xff]
        %v4057 = vld [vmem:[%s629 + $0x18] sm:$0xff]
        %v4063 = vlaneseq
        %v4064 = vshrl.u32 %v4063, 7
        %v4065 = vsub.s32 0, %v4064
        %v4066 = vrot.slane %v4049, %v4065
        %v4067 = vlaneseq
        %v4068 = vshrl.u32 %v4067, 7
        %v4069 = vsub.s32 0, %v4068
        %v4070 = vrot.slane %v4050, %v4069
        %v4071 = vlaneseq
        %v4072 = vshrl.u32 %v4071, 7
        %v4073 = vsub.s32 0, %v4072
        %v4074 = vrot.slane %v4051, %v4073
        %v4075 = vlaneseq
        %v4076 = vshrl.u32 %v4075, 7
        %v4077 = vsub.s32 0, %v4076
        %v4078 = vrot.slane %v4052, %v4077
        %v4079 = vlaneseq
        %v4080 = vshrl.u32 %v4079, 7
        %v4081 = vsub.s32 0, %v4080
        %v4082 = vrot.slane %v4053, %v4081
        %4089 = vset.pattern.permute.xlu0 0
        %4090 = vperm.xlu0 %4089, %v4054
        %v4091 = vpop.permute.xlu0 %4090
        %4094 = vset.pattern.permute.xlu0 0
        %4095 = vperm.xlu0 %4094, %v4055
        %v4096 = vpop.permute.xlu0 %4095
        %4099 = vset.pattern.permute.xlu0 0
        %4100 = vperm.xlu0 %4099, %v4056
        %v4101 = vpop.permute.xlu0 %4100
        %4104 = vset.pattern.permute.xlu0 0
        %4105 = vperm.xlu0 %4104, %v4057
        %v4106 = vpop.permute.xlu0 %4105
        %v4108 = vmul.f32 %v4066, %v4091
        %v4109 = vmul.f32 %v4066, %v4096
        %v4110 = vmul.f32 %v4066, %v4101
        %v4111 = vmul.f32 %v4066, %v4106
        %v4112 = vmul.f32 %v4070, %v4091
        %v4113 = vmul.f32 %v4070, %v4096
        %v4114 = vmul.f32 %v4070, %v4101
        %v4115 = vmul.f32 %v4070, %v4106
        %v4116 = vmul.f32 %v4074, %v4091
        %v4117 = vmul.f32 %v4074, %v4096
        %v4118 = vmul.f32 %v4074, %v4101
        %v4119 = vmul.f32 %v4074, %v4106
        %v4120 = vmul.f32 %v4078, %v4091
        %v4121 = vmul.f32 %v4078, %v4096
        %v4122 = vmul.f32 %v4078, %v4101
        %v4123 = vmul.f32 %v4078, %v4106
        %v4124 = vmul.f32 %v4082, %v4091
        %v4125 = vmul.f32 %v4082, %v4096
        %v4126 = vmul.f32 %v4082, %v4101
        %v4127 = vmul.f32 %v4082, %v4106
        %v4128 = vadd.f32 %v4028, %v4108
        %v4129 = vadd.f32 %v4029, %v4109
        %v4130 = vadd.f32 %v4030, %v4110
        %v4131 = vadd.f32 %v4031, %v4111
        %v4132 = vadd.f32 %v4032, %v4112
        %v4133 = vadd.f32 %v4033, %v4113
        %v4134 = vadd.f32 %v4034, %v4114
        %v4135 = vadd.f32 %v4035, %v4115
        %v4136 = vadd.f32 %v4036, %v4116
        %v4137 = vadd.f32 %v4037, %v4117
        %v4138 = vadd.f32 %v4038, %v4118
        %v4139 = vadd.f32 %v4039, %v4119
        %v4140 = vadd.f32 %v4040, %v4120
        %v4141 = vadd.f32 %v4041, %v4121
        %v4142 = vadd.f32 %v4042, %v4122
        %v4143 = vadd.f32 %v4043, %v4123
        %v4144 = vadd.f32 %v4044, %v4124
        %v4145 = vadd.f32 %v4045, %v4125
        %v4146 = vadd.f32 %v4046, %v4126
        %v4147 = vadd.f32 %v4047, %v4127
        %v4148 = vld [vmem:[%s2818] sm:$0x1]
        %v4149 = vld [vmem:[%s2818 + $0x1] sm:$0x1]
        %v4150 = vld [vmem:[%s2818 + $0x2] sm:$0x1]
        %v4151 = vld [vmem:[%s2818 + $0x3] sm:$0x1]
        %v4152 = vld [vmem:[%s2818 + $0x4] sm:$0x1]
        %v4153 = vld [vmem:[%s730] sm:$0xff]
        %v4154 = vld [vmem:[%s730 + $0x8] sm:$0xff]
        %v4155 = vld [vmem:[%s730 + $0x10] sm:$0xff]
        %v4156 = vld [vmem:[%s730 + $0x18] sm:$0xff]
        %v4162 = vlaneseq
        %v4163 = vshrl.u32 %v4162, 7
        %v4164 = vsub.s32 0, %v4163
        %v4165 = vrot.slane %v4148, %v4164
        %v4166 = vlaneseq
        %v4167 = vshrl.u32 %v4166, 7
        %v4168 = vsub.s32 0, %v4167
        %v4169 = vrot.slane %v4149, %v4168
        %v4170 = vlaneseq
        %v4171 = vshrl.u32 %v4170, 7
        %v4172 = vsub.s32 0, %v4171
        %v4173 = vrot.slane %v4150, %v4172
        %v4174 = vlaneseq
        %v4175 = vshrl.u32 %v4174, 7
        %v4176 = vsub.s32 0, %v4175
        %v4177 = vrot.slane %v4151, %v4176
        %v4178 = vlaneseq
        %v4179 = vshrl.u32 %v4178, 7
        %v4180 = vsub.s32 0, %v4179
        %v4181 = vrot.slane %v4152, %v4180
        %4188 = vset.pattern.permute.xlu0 0
        %4189 = vperm.xlu0 %4188, %v4153
        %v4190 = vpop.permute.xlu0 %4189
        %4193 = vset.pattern.permute.xlu0 0
        %4194 = vperm.xlu0 %4193, %v4154
        %v4195 = vpop.permute.xlu0 %4194
        %4198 = vset.pattern.permute.xlu0 0
        %4199 = vperm.xlu0 %4198, %v4155
        %v4200 = vpop.permute.xlu0 %4199
        %4203 = vset.pattern.permute.xlu0 0
        %4204 = vperm.xlu0 %4203, %v4156
        %v4205 = vpop.permute.xlu0 %4204
        %v4207 = vmul.f32 %v4165, %v4190
        %v4208 = vmul.f32 %v4165, %v4195
        %v4209 = vmul.f32 %v4165, %v4200
        %v4210 = vmul.f32 %v4165, %v4205
        %v4211 = vmul.f32 %v4169, %v4190
        %v4212 = vmul.f32 %v4169, %v4195
        %v4213 = vmul.f32 %v4169, %v4200
        %v4214 = vmul.f32 %v4169, %v4205
        %v4215 = vmul.f32 %v4173, %v4190
        %v4216 = vmul.f32 %v4173, %v4195
        %v4217 = vmul.f32 %v4173, %v4200
        %v4218 = vmul.f32 %v4173, %v4205
        %v4219 = vmul.f32 %v4177, %v4190
        %v4220 = vmul.f32 %v4177, %v4195
        %v4221 = vmul.f32 %v4177, %v4200
        %v4222 = vmul.f32 %v4177, %v4205
        %v4223 = vmul.f32 %v4181, %v4190
        %v4224 = vmul.f32 %v4181, %v4195
        %v4225 = vmul.f32 %v4181, %v4200
        %v4226 = vmul.f32 %v4181, %v4205
        %4247 = vrot.lane.b32.xlu0 %v4207, 127
        %v4248 = vpop.permute.xlu0 %4247
        %4249 = vrot.lane.b32.xlu0 %v4208, 127
        %v4250 = vpop.permute.xlu0 %4249
        %4251 = vrot.lane.b32.xlu0 %v4209, 127
        %v4252 = vpop.permute.xlu0 %4251
        %4253 = vrot.lane.b32.xlu0 %v4210, 127
        %v4254 = vpop.permute.xlu0 %4253
        %4255 = vrot.lane.b32.xlu0 %v4211, 127
        %v4256 = vpop.permute.xlu0 %4255
        %4257 = vrot.lane.b32.xlu0 %v4212, 127
        %v4258 = vpop.permute.xlu0 %4257
        %4259 = vrot.lane.b32.xlu0 %v4213, 127
        %v4260 = vpop.permute.xlu0 %4259
        %4261 = vrot.lane.b32.xlu0 %v4214, 127
        %v4262 = vpop.permute.xlu0 %4261
        %4263 = vrot.lane.b32.xlu0 %v4215, 127
        %v4264 = vpop.permute.xlu0 %4263
        %4265 = vrot.lane.b32.xlu0 %v4216, 127
        %v4266 = vpop.permute.xlu0 %4265
        %4267 = vrot.lane.b32.xlu0 %v4217, 127
        %v4268 = vpop.permute.xlu0 %4267
        %4269 = vrot.lane.b32.xlu0 %v4218, 127
        %v4270 = vpop.permute.xlu0 %4269
        %4271 = vrot.lane.b32.xlu0 %v4219, 127
        %v4272 = vpop.permute.xlu0 %4271
        %4273 = vrot.lane.b32.xlu0 %v4220, 127
        %v4274 = vpop.permute.xlu0 %4273
        %4275 = vrot.lane.b32.xlu0 %v4221, 127
        %v4276 = vpop.permute.xlu0 %4275
        %4277 = vrot.lane.b32.xlu0 %v4222, 127
        %v4278 = vpop.permute.xlu0 %4277
        %4279 = vrot.lane.b32.xlu0 %v4223, 127
        %v4280 = vpop.permute.xlu0 %4279
        %4281 = vrot.lane.b32.xlu0 %v4224, 127
        %v4282 = vpop.permute.xlu0 %4281
        %4283 = vrot.lane.b32.xlu0 %v4225, 127
        %v4284 = vpop.permute.xlu0 %4283
        %4285 = vrot.lane.b32.xlu0 %v4226, 127
        %v4286 = vpop.permute.xlu0 %4285
        %v4307 = vadd.f32 %v4128, %v4248
        %v4308 = vadd.f32 %v4129, %v4250
        %v4309 = vadd.f32 %v4130, %v4252
        %v4310 = vadd.f32 %v4131, %v4254
        %v4311 = vadd.f32 %v4132, %v4256
        %v4312 = vadd.f32 %v4133, %v4258
        %v4313 = vadd.f32 %v4134, %v4260
        %v4314 = vadd.f32 %v4135, %v4262
        %v4315 = vadd.f32 %v4136, %v4264
        %v4316 = vadd.f32 %v4137, %v4266
        %v4317 = vadd.f32 %v4138, %v4268
        %v4318 = vadd.f32 %v4139, %v4270
        %v4319 = vadd.f32 %v4140, %v4272
        %v4320 = vadd.f32 %v4141, %v4274
        %v4321 = vadd.f32 %v4142, %v4276
        %v4322 = vadd.f32 %v4143, %v4278
        %v4323 = vadd.f32 %v4144, %v4280
        %v4324 = vadd.f32 %v4145, %v4282
        %v4325 = vadd.f32 %v4146, %v4284
        %v4326 = vadd.f32 %v4147, %v4286
        %v4327 = vld [vmem:[%s3318] sm:$0x1]
        %v4328 = vld [vmem:[%s3318 + $0x1] sm:$0x1]
        %v4329 = vld [vmem:[%s3318 + $0x2] sm:$0x1]
        %v4330 = vld [vmem:[%s3318 + $0x3] sm:$0x1]
        %v4331 = vld [vmem:[%s3318 + $0x4] sm:$0x1]
        %v4332 = vld [vmem:[%s831] sm:$0xff]
        %v4333 = vld [vmem:[%s831 + $0x8] sm:$0xff]
        %v4334 = vld [vmem:[%s831 + $0x10] sm:$0xff]
        %v4335 = vld [vmem:[%s831 + $0x18] sm:$0xff]
        %v4341 = vlaneseq
        %v4342 = vshrl.u32 %v4341, 7
        %v4343 = vsub.s32 0, %v4342
        %v4344 = vrot.slane %v4327, %v4343
        %v4345 = vlaneseq
        %v4346 = vshrl.u32 %v4345, 7
        %v4347 = vsub.s32 0, %v4346
        %v4348 = vrot.slane %v4328, %v4347
        %v4349 = vlaneseq
        %v4350 = vshrl.u32 %v4349, 7
        %v4351 = vsub.s32 0, %v4350
        %v4352 = vrot.slane %v4329, %v4351
        %v4353 = vlaneseq
        %v4354 = vshrl.u32 %v4353, 7
        %v4355 = vsub.s32 0, %v4354
        %v4356 = vrot.slane %v4330, %v4355
        %v4357 = vlaneseq
        %v4358 = vshrl.u32 %v4357, 7
        %v4359 = vsub.s32 0, %v4358
        %v4360 = vrot.slane %v4331, %v4359
        %4367 = vset.pattern.permute.xlu0 0
        %4368 = vperm.xlu0 %4367, %v4332
        %v4369 = vpop.permute.xlu0 %4368
        %4372 = vset.pattern.permute.xlu0 0
        %4373 = vperm.xlu0 %4372, %v4333
        %v4374 = vpop.permute.xlu0 %4373
        %4377 = vset.pattern.permute.xlu0 0
        %4378 = vperm.xlu0 %4377, %v4334
        %v4379 = vpop.permute.xlu0 %4378
        %4382 = vset.pattern.permute.xlu0 0
        %4383 = vperm.xlu0 %4382, %v4335
        %v4384 = vpop.permute.xlu0 %4383
        %v4386 = vmul.f32 %v4344, %v4369
        %v4387 = vmul.f32 %v4344, %v4374
        %v4388 = vmul.f32 %v4344, %v4379
        %v4389 = vmul.f32 %v4344, %v4384
        %v4390 = vmul.f32 %v4348, %v4369
        %v4391 = vmul.f32 %v4348, %v4374
        %v4392 = vmul.f32 %v4348, %v4379
        %v4393 = vmul.f32 %v4348, %v4384
        %v4394 = vmul.f32 %v4352, %v4369
        %v4395 = vmul.f32 %v4352, %v4374
        %v4396 = vmul.f32 %v4352, %v4379
        %v4397 = vmul.f32 %v4352, %v4384
        %v4398 = vmul.f32 %v4356, %v4369
        %v4399 = vmul.f32 %v4356, %v4374
        %v4400 = vmul.f32 %v4356, %v4379
        %v4401 = vmul.f32 %v4356, %v4384
        %v4402 = vmul.f32 %v4360, %v4369
        %v4403 = vmul.f32 %v4360, %v4374
        %v4404 = vmul.f32 %v4360, %v4379
        %v4405 = vmul.f32 %v4360, %v4384
        %v4406 = vadd.f32 %v4307, %v4386
        %v4407 = vadd.f32 %v4308, %v4387
        %v4408 = vadd.f32 %v4309, %v4388
        %v4409 = vadd.f32 %v4310, %v4389
        %v4410 = vadd.f32 %v4311, %v4390
        %v4411 = vadd.f32 %v4312, %v4391
        %v4412 = vadd.f32 %v4313, %v4392
        %v4413 = vadd.f32 %v4314, %v4393
        %v4414 = vadd.f32 %v4315, %v4394
        %v4415 = vadd.f32 %v4316, %v4395
        %v4416 = vadd.f32 %v4317, %v4396
        %v4417 = vadd.f32 %v4318, %v4397
        %v4418 = vadd.f32 %v4319, %v4398
        %v4419 = vadd.f32 %v4320, %v4399
        %v4420 = vadd.f32 %v4321, %v4400
        %v4421 = vadd.f32 %v4322, %v4401
        %v4422 = vadd.f32 %v4323, %v4402
        %v4423 = vadd.f32 %v4324, %v4403
        %v4424 = vadd.f32 %v4325, %v4404
        %v4425 = vadd.f32 %v4326, %v4405
        %s4426 = scalar_lea.vmem %s219, 19
        %v4427 = vld [vmem:[%s4426] sm:$0x1]
        %v4428 = vld [vmem:[%s4426 + $0x1] sm:$0x1]
        %v4429 = vld [vmem:[%s4426 + $0x2] sm:$0x1]
        %v4430 = vld [vmem:[%s4426 + $0x3] sm:$0x1]
        %v4431 = vld [vmem:[%s4426 + $0x4] sm:$0x1]
        %v4432 = vld [vmem:[%s932] sm:$0xff]
        %v4433 = vld [vmem:[%s932 + $0x8] sm:$0xff]
        %v4434 = vld [vmem:[%s932 + $0x10] sm:$0xff]
        %v4435 = vld [vmem:[%s932 + $0x18] sm:$0xff]
        %v4441 = vlaneseq
        %v4442 = vshrl.u32 %v4441, 7
        %v4443 = vsub.s32 0, %v4442
        %v4444 = vrot.slane %v4427, %v4443
        %v4445 = vlaneseq
        %v4446 = vshrl.u32 %v4445, 7
        %v4447 = vsub.s32 0, %v4446
        %v4448 = vrot.slane %v4428, %v4447
        %v4449 = vlaneseq
        %v4450 = vshrl.u32 %v4449, 7
        %v4451 = vsub.s32 0, %v4450
        %v4452 = vrot.slane %v4429, %v4451
        %v4453 = vlaneseq
        %v4454 = vshrl.u32 %v4453, 7
        %v4455 = vsub.s32 0, %v4454
        %v4456 = vrot.slane %v4430, %v4455
        %v4457 = vlaneseq
        %v4458 = vshrl.u32 %v4457, 7
        %v4459 = vsub.s32 0, %v4458
        %v4460 = vrot.slane %v4431, %v4459
        %4467 = vset.pattern.permute.xlu0 0
        %4468 = vperm.xlu0 %4467, %v4432
        %v4469 = vpop.permute.xlu0 %4468
        %4472 = vset.pattern.permute.xlu0 0
        %4473 = vperm.xlu0 %4472, %v4433
        %v4474 = vpop.permute.xlu0 %4473
        %4477 = vset.pattern.permute.xlu0 0
        %4478 = vperm.xlu0 %4477, %v4434
        %v4479 = vpop.permute.xlu0 %4478
        %4482 = vset.pattern.permute.xlu0 0
        %4483 = vperm.xlu0 %4482, %v4435
        %v4484 = vpop.permute.xlu0 %4483
        %v4486 = vmul.f32 %v4444, %v4469
        %v4487 = vmul.f32 %v4444, %v4474
        %v4488 = vmul.f32 %v4444, %v4479
        %v4489 = vmul.f32 %v4444, %v4484
        %v4490 = vmul.f32 %v4448, %v4469
        %v4491 = vmul.f32 %v4448, %v4474
        %v4492 = vmul.f32 %v4448, %v4479
        %v4493 = vmul.f32 %v4448, %v4484
        %v4494 = vmul.f32 %v4452, %v4469
        %v4495 = vmul.f32 %v4452, %v4474
        %v4496 = vmul.f32 %v4452, %v4479
        %v4497 = vmul.f32 %v4452, %v4484
        %v4498 = vmul.f32 %v4456, %v4469
        %v4499 = vmul.f32 %v4456, %v4474
        %v4500 = vmul.f32 %v4456, %v4479
        %v4501 = vmul.f32 %v4456, %v4484
        %v4502 = vmul.f32 %v4460, %v4469
        %v4503 = vmul.f32 %v4460, %v4474
        %v4504 = vmul.f32 %v4460, %v4479
        %v4505 = vmul.f32 %v4460, %v4484
        %v4506 = vadd.f32 %v4406, %v4486
        %v4507 = vadd.f32 %v4407, %v4487
        %v4508 = vadd.f32 %v4408, %v4488
        %v4509 = vadd.f32 %v4409, %v4489
        %v4510 = vadd.f32 %v4410, %v4490
        %v4511 = vadd.f32 %v4411, %v4491
        %v4512 = vadd.f32 %v4412, %v4492
        %v4513 = vadd.f32 %v4413, %v4493
        %v4514 = vadd.f32 %v4414, %v4494
        %v4515 = vadd.f32 %v4415, %v4495
        %v4516 = vadd.f32 %v4416, %v4496
        %v4517 = vadd.f32 %v4417, %v4497
        %v4518 = vadd.f32 %v4418, %v4498
        %v4519 = vadd.f32 %v4419, %v4499
        %v4520 = vadd.f32 %v4420, %v4500
        %v4521 = vadd.f32 %v4421, %v4501
        %v4522 = vadd.f32 %v4422, %v4502
        %v4523 = vadd.f32 %v4423, %v4503
        %v4524 = vadd.f32 %v4424, %v4504
        %v4525 = vadd.f32 %v4425, %v4505
        %v4526 = vld [vmem:[%s3118] sm:$0x1]
        %v4527 = vld [vmem:[%s3118 + $0x1] sm:$0x1]
        %v4528 = vld [vmem:[%s3118 + $0x2] sm:$0x1]
        %v4529 = vld [vmem:[%s3118 + $0x3] sm:$0x1]
        %v4530 = vld [vmem:[%s3118 + $0x4] sm:$0x1]
        %v4531 = vld [vmem:[%s1033] sm:$0xff]
        %v4532 = vld [vmem:[%s1033 + $0x8] sm:$0xff]
        %v4533 = vld [vmem:[%s1033 + $0x10] sm:$0xff]
        %v4534 = vld [vmem:[%s1033 + $0x18] sm:$0xff]
        %v4540 = vlaneseq
        %v4541 = vshrl.u32 %v4540, 7
        %v4542 = vsub.s32 0, %v4541
        %v4543 = vrot.slane %v4526, %v4542
        %v4544 = vlaneseq
        %v4545 = vshrl.u32 %v4544, 7
        %v4546 = vsub.s32 0, %v4545
        %v4547 = vrot.slane %v4527, %v4546
        %v4548 = vlaneseq
        %v4549 = vshrl.u32 %v4548, 7
        %v4550 = vsub.s32 0, %v4549
        %v4551 = vrot.slane %v4528, %v4550
        %v4552 = vlaneseq
        %v4553 = vshrl.u32 %v4552, 7
        %v4554 = vsub.s32 0, %v4553
        %v4555 = vrot.slane %v4529, %v4554
        %v4556 = vlaneseq
        %v4557 = vshrl.u32 %v4556, 7
        %v4558 = vsub.s32 0, %v4557
        %v4559 = vrot.slane %v4530, %v4558
        %4566 = vset.pattern.permute.xlu0 0
        %4567 = vperm.xlu0 %4566, %v4531
        %v4568 = vpop.permute.xlu0 %4567
        %4571 = vset.pattern.permute.xlu0 0
        %4572 = vperm.xlu0 %4571, %v4532
        %v4573 = vpop.permute.xlu0 %4572
        %4576 = vset.pattern.permute.xlu0 0
        %4577 = vperm.xlu0 %4576, %v4533
        %v4578 = vpop.permute.xlu0 %4577
        %4581 = vset.pattern.permute.xlu0 0
        %4582 = vperm.xlu0 %4581, %v4534
        %v4583 = vpop.permute.xlu0 %4582
        %v4585 = vmul.f32 %v4543, %v4568
        %v4586 = vmul.f32 %v4543, %v4573
        %v4587 = vmul.f32 %v4543, %v4578
        %v4588 = vmul.f32 %v4543, %v4583
        %v4589 = vmul.f32 %v4547, %v4568
        %v4590 = vmul.f32 %v4547, %v4573
        %v4591 = vmul.f32 %v4547, %v4578
        %v4592 = vmul.f32 %v4547, %v4583
        %v4593 = vmul.f32 %v4551, %v4568
        %v4594 = vmul.f32 %v4551, %v4573
        %v4595 = vmul.f32 %v4551, %v4578
        %v4596 = vmul.f32 %v4551, %v4583
        %v4597 = vmul.f32 %v4555, %v4568
        %v4598 = vmul.f32 %v4555, %v4573
        %v4599 = vmul.f32 %v4555, %v4578
        %v4600 = vmul.f32 %v4555, %v4583
        %v4601 = vmul.f32 %v4559, %v4568
        %v4602 = vmul.f32 %v4559, %v4573
        %v4603 = vmul.f32 %v4559, %v4578
        %v4604 = vmul.f32 %v4559, %v4583
        %4625 = vrot.lane.b32.xlu0 %v4585, 127
        %v4626 = vpop.permute.xlu0 %4625
        %4627 = vrot.lane.b32.xlu0 %v4586, 127
        %v4628 = vpop.permute.xlu0 %4627
        %4629 = vrot.lane.b32.xlu0 %v4587, 127
        %v4630 = vpop.permute.xlu0 %4629
        %4631 = vrot.lane.b32.xlu0 %v4588, 127
        %v4632 = vpop.permute.xlu0 %4631
        %4633 = vrot.lane.b32.xlu0 %v4589, 127
        %v4634 = vpop.permute.xlu0 %4633
        %4635 = vrot.lane.b32.xlu0 %v4590, 127
        %v4636 = vpop.permute.xlu0 %4635
        %4637 = vrot.lane.b32.xlu0 %v4591, 127
        %v4638 = vpop.permute.xlu0 %4637
        %4639 = vrot.lane.b32.xlu0 %v4592, 127
        %v4640 = vpop.permute.xlu0 %4639
        %4641 = vrot.lane.b32.xlu0 %v4593, 127
        %v4642 = vpop.permute.xlu0 %4641
        %4643 = vrot.lane.b32.xlu0 %v4594, 127
        %v4644 = vpop.permute.xlu0 %4643
        %4645 = vrot.lane.b32.xlu0 %v4595, 127
        %v4646 = vpop.permute.xlu0 %4645
        %4647 = vrot.lane.b32.xlu0 %v4596, 127
        %v4648 = vpop.permute.xlu0 %4647
        %4649 = vrot.lane.b32.xlu0 %v4597, 127
        %v4650 = vpop.permute.xlu0 %4649
        %4651 = vrot.lane.b32.xlu0 %v4598, 127
        %v4652 = vpop.permute.xlu0 %4651
        %4653 = vrot.lane.b32.xlu0 %v4599, 127
        %v4654 = vpop.permute.xlu0 %4653
        %4655 = vrot.lane.b32.xlu0 %v4600, 127
        %v4656 = vpop.permute.xlu0 %4655
        %4657 = vrot.lane.b32.xlu0 %v4601, 127
        %v4658 = vpop.permute.xlu0 %4657
        %4659 = vrot.lane.b32.xlu0 %v4602, 127
        %v4660 = vpop.permute.xlu0 %4659
        %4661 = vrot.lane.b32.xlu0 %v4603, 127
        %v4662 = vpop.permute.xlu0 %4661
        %4663 = vrot.lane.b32.xlu0 %v4604, 127
        %v4664 = vpop.permute.xlu0 %4663
        %v4685 = vadd.f32 %v4506, %v4626
        %v4686 = vadd.f32 %v4507, %v4628
        %v4687 = vadd.f32 %v4508, %v4630
        %v4688 = vadd.f32 %v4509, %v4632
        %v4689 = vadd.f32 %v4510, %v4634
        %v4690 = vadd.f32 %v4511, %v4636
        %v4691 = vadd.f32 %v4512, %v4638
        %v4692 = vadd.f32 %v4513, %v4640
        %v4693 = vadd.f32 %v4514, %v4642
        %v4694 = vadd.f32 %v4515, %v4644
        %v4695 = vadd.f32 %v4516, %v4646
        %v4696 = vadd.f32 %v4517, %v4648
        %v4697 = vadd.f32 %v4518, %v4650
        %v4698 = vadd.f32 %v4519, %v4652
        %v4699 = vadd.f32 %v4520, %v4654
        %v4700 = vadd.f32 %v4521, %v4656
        %v4701 = vadd.f32 %v4522, %v4658
        %v4702 = vadd.f32 %v4523, %v4660
        %v4703 = vadd.f32 %v4524, %v4662
        %v4704 = vadd.f32 %v4525, %v4664
        %v4705 = vld [vmem:[%s2] sm:$0xff]
        %v4706 = vld [vmem:[%s2 + $0x8] sm:$0xff]
        %v4707 = vld [vmem:[%s2 + $0x10] sm:$0xff]
        %v4708 = vld [vmem:[%s2 + $0x18] sm:$0xff]
        %4710 = vset.pattern.permute.xlu0 0
        %4711 = vperm.xlu0 %4710, %v4705
        %v4712 = vpop.permute.xlu0 %4711
        %4715 = vset.pattern.permute.xlu0 0
        %4716 = vperm.xlu0 %4715, %v4706
        %v4717 = vpop.permute.xlu0 %4716
        %4720 = vset.pattern.permute.xlu0 0
        %4721 = vperm.xlu0 %4720, %v4707
        %v4722 = vpop.permute.xlu0 %4721
        %4725 = vset.pattern.permute.xlu0 0
        %4726 = vperm.xlu0 %4725, %v4708
        %v4727 = vpop.permute.xlu0 %4726
        %v4729 = vadd.f32 %v4685, %v4712
        %v4730 = vadd.f32 %v4686, %v4717
        %v4731 = vadd.f32 %v4687, %v4722
        %v4732 = vadd.f32 %v4688, %v4727
        %v4733 = vadd.f32 %v4689, %v4712
        %v4734 = vadd.f32 %v4690, %v4717
        %v4735 = vadd.f32 %v4691, %v4722
        %v4736 = vadd.f32 %v4692, %v4727
        %v4737 = vadd.f32 %v4693, %v4712
        %v4738 = vadd.f32 %v4694, %v4717
        %v4739 = vadd.f32 %v4695, %v4722
        %v4740 = vadd.f32 %v4696, %v4727
        %v4741 = vadd.f32 %v4697, %v4712
        %v4742 = vadd.f32 %v4698, %v4717
        %v4743 = vadd.f32 %v4699, %v4722
        %v4744 = vadd.f32 %v4700, %v4727
        %v4745 = vadd.f32 %v4701, %v4712
        %v4746 = vadd.f32 %v4702, %v4717
        %v4747 = vadd.f32 %v4703, %v4722
        %v4748 = vadd.f32 %v4704, %v4727
        %v4749 = vmax.f32 %v4729, 0.0
        %v4750 = vmax.f32 %v4730, 0.0
        %v4751 = vmax.f32 %v4731, 0.0
        %v4752 = vmax.f32 %v4732, 0.0
        %v4753 = vmax.f32 %v4733, 0.0
        %v4754 = vmax.f32 %v4734, 0.0
        %v4755 = vmax.f32 %v4735, 0.0
        %v4756 = vmax.f32 %v4736, 0.0
        %v4757 = vmax.f32 %v4737, 0.0
        %v4758 = vmax.f32 %v4738, 0.0
        %v4759 = vmax.f32 %v4739, 0.0
        %v4760 = vmax.f32 %v4740, 0.0
        %v4761 = vmax.f32 %v4741, 0.0
        %v4762 = vmax.f32 %v4742, 0.0
        %v4763 = vmax.f32 %v4743, 0.0
        %v4764 = vmax.f32 %v4744, 0.0
        %v4765 = vmax.f32 %v4745, 0.0
        %v4766 = vmax.f32 %v4746, 0.0
        %v4767 = vmax.f32 %v4747, 0.0
        %v4768 = vmax.f32 %v4748, 0.0
        %v4769 = vmin.f32 %v4749, 20.0
        %v4770 = vmin.f32 %v4750, 20.0
        %v4771 = vmin.f32 %v4751, 20.0
        %v4772 = vmin.f32 %v4752, 20.0
        %v4773 = vmin.f32 %v4753, 20.0
        %v4774 = vmin.f32 %v4754, 20.0
        %v4775 = vmin.f32 %v4755, 20.0
        %v4776 = vmin.f32 %v4756, 20.0
        %v4777 = vmin.f32 %v4757, 20.0
        %v4778 = vmin.f32 %v4758, 20.0
        %v4779 = vmin.f32 %v4759, 20.0
        %v4780 = vmin.f32 %v4760, 20.0
        %v4781 = vmin.f32 %v4761, 20.0
        %v4782 = vmin.f32 %v4762, 20.0
        %v4783 = vmin.f32 %v4763, 20.0
        %v4784 = vmin.f32 %v4764, 20.0
        %v4785 = vmin.f32 %v4765, 20.0
        %v4786 = vmin.f32 %v4766, 20.0
        %v4787 = vmin.f32 %v4767, 20.0
        %v4788 = vmin.f32 %v4768, 20.0
        %v4789 = vpack.c.bf16 %v4770, %v4769
        %v4790 = vpack.c.bf16 %v4772, %v4771
        %v4791 = vpack.c.bf16 %v4774, %v4773
        %v4792 = vpack.c.bf16 %v4776, %v4775
        %v4793 = vpack.c.bf16 %v4778, %v4777
        %v4794 = vpack.c.bf16 %v4780, %v4779
        %v4795 = vpack.c.bf16 %v4782, %v4781
        %v4796 = vpack.c.bf16 %v4784, %v4783
        %v4797 = vpack.c.bf16 %v4786, %v4785
        %v4798 = vpack.c.bf16 %v4788, %v4787
        %4799 = vst.msk [vmem:[#allocation2 + $0xf0] sm:$0xff] %vm1222, %v4789
        %4800 = vst.msk [vmem:[#allocation2 + $0xf8] sm:$0xff] %vm1222, %v4790
        %4801 = vst.msk [vmem:[#allocation2 + $0x100] sm:$0xff] %vm1222, %v4791
        %4802 = vst.msk [vmem:[#allocation2 + $0x108] sm:$0xff] %vm1222, %v4792
        %4803 = vst.msk [vmem:[#allocation2 + $0x110] sm:$0xff] %vm1222, %v4793
        %4804 = vst.msk [vmem:[#allocation2 + $0x118] sm:$0xff] %vm1222, %v4794
        %4805 = vst.msk [vmem:[#allocation2 + $0x120] sm:$0xff] %vm1222, %v4795
        %4806 = vst.msk [vmem:[#allocation2 + $0x128] sm:$0xff] %vm1222, %v4796
        %4807 = vst.msk [vmem:[#allocation2 + $0x130] sm:$0xff] %vm1222, %v4797
        %4808 = vst.msk [vmem:[#allocation2 + $0x138] sm:$0xff] %vm1222, %v4798
        %v4809 = vld [vmem:[#allocation2] sm:$0xff]
        %v4810 = vld [vmem:[#allocation2 + $0x8] sm:$0xff]
        %v4811 = vld [vmem:[#allocation2 + $0x10] sm:$0xff]
        %v4812 = vld [vmem:[#allocation2 + $0x18] sm:$0xff]
        %v4813 = vld [vmem:[#allocation2 + $0x20] sm:$0xff]
        %v4814 = vld [vmem:[#allocation2 + $0x28] sm:$0xff]
        %v4815 = vld [vmem:[#allocation2 + $0x30] sm:$0xff]
        %v4816 = vld [vmem:[#allocation2 + $0x38] sm:$0xff]
        %v4817 = vld [vmem:[#allocation2 + $0x40] sm:$0xff]
        %v4818 = vld [vmem:[#allocation2 + $0x48] sm:$0xff]
        %v4819 = vld [vmem:[#allocation2 + $0x50] sm:$0xff]
        %v4820 = vld [vmem:[#allocation2 + $0x58] sm:$0xff]
        %v4821 = vld [vmem:[#allocation2 + $0x60] sm:$0xff]
        %v4822 = vld [vmem:[#allocation2 + $0x68] sm:$0xff]
        %v4823 = vld [vmem:[#allocation2 + $0x70] sm:$0xff]
        %v4824 = vld [vmem:[#allocation2 + $0x78] sm:$0xff]
        %v4825 = vld [vmem:[#allocation2 + $0x80] sm:$0xff]
        %v4826 = vld [vmem:[#allocation2 + $0x88] sm:$0xff]
        %v4827 = vld [vmem:[#allocation2 + $0x90] sm:$0xff]
        %v4828 = vld [vmem:[#allocation2 + $0x98] sm:$0xff]
        %v4829 = vld [vmem:[#allocation2 + $0xa0] sm:$0xff]
        %v4830 = vld [vmem:[#allocation2 + $0xa8] sm:$0xff]
        %v4831 = vld [vmem:[#allocation2 + $0xb0] sm:$0xff]
        %v4832 = vld [vmem:[#allocation2 + $0xb8] sm:$0xff]
        %v4833 = vld [vmem:[#allocation2 + $0xc0] sm:$0xff]
        %v4834 = vld [vmem:[#allocation2 + $0xc8] sm:$0xff]
        %v4835 = vld [vmem:[#allocation2 + $0xd0] sm:$0xff]
        %v4836 = vld [vmem:[#allocation2 + $0xd8] sm:$0xff]
        %v4837 = vld [vmem:[#allocation2 + $0xe0] sm:$0xff]
        %v4838 = vld [vmem:[#allocation2 + $0xe8] sm:$0xff]
        %v4839 = vld [vmem:[#allocation2 + $0xf0] sm:$0xff]
        %v4840 = vld [vmem:[#allocation2 + $0xf8] sm:$0xff]
        %v4841 = vld [vmem:[#allocation2 + $0x100] sm:$0xff]
        %v4842 = vld [vmem:[#allocation2 + $0x108] sm:$0xff]
        %v4843 = vld [vmem:[#allocation2 + $0x110] sm:$0xff]
        %v4844 = vld [vmem:[#allocation2 + $0x118] sm:$0xff]
        %v4845 = vld [vmem:[#allocation2 + $0x120] sm:$0xff]
        %v4846 = vld [vmem:[#allocation2 + $0x128] sm:$0xff]
        %v4847 = vld [vmem:[#allocation2 + $0x130] sm:$0xff]
        %v4848 = vld [vmem:[#allocation2 + $0x138] sm:$0xff]
        %v4849 = vld [vmem:[#allocation2 + $0x140] sm:$0xff]
        %v4850 = vld [vmem:[#allocation2 + $0x148] sm:$0xff]
        %v4851 = vld [vmem:[#allocation2 + $0x150] sm:$0xff]
        %v4852 = vld [vmem:[#allocation2 + $0x158] sm:$0xff]
        %v4853 = vld [vmem:[#allocation2 + $0x160] sm:$0xff]
        %v4854 = vld [vmem:[#allocation2 + $0x168] sm:$0xff]
        %v4855 = vld [vmem:[#allocation2 + $0x170] sm:$0xff]
        %v4856 = vld [vmem:[#allocation2 + $0x178] sm:$0xff]
        %v4857 = vld [vmem:[#allocation2 + $0x180] sm:$0xff]
        %v4858 = vld [vmem:[#allocation2 + $0x188] sm:$0xff]
        %v4859 = vld [vmem:[#allocation2 + $0x190] sm:$0xff]
        %v4860 = vld [vmem:[#allocation2 + $0x198] sm:$0xff]
        %v4861 = vld [vmem:[#allocation2 + $0x1a0] sm:$0xff]
        %v4862 = vld [vmem:[#allocation2 + $0x1a8] sm:$0xff]
        %v4863 = vld [vmem:[#allocation2 + $0x1b0] sm:$0xff]
        %v4864 = vld [vmem:[#allocation2 + $0x1b8] sm:$0xff]
        %v4865 = vld [vmem:[#allocation2 + $0x1c0] sm:$0xff]
        %v4866 = vld [vmem:[#allocation2 + $0x1c8] sm:$0xff]
        %v4867 = vld [vmem:[#allocation2 + $0x1d0] sm:$0xff]
        %v4868 = vld [vmem:[#allocation2 + $0x1d8] sm:$0xff]
        %v4869 = vld [vmem:[%s3] sm:$0xf]
        %v4870 = vld [vmem:[%s3 + $0x4] sm:$0xf]
        %v4871 = vld [vmem:[%s3 + $0x8] sm:$0xf]
        %v4872 = vld [vmem:[%s3 + $0xc] sm:$0xf]
        %v4873 = vld [vmem:[%s3 + $0x10] sm:$0xf]
        %v4874 = vld [vmem:[%s3 + $0x14] sm:$0xf]
        %v4875 = vld [vmem:[%s3 + $0x18] sm:$0xf]
        %v4876 = vld [vmem:[%s3 + $0x1c] sm:$0xf]
        %v4877 = vld [vmem:[%s3 + $0x20] sm:$0xf]
        %v4878 = vld [vmem:[%s3 + $0x24] sm:$0xf]
        %v4879 = vld [vmem:[%s3 + $0x28] sm:$0xf]
        %v4880 = vld [vmem:[%s3 + $0x2c] sm:$0xf]
        %v4881 = vld [vmem:[%s3 + $0x30] sm:$0xf]
        %v4882 = vld [vmem:[%s3 + $0x34] sm:$0xf]
        %v4883 = vld [vmem:[%s3 + $0x38] sm:$0xf]
        %v4884 = vld [vmem:[%s3 + $0x3c] sm:$0xf]
        %v4885 = vld [vmem:[%s3 + $0x40] sm:$0xf]
        %v4886 = vld [vmem:[%s3 + $0x44] sm:$0xf]
        %v4887 = vld [vmem:[%s3 + $0x48] sm:$0xf]
        %v4888 = vld [vmem:[%s3 + $0x4c] sm:$0xf]
        %v4889 = vld [vmem:[%s3 + $0x50] sm:$0xf]
        %v4890 = vld [vmem:[%s3 + $0x54] sm:$0xf]
        %v4891 = vld [vmem:[%s3 + $0x58] sm:$0xf]
        %v4892 = vld [vmem:[%s3 + $0x5c] sm:$0xf]
        %v4893 = vld [vmem:[%s3 + $0x60] sm:$0xf]
        %v4894 = vld [vmem:[%s3 + $0x64] sm:$0xf]
        %v4895 = vld [vmem:[%s3 + $0x68] sm:$0xf]
        %v4896 = vld [vmem:[%s3 + $0x6c] sm:$0xf]
        %v4897 = vld [vmem:[%s3 + $0x70] sm:$0xf]
        %v4898 = vld [vmem:[%s3 + $0x74] sm:$0xf]
        %v4899 = vld [vmem:[%s3 + $0x78] sm:$0xf]
        %v4900 = vld [vmem:[%s3 + $0x7c] sm:$0xf]
        %v4901 = vld [vmem:[%s3 + $0x80] sm:$0xf]
        %v4902 = vld [vmem:[%s3 + $0x84] sm:$0xf]
        %v4903 = vld [vmem:[%s3 + $0x88] sm:$0xf]
        %v4904 = vld [vmem:[%s3 + $0x8c] sm:$0xf]
        %v4905 = vld [vmem:[%s3 + $0x90] sm:$0xf]
        %v4906 = vld [vmem:[%s3 + $0x94] sm:$0xf]
        %v4907 = vld [vmem:[%s3 + $0x98] sm:$0xf]
        %v4908 = vld [vmem:[%s3 + $0x9c] sm:$0xf]
        %v4909 = vld [vmem:[%s3 + $0xa0] sm:$0xf]
        %v4910 = vld [vmem:[%s3 + $0xa4] sm:$0xf]
        %v4911 = vld [vmem:[%s3 + $0xa8] sm:$0xf]
        %v4912 = vld [vmem:[%s3 + $0xac] sm:$0xf]
        %v4913 = vld [vmem:[%s3 + $0xb0] sm:$0xf]
        %v4914 = vld [vmem:[%s3 + $0xb4] sm:$0xf]
        %v4915 = vld [vmem:[%s3 + $0xb8] sm:$0xf]
        %v4916 = vld [vmem:[%s3 + $0xbc] sm:$0xf]
        %v4917 = vld [vmem:[%s3 + $0xc0] sm:$0xf]
        %v4918 = vld [vmem:[%s3 + $0xc4] sm:$0xf]
        %v4919 = vld [vmem:[%s3 + $0xc8] sm:$0xf]
        %v4920 = vld [vmem:[%s3 + $0xcc] sm:$0xf]
        %v4921 = vld [vmem:[%s3 + $0xd0] sm:$0xf]
        %v4922 = vld [vmem:[%s3 + $0xd4] sm:$0xf]
        %v4923 = vld [vmem:[%s3 + $0xd8] sm:$0xf]
        %v4924 = vld [vmem:[%s3 + $0xdc] sm:$0xf]
        %v4925 = vld [vmem:[%s3 + $0xe0] sm:$0xf]
        %v4926 = vld [vmem:[%s3 + $0xe4] sm:$0xf]
        %v4927 = vld [vmem:[%s3 + $0xe8] sm:$0xf]
        %v4928 = vld [vmem:[%s3 + $0xec] sm:$0xf]
        %v4929 = vld [vmem:[%s3 + $0xf0] sm:$0xf]
        %v4930 = vld [vmem:[%s3 + $0xf4] sm:$0xf]
        %v4931 = vld [vmem:[%s3 + $0xf8] sm:$0xf]
        %v4932 = vld [vmem:[%s3 + $0xfc] sm:$0xf]
        %v4933 = vld [vmem:[%s3 + $0x100] sm:$0xf]
        %v4934 = vld [vmem:[%s3 + $0x104] sm:$0xf]
        %v4935 = vld [vmem:[%s3 + $0x108] sm:$0xf]
        %v4936 = vld [vmem:[%s3 + $0x10c] sm:$0xf]
        %v4937 = vld [vmem:[%s3 + $0x110] sm:$0xf]
        %v4938 = vld [vmem:[%s3 + $0x114] sm:$0xf]
        %v4939 = vld [vmem:[%s3 + $0x118] sm:$0xf]
        %v4940 = vld [vmem:[%s3 + $0x11c] sm:$0xf]
        %v4941 = vld [vmem:[%s3 + $0x120] sm:$0xf]
        %v4942 = vld [vmem:[%s3 + $0x124] sm:$0xf]
        %v4943 = vld [vmem:[%s3 + $0x128] sm:$0xf]
        %v4944 = vld [vmem:[%s3 + $0x12c] sm:$0xf]
        %v4945 = vld [vmem:[%s3 + $0x130] sm:$0xf]
        %v4946 = vld [vmem:[%s3 + $0x134] sm:$0xf]
        %v4947 = vld [vmem:[%s3 + $0x138] sm:$0xf]
        %v4948 = vld [vmem:[%s3 + $0x13c] sm:$0xf]
        %v4949 = vld [vmem:[%s3 + $0x140] sm:$0xf]
        %v4950 = vld [vmem:[%s3 + $0x144] sm:$0xf]
        %v4951 = vld [vmem:[%s3 + $0x148] sm:$0xf]
        %v4952 = vld [vmem:[%s3 + $0x14c] sm:$0xf]
        %v4953 = vld [vmem:[%s3 + $0x150] sm:$0xf]
        %v4954 = vld [vmem:[%s3 + $0x154] sm:$0xf]
        %v4955 = vld [vmem:[%s3 + $0x158] sm:$0xf]
        %v4956 = vld [vmem:[%s3 + $0x15c] sm:$0xf]
        %v4957 = vld [vmem:[%s3 + $0x160] sm:$0xf]
        %v4958 = vld [vmem:[%s3 + $0x164] sm:$0xf]
        %v4959 = vld [vmem:[%s3 + $0x168] sm:$0xf]
        %v4960 = vld [vmem:[%s3 + $0x16c] sm:$0xf]
        %v4961 = vld [vmem:[%s3 + $0x170] sm:$0xf]
        %v4962 = vld [vmem:[%s3 + $0x174] sm:$0xf]
        %v4963 = vld [vmem:[%s3 + $0x178] sm:$0xf]
        %v4964 = vld [vmem:[%s3 + $0x17c] sm:$0xf]
        %v4965 = vld [vmem:[%s3 + $0x180] sm:$0xf]
        %v4966 = vld [vmem:[%s3 + $0x184] sm:$0xf]
        %v4967 = vld [vmem:[%s3 + $0x188] sm:$0xf]
        %v4968 = vld [vmem:[%s3 + $0x18c] sm:$0xf]
        %v4969 = vld [vmem:[%s3 + $0x190] sm:$0xf]
        %v4970 = vld [vmem:[%s3 + $0x194] sm:$0xf]
        %v4971 = vld [vmem:[%s3 + $0x198] sm:$0xf]
        %v4972 = vld [vmem:[%s3 + $0x19c] sm:$0xf]
        %v4973 = vld [vmem:[%s3 + $0x1a0] sm:$0xf]
        %v4974 = vld [vmem:[%s3 + $0x1a4] sm:$0xf]
        %v4975 = vld [vmem:[%s3 + $0x1a8] sm:$0xf]
        %v4976 = vld [vmem:[%s3 + $0x1ac] sm:$0xf]
        %v4977 = vld [vmem:[%s3 + $0x1b0] sm:$0xf]
        %v4978 = vld [vmem:[%s3 + $0x1b4] sm:$0xf]
        %v4979 = vld [vmem:[%s3 + $0x1b8] sm:$0xf]
        %v4980 = vld [vmem:[%s3 + $0x1bc] sm:$0xf]
        %v4981 = vld [vmem:[%s3 + $0x1c0] sm:$0xf]
        %v4982 = vld [vmem:[%s3 + $0x1c4] sm:$0xf]
        %v4983 = vld [vmem:[%s3 + $0x1c8] sm:$0xf]
        %v4984 = vld [vmem:[%s3 + $0x1cc] sm:$0xf]
        %v4985 = vld [vmem:[%s3 + $0x1d0] sm:$0xf]
        %v4986 = vld [vmem:[%s3 + $0x1d4] sm:$0xf]
        %v4987 = vld [vmem:[%s3 + $0x1d8] sm:$0xf]
        %v4988 = vld [vmem:[%s3 + $0x1dc] sm:$0xf]
        %v4989 = vld [vmem:[%s4] sm:$0x1]
        %v4991 = vlaneseq
        %v4992 = vshrl.u32 %v4991, 7
        %v4993 = vsub.s32 0, %v4992
        %v4994 = vrot.slane %v4989, %v4993
        %4996 = vxpose.xlu0.c.b16.start [1/8] %v4809, 128
        %4997 = vxpose.xlu0.c.b16.cont [2/8] %v4810, 128
        %4998 = vxpose.xlu0.c.b16.cont [3/8] %v4811, 128
        %4999 = vxpose.xlu0.c.b16.cont [4/8] %v4812, 128
        %5000 = vxpose.xlu0.c.b16.cont [5/8] %v4813, 128
        %5001 = vxpose.xlu0.c.b16.cont [6/8] %v4814, 128
        %5002 = vxpose.xlu0.c.b16.cont [7/8] %v4815, 128
        %5003 = vxpose.xlu0.c.b16.end [8/8] %v4816, 128
        %v5004 = vpop.trf.xlu0
        %v5005 = vpop.trf.xlu0
        %v5006 = vpop.trf.xlu0
        %v5007 = vpop.trf.xlu0
        %v5008 = vpop.trf.xlu0
        %v5009 = vpop.trf.xlu0
        %v5010 = vpop.trf.xlu0
        %v5011 = vpop.trf.xlu0
        %5012 = vxpose.xlu0.c.b16.start [1/8] %v4817, 128
        %5013 = vxpose.xlu0.c.b16.cont [2/8] %v4818, 128
        %5014 = vxpose.xlu0.c.b16.cont [3/8] %v4819, 128
        %5015 = vxpose.xlu0.c.b16.cont [4/8] %v4820, 128
        %5016 = vxpose.xlu0.c.b16.cont [5/8] %v4821, 128
        %5017 = vxpose.xlu0.c.b16.cont [6/8] %v4822, 128
        %5018 = vxpose.xlu0.c.b16.cont [7/8] %v4823, 128
        %5019 = vxpose.xlu0.c.b16.end [8/8] %v4824, 128
        %v5020 = vpop.trf.xlu0
        %v5021 = vpop.trf.xlu0
        %v5022 = vpop.trf.xlu0
        %v5023 = vpop.trf.xlu0
        %v5024 = vpop.trf.xlu0
        %v5025 = vpop.trf.xlu0
        %v5026 = vpop.trf.xlu0
        %v5027 = vpop.trf.xlu0
        %5028 = vxpose.xlu0.c.b16.start [1/8] %v4825, 128
        %5029 = vxpose.xlu0.c.b16.cont [2/8] %v4826, 128
        %5030 = vxpose.xlu0.c.b16.cont [3/8] %v4827, 128
        %5031 = vxpose.xlu0.c.b16.cont [4/8] %v4828, 128
        %5032 = vxpose.xlu0.c.b16.cont [5/8] %v4829, 128
        %5033 = vxpose.xlu0.c.b16.cont [6/8] %v4830, 128
        %5034 = vxpose.xlu0.c.b16.cont [7/8] %v4831, 128
        %5035 = vxpose.xlu0.c.b16.end [8/8] %v4832, 128
        %v5036 = vpop.trf.xlu0
        %v5037 = vpop.trf.xlu0
        %v5038 = vpop.trf.xlu0
        %v5039 = vpop.trf.xlu0
        %v5040 = vpop.trf.xlu0
        %v5041 = vpop.trf.xlu0
        %v5042 = vpop.trf.xlu0
        %v5043 = vpop.trf.xlu0
        %5044 = vxpose.xlu0.c.b16.start [1/8] %v4833, 128
        %5045 = vxpose.xlu0.c.b16.cont [2/8] %v4834, 128
        %5046 = vxpose.xlu0.c.b16.cont [3/8] %v4835, 128
        %5047 = vxpose.xlu0.c.b16.cont [4/8] %v4836, 128
        %5048 = vxpose.xlu0.c.b16.cont [5/8] %v4837, 128
        %5049 = vxpose.xlu0.c.b16.cont [6/8] %v4838, 128
        %5050 = vxpose.xlu0.c.b16.cont [7/8] %v4839, 128
        %5051 = vxpose.xlu0.c.b16.end [8/8] %v4840, 128
        %v5052 = vpop.trf.xlu0
        %v5053 = vpop.trf.xlu0
        %v5054 = vpop.trf.xlu0
        %v5055 = vpop.trf.xlu0
        %v5056 = vpop.trf.xlu0
        %v5057 = vpop.trf.xlu0
        %v5058 = vpop.trf.xlu0
        %v5059 = vpop.trf.xlu0
        %5060 = vxpose.xlu0.c.b16.start [1/8] %v4841, 128
        %5061 = vxpose.xlu0.c.b16.cont [2/8] %v4842, 128
        %5062 = vxpose.xlu0.c.b16.cont [3/8] %v4843, 128
        %5063 = vxpose.xlu0.c.b16.cont [4/8] %v4844, 128
        %5064 = vxpose.xlu0.c.b16.cont [5/8] %v4845, 128
        %5065 = vxpose.xlu0.c.b16.cont [6/8] %v4846, 128
        %5066 = vxpose.xlu0.c.b16.cont [7/8] %v4847, 128
        %5067 = vxpose.xlu0.c.b16.end [8/8] %v4848, 128
        %v5068 = vpop.trf.xlu0
        %v5069 = vpop.trf.xlu0
        %v5070 = vpop.trf.xlu0
        %v5071 = vpop.trf.xlu0
        %v5072 = vpop.trf.xlu0
        %v5073 = vpop.trf.xlu0
        %v5074 = vpop.trf.xlu0
        %v5075 = vpop.trf.xlu0
        %5076 = vxpose.xlu0.c.b16.start [1/8] %v4849, 128
        %5077 = vxpose.xlu0.c.b16.cont [2/8] %v4850, 128
        %5078 = vxpose.xlu0.c.b16.cont [3/8] %v4851, 128
        %5079 = vxpose.xlu0.c.b16.cont [4/8] %v4852, 128
        %5080 = vxpose.xlu0.c.b16.cont [5/8] %v4853, 128
        %5081 = vxpose.xlu0.c.b16.cont [6/8] %v4854, 128
        %5082 = vxpose.xlu0.c.b16.cont [7/8] %v4855, 128
        %5083 = vxpose.xlu0.c.b16.end [8/8] %v4856, 128
        %v5084 = vpop.trf.xlu0
        %v5085 = vpop.trf.xlu0
        %v5086 = vpop.trf.xlu0
        %v5087 = vpop.trf.xlu0
        %v5088 = vpop.trf.xlu0
        %v5089 = vpop.trf.xlu0
        %v5090 = vpop.trf.xlu0
        %v5091 = vpop.trf.xlu0
        %5092 = vxpose.xlu0.c.b16.start [1/8] %v4857, 128
        %5093 = vxpose.xlu0.c.b16.cont [2/8] %v4858, 128
        %5094 = vxpose.xlu0.c.b16.cont [3/8] %v4859, 128
        %5095 = vxpose.xlu0.c.b16.cont [4/8] %v4860, 128
        %5096 = vxpose.xlu0.c.b16.cont [5/8] %v4861, 128
        %5097 = vxpose.xlu0.c.b16.cont [6/8] %v4862, 128
        %5098 = vxpose.xlu0.c.b16.cont [7/8] %v4863, 128
        %5099 = vxpose.xlu0.c.b16.end [8/8] %v4864, 128
        %v5100 = vpop.trf.xlu0
        %v5101 = vpop.trf.xlu0
        %v5102 = vpop.trf.xlu0
        %v5103 = vpop.trf.xlu0
        %v5104 = vpop.trf.xlu0
        %v5105 = vpop.trf.xlu0
        %v5106 = vpop.trf.xlu0
        %v5107 = vpop.trf.xlu0
        %5108 = vxpose.xlu0.c.b16.start [1/8] %v4865, 128
        %5109 = vxpose.xlu0.c.b16.cont [2/8] %v4866, 128
        %5110 = vxpose.xlu0.c.b16.cont [3/8] %v4867, 128
        %5111 = vxpose.xlu0.c.b16.cont [4/8] %v4868, 128
        %5112 = vxpose.xlu0.c.b16.cont [5/8] 0, 128
        %5113 = vxpose.xlu0.c.b16.cont [6/8] 0, 128
        %5114 = vxpose.xlu0.c.b16.cont [7/8] 0, 128
        %5115 = vxpose.xlu0.c.b16.end [8/8] 0, 128
        %v5116 = vpop.trf.xlu0
        %v5117 = vpop.trf.xlu0
        %v5118 = vpop.trf.xlu0
        %v5119 = vpop.trf.xlu0
        %v5120 = vpop.trf.xlu0
        %v5121 = vpop.trf.xlu0
        %v5122 = vpop.trf.xlu0
        %v5123 = vpop.trf.xlu0
        %v5244 = vunpack.c.l.b16 %v4869
        %v5245 = vunpack.c.l.b16 %v4870
        %v5246 = vunpack.c.l.b16 %v4871
        %v5247 = vunpack.c.l.b16 %v4872
        %v5248 = vunpack.c.l.b16 %v4873
        %v5249 = vunpack.c.l.b16 %v4874
        %v5250 = vunpack.c.l.b16 %v4875
        %v5251 = vunpack.c.l.b16 %v4876
        %v5252 = vunpack.c.l.b16 %v4877
        %v5253 = vunpack.c.l.b16 %v4878
        %v5254 = vunpack.c.l.b16 %v4879
        %v5255 = vunpack.c.l.b16 %v4880
        %v5256 = vunpack.c.l.b16 %v4881
        %v5257 = vunpack.c.l.b16 %v4882
        %v5258 = vunpack.c.l.b16 %v4883
        %v5259 = vunpack.c.l.b16 %v4884
        %v5260 = vunpack.c.l.b16 %v4885
        %v5261 = vunpack.c.l.b16 %v4886
        %v5262 = vunpack.c.l.b16 %v4887
        %v5263 = vunpack.c.l.b16 %v4888
        %v5264 = vunpack.c.l.b16 %v4889
        %v5265 = vunpack.c.l.b16 %v4890
        %v5266 = vunpack.c.l.b16 %v4891
        %v5267 = vunpack.c.l.b16 %v4892
        %v5268 = vunpack.c.l.b16 %v4893
        %v5269 = vunpack.c.l.b16 %v4894
        %v5270 = vunpack.c.l.b16 %v4895
        %v5271 = vunpack.c.l.b16 %v4896
        %v5272 = vunpack.c.l.b16 %v4897
        %v5273 = vunpack.c.l.b16 %v4898
        %v5274 = vunpack.c.l.b16 %v4899
        %v5275 = vunpack.c.l.b16 %v4900
        %v5276 = vunpack.c.l.b16 %v4901
        %v5277 = vunpack.c.l.b16 %v4902
        %v5278 = vunpack.c.l.b16 %v4903
        %v5279 = vunpack.c.l.b16 %v4904
        %v5280 = vunpack.c.l.b16 %v4905
        %v5281 = vunpack.c.l.b16 %v4906
        %v5282 = vunpack.c.l.b16 %v4907
        %v5283 = vunpack.c.l.b16 %v4908
        %v5284 = vunpack.c.l.b16 %v4909
        %v5285 = vunpack.c.l.b16 %v4910
        %v5286 = vunpack.c.l.b16 %v4911
        %v5287 = vunpack.c.l.b16 %v4912
        %v5288 = vunpack.c.l.b16 %v4913
        %v5289 = vunpack.c.l.b16 %v4914
        %v5290 = vunpack.c.l.b16 %v4915
        %v5291 = vunpack.c.l.b16 %v4916
        %v5292 = vunpack.c.l.b16 %v4917
        %v5293 = vunpack.c.l.b16 %v4918
        %v5294 = vunpack.c.l.b16 %v4919
        %v5295 = vunpack.c.l.b16 %v4920
        %v5296 = vunpack.c.l.b16 %v4921
        %v5297 = vunpack.c.l.b16 %v4922
        %v5298 = vunpack.c.l.b16 %v4923
        %v5299 = vunpack.c.l.b16 %v4924
        %v5300 = vunpack.c.l.b16 %v4925
        %v5301 = vunpack.c.l.b16 %v4926
        %v5302 = vunpack.c.l.b16 %v4927
        %v5303 = vunpack.c.l.b16 %v4928
        %v5304 = vunpack.c.l.b16 %v4929
        %v5305 = vunpack.c.l.b16 %v4930
        %v5306 = vunpack.c.l.b16 %v4931
        %v5307 = vunpack.c.l.b16 %v4932
        %v5308 = vunpack.c.l.b16 %v4933
        %v5309 = vunpack.c.l.b16 %v4934
        %v5310 = vunpack.c.l.b16 %v4935
        %v5311 = vunpack.c.l.b16 %v4936
        %v5312 = vunpack.c.l.b16 %v4937
        %v5313 = vunpack.c.l.b16 %v4938
        %v5314 = vunpack.c.l.b16 %v4939
        %v5315 = vunpack.c.l.b16 %v4940
        %v5316 = vunpack.c.l.b16 %v4941
        %v5317 = vunpack.c.l.b16 %v4942
        %v5318 = vunpack.c.l.b16 %v4943
        %v5319 = vunpack.c.l.b16 %v4944
        %v5320 = vunpack.c.l.b16 %v4945
        %v5321 = vunpack.c.l.b16 %v4946
        %v5322 = vunpack.c.l.b16 %v4947
        %v5323 = vunpack.c.l.b16 %v4948
        %v5324 = vunpack.c.l.b16 %v4949
        %v5325 = vunpack.c.l.b16 %v4950
        %v5326 = vunpack.c.l.b16 %v4951
        %v5327 = vunpack.c.l.b16 %v4952
        %v5328 = vunpack.c.l.b16 %v4953
        %v5329 = vunpack.c.l.b16 %v4954
        %v5330 = vunpack.c.l.b16 %v4955
        %v5331 = vunpack.c.l.b16 %v4956
        %v5332 = vunpack.c.l.b16 %v4957
        %v5333 = vunpack.c.l.b16 %v4958
        %v5334 = vunpack.c.l.b16 %v4959
        %v5335 = vunpack.c.l.b16 %v4960
        %v5336 = vunpack.c.l.b16 %v4961
        %v5337 = vunpack.c.l.b16 %v4962
        %v5338 = vunpack.c.l.b16 %v4963
        %v5339 = vunpack.c.l.b16 %v4964
        %v5340 = vunpack.c.l.b16 %v4965
        %v5341 = vunpack.c.l.b16 %v4966
        %v5342 = vunpack.c.l.b16 %v4967
        %v5343 = vunpack.c.l.b16 %v4968
        %v5344 = vunpack.c.l.b16 %v4969
        %v5345 = vunpack.c.l.b16 %v4970
        %v5346 = vunpack.c.l.b16 %v4971
        %v5347 = vunpack.c.l.b16 %v4972
        %v5348 = vunpack.c.l.b16 %v4973
        %v5349 = vunpack.c.l.b16 %v4974
        %v5350 = vunpack.c.l.b16 %v4975
        %v5351 = vunpack.c.l.b16 %v4976
        %v5352 = vunpack.c.l.b16 %v4977
        %v5353 = vunpack.c.l.b16 %v4978
        %v5354 = vunpack.c.l.b16 %v4979
        %v5355 = vunpack.c.l.b16 %v4980
        %v5356 = vunpack.c.l.b16 %v4981
        %v5357 = vunpack.c.l.b16 %v4982
        %v5358 = vunpack.c.l.b16 %v4983
        %v5359 = vunpack.c.l.b16 %v4984
        %v5360 = vunpack.c.l.b16 %v4985
        %v5361 = vunpack.c.l.b16 %v4986
        %v5362 = vunpack.c.l.b16 %v4987
        %v5363 = vunpack.c.l.b16 %v4988
        %v5364 = vpack.c.b16 %v5245, %v5244
        %v5365 = vpack.c.b16 %v5247, %v5246
        %v5366 = vpack.c.b16 %v5249, %v5248
        %v5367 = vpack.c.b16 %v5251, %v5250
        %v5368 = vpack.c.b16 %v5253, %v5252
        %v5369 = vpack.c.b16 %v5255, %v5254
        %v5370 = vpack.c.b16 %v5257, %v5256
        %v5371 = vpack.c.b16 %v5259, %v5258
        %v5372 = vpack.c.b16 %v5261, %v5260
        %v5373 = vpack.c.b16 %v5263, %v5262
        %v5374 = vpack.c.b16 %v5265, %v5264
        %v5375 = vpack.c.b16 %v5267, %v5266
        %v5376 = vpack.c.b16 %v5269, %v5268
        %v5377 = vpack.c.b16 %v5271, %v5270
        %v5378 = vpack.c.b16 %v5273, %v5272
        %v5379 = vpack.c.b16 %v5275, %v5274
        %v5380 = vpack.c.b16 %v5277, %v5276
        %v5381 = vpack.c.b16 %v5279, %v5278
        %v5382 = vpack.c.b16 %v5281, %v5280
        %v5383 = vpack.c.b16 %v5283, %v5282
        %v5384 = vpack.c.b16 %v5285, %v5284
        %v5385 = vpack.c.b16 %v5287, %v5286
        %v5386 = vpack.c.b16 %v5289, %v5288
        %v5387 = vpack.c.b16 %v5291, %v5290
        %v5388 = vpack.c.b16 %v5293, %v5292
        %v5389 = vpack.c.b16 %v5295, %v5294
        %v5390 = vpack.c.b16 %v5297, %v5296
        %v5391 = vpack.c.b16 %v5299, %v5298
        %v5392 = vpack.c.b16 %v5301, %v5300
        %v5393 = vpack.c.b16 %v5303, %v5302
        %v5394 = vpack.c.b16 %v5305, %v5304
        %v5395 = vpack.c.b16 %v5307, %v5306
        %v5396 = vpack.c.b16 %v5309, %v5308
        %v5397 = vpack.c.b16 %v5311, %v5310
        %v5398 = vpack.c.b16 %v5313, %v5312
        %v5399 = vpack.c.b16 %v5315, %v5314
        %v5400 = vpack.c.b16 %v5317, %v5316
        %v5401 = vpack.c.b16 %v5319, %v5318
        %v5402 = vpack.c.b16 %v5321, %v5320
        %v5403 = vpack.c.b16 %v5323, %v5322
        %v5404 = vpack.c.b16 %v5325, %v5324
        %v5405 = vpack.c.b16 %v5327, %v5326
        %v5406 = vpack.c.b16 %v5329, %v5328
        %v5407 = vpack.c.b16 %v5331, %v5330
        %v5408 = vpack.c.b16 %v5333, %v5332
        %v5409 = vpack.c.b16 %v5335, %v5334
        %v5410 = vpack.c.b16 %v5337, %v5336
        %v5411 = vpack.c.b16 %v5339, %v5338
        %v5412 = vpack.c.b16 %v5341, %v5340
        %v5413 = vpack.c.b16 %v5343, %v5342
        %v5414 = vpack.c.b16 %v5345, %v5344
        %v5415 = vpack.c.b16 %v5347, %v5346
        %v5416 = vpack.c.b16 %v5349, %v5348
        %v5417 = vpack.c.b16 %v5351, %v5350
        %v5418 = vpack.c.b16 %v5353, %v5352
        %v5419 = vpack.c.b16 %v5355, %v5354
        %v5420 = vpack.c.b16 %v5357, %v5356
        %v5421 = vpack.c.b16 %v5359, %v5358
        %v5422 = vpack.c.b16 %v5361, %v5360
        %v5423 = vpack.c.b16 %v5363, %v5362
        %vm5484 = vcmask 523264
        %v5486 = vsel %vm5484, %v5116, 0
        %5488 = vmatprep.subr.bf16.mxu0 0
        %5489 = vmatpush1.bf16.msra.mxu0 %v5364
        %5490 = vmatprep.subr.bf16.mxu0 0
        %5491 = vmatpush1.bf16.msra.mxu0 %v5365
        %5492 = vmatprep.subr.bf16.mxu0 0
        %5493 = vmatpush1.bf16.msra.mxu0 %v5366
        %5494 = vmatprep.subr.bf16.mxu0 0
        %5495 = vmatpush1.bf16.msra.mxu0 %v5367
        %5496 = vmatprep.subr.bf16.mxu0 0
        %5497 = vmatpush1.bf16.msra.mxu0 %v5368
        %5498 = vmatprep.subr.bf16.mxu0 0
        %5499 = vmatpush1.bf16.msra.mxu0 %v5369
        %5500 = vmatprep.subr.bf16.mxu0 0
        %5501 = vmatpush1.bf16.msra.mxu0 %v5370
        %5502 = vmatprep.subr.bf16.mxu0 0
        %5503 = vmatpush1.bf16.msra.mxu0 %v5371
        %5504 = vmatprep.subr.bf16.mxu0 0
        %5505 = vmatpush1.bf16.msra.mxu0 %v5372
        %5506 = vmatprep.subr.bf16.mxu0 0
        %5507 = vmatpush1.bf16.msra.mxu0 %v5373
        %5508 = vmatprep.subr.bf16.mxu0 0
        %5509 = vmatpush1.bf16.msra.mxu0 %v5374
        %5510 = vmatprep.subr.bf16.mxu0 0
        %5511 = vmatpush1.bf16.msra.mxu0 %v5375
        %5512 = vmatprep.subr.bf16.mxu0 0
        %5513 = vmatpush1.bf16.msra.mxu0 %v5376
        %5514 = vmatprep.subr.bf16.mxu0 0
        %5515 = vmatpush1.bf16.msra.mxu0 %v5377
        %5516 = vmatprep.subr.bf16.mxu0 0
        %5517 = vmatpush1.bf16.msra.mxu0 %v5378
        %5518 = vmatprep.subr.bf16.mxu0 0
        %5519 = vmatpush1.bf16.msra.mxu0 %v5379
        %5520 = vmatprep.mubr.bf16.mxu0 %v5020
        %5521 = vmatmul.mubr.bf16.gmra.mrb[0].mxu0 %v5004
        %v5522 = vpop.f32.mrb[0].mxu0
        %v5523 = vadd.f32 %v4994, %v5522
        %v5524 = vpop.f32.mrb[0].mxu0
        %v5525 = vpop.f32.mrb[0].mxu0
        %v5526 = vpop.f32.mrb[0].mxu0
        %5527 = vdwg.mxu0
        %5528 = vmatprep.subr.bf16.mxu0 0
        %5529 = vmatpush1.bf16.msra.mxu0 %v5380
        %5530 = vmatprep.subr.bf16.mxu0 0
        %5531 = vmatpush1.bf16.msra.mxu0 %v5381
        %5532 = vmatprep.subr.bf16.mxu0 0
        %5533 = vmatpush1.bf16.msra.mxu0 %v5382
        %5534 = vmatprep.subr.bf16.mxu0 0
        %5535 = vmatpush1.bf16.msra.mxu0 %v5383
        %5536 = vmatprep.subr.bf16.mxu0 0
        %5537 = vmatpush1.bf16.msra.mxu0 %v5384
        %5538 = vmatprep.subr.bf16.mxu0 0
        %5539 = vmatpush1.bf16.msra.mxu0 %v5385
        %5540 = vmatprep.subr.bf16.mxu0 0
        %5541 = vmatpush1.bf16.msra.mxu0 %v5386
        %5542 = vmatprep.subr.bf16.mxu0 0
        %5543 = vmatpush1.bf16.msra.mxu0 %v5387
        %5544 = vmatprep.subr.bf16.mxu0 0
        %5545 = vmatpush1.bf16.msra.mxu0 %v5388
        %5546 = vmatprep.subr.bf16.mxu0 0
        %5547 = vmatpush1.bf16.msra.mxu0 %v5389
        %5548 = vmatprep.subr.bf16.mxu0 0
        %5549 = vmatpush1.bf16.msra.mxu0 %v5390
        %5550 = vmatprep.subr.bf16.mxu0 0
        %5551 = vmatpush1.bf16.msra.mxu0 %v5391
        %5552 = vmatprep.subr.bf16.mxu0 0
        %5553 = vmatpush1.bf16.msra.mxu0 %v5392
        %5554 = vmatprep.subr.bf16.mxu0 0
        %5555 = vmatpush1.bf16.msra.mxu0 %v5393
        %5556 = vmatprep.subr.bf16.mxu0 0
        %5557 = vmatpush1.bf16.msra.mxu0 %v5394
        %5558 = vmatprep.subr.bf16.mxu0 0
        %5559 = vmatpush1.bf16.msra.mxu0 %v5395
        %5560 = vmatprep.mubr.bf16.mxu0 %v5052
        %5561 = vmatmul.mubr.bf16.gmra.mrb[0].mxu0 %v5036
        %v5562 = vpop.f32.mrb[0].mxu0
        %v5563 = vadd.f32 %v5523, %v5562
        %v5564 = vpop.f32.mrb[0].mxu0
        %v5565 = vpop.f32.mrb[0].mxu0
        %v5566 = vpop.f32.mrb[0].mxu0
        %5567 = vdwg.mxu0
        %5568 = vmatprep.subr.bf16.mxu0 0
        %5569 = vmatpush1.bf16.msra.mxu0 %v5396
        %5570 = vmatprep.subr.bf16.mxu0 0
        %5571 = vmatpush1.bf16.msra.mxu0 %v5397
        %5572 = vmatprep.subr.bf16.mxu0 0
        %5573 = vmatpush1.bf16.msra.mxu0 %v5398
        %5574 = vmatprep.subr.bf16.mxu0 0
        %5575 = vmatpush1.bf16.msra.mxu0 %v5399
        %5576 = vmatprep.subr.bf16.mxu0 0
        %5577 = vmatpush1.bf16.msra.mxu0 %v5400
        %5578 = vmatprep.subr.bf16.mxu0 0
        %5579 = vmatpush1.bf16.msra.mxu0 %v5401
        %5580 = vmatprep.subr.bf16.mxu0 0
        %5581 = vmatpush1.bf16.msra.mxu0 %v5402
        %5582 = vmatprep.subr.bf16.mxu0 0
        %5583 = vmatpush1.bf16.msra.mxu0 %v5403
        %5584 = vmatprep.subr.bf16.mxu0 0
        %5585 = vmatpush1.bf16.msra.mxu0 %v5404
        %5586 = vmatprep.subr.bf16.mxu0 0
        %5587 = vmatpush1.bf16.msra.mxu0 %v5405
        %5588 = vmatprep.subr.bf16.mxu0 0
        %5589 = vmatpush1.bf16.msra.mxu0 %v5406
        %5590 = vmatprep.subr.bf16.mxu0 0
        %5591 = vmatpush1.bf16.msra.mxu0 %v5407
        %5592 = vmatprep.subr.bf16.mxu0 0
        %5593 = vmatpush1.bf16.msra.mxu0 %v5408
        %5594 = vmatprep.subr.bf16.mxu0 0
        %5595 = vmatpush1.bf16.msra.mxu0 %v5409
        %5596 = vmatprep.subr.bf16.mxu0 0
        %5597 = vmatpush1.bf16.msra.mxu0 %v5410
        %5598 = vmatprep.subr.bf16.mxu0 0
        %5599 = vmatpush1.bf16.msra.mxu0 %v5411
        %5600 = vmatprep.mubr.bf16.mxu0 %v5084
        %5601 = vmatmul.mubr.bf16.gmra.mrb[0].mxu0 %v5068
        %v5602 = vpop.f32.mrb[0].mxu0
        %v5603 = vadd.f32 %v5563, %v5602
        %v5604 = vpop.f32.mrb[0].mxu0
        %v5605 = vpop.f32.mrb[0].mxu0
        %v5606 = vpop.f32.mrb[0].mxu0
        %5607 = vdwg.mxu0
        %5608 = vmatprep.subr.bf16.mxu0 0
        %5609 = vmatpush1.bf16.msra.mxu0 %v5412
        %5610 = vmatprep.subr.bf16.mxu0 0
        %5611 = vmatpush1.bf16.msra.mxu0 %v5413
        %5612 = vmatprep.subr.bf16.mxu0 0
        %5613 = vmatpush1.bf16.msra.mxu0 %v5414
        %5614 = vmatprep.subr.bf16.mxu0 0
        %5615 = vmatpush1.bf16.msra.mxu0 %v5415
        %5616 = vmatprep.subr.bf16.mxu0 0
        %5617 = vmatpush1.bf16.msra.mxu0 %v5416
        %5618 = vmatprep.subr.bf16.mxu0 0
        %5619 = vmatpush1.bf16.msra.mxu0 %v5417
        %5620 = vmatprep.subr.bf16.mxu0 0
        %5621 = vmatpush1.bf16.msra.mxu0 %v5418
        %5622 = vmatprep.subr.bf16.mxu0 0
        %5623 = vmatpush1.bf16.msra.mxu0 %v5419
        %5624 = vmatprep.subr.bf16.mxu0 0
        %5625 = vmatpush1.bf16.msra.mxu0 %v5420
        %5626 = vmatprep.subr.bf16.mxu0 0
        %5627 = vmatpush1.bf16.msra.mxu0 %v5421
        %5628 = vmatprep.subr.bf16.mxu0 0
        %5629 = vmatpush1.bf16.msra.mxu0 %v5422
        %5630 = vmatprep.subr.bf16.mxu0 0
        %5631 = vmatpush1.bf16.msra.mxu0 %v5423
        %5632 = vmatprep.subr.bf16.mxu0 0
        %5633 = vmatpush1.bf16.msra.mxu0 0
        %5634 = vmatprep.subr.bf16.mxu0 0
        %5635 = vmatpush1.bf16.msra.mxu0 0
        %5636 = vmatprep.subr.bf16.mxu0 0
        %5637 = vmatpush1.bf16.msra.mxu0 0
        %5638 = vmatprep.subr.bf16.mxu0 0
        %5639 = vmatpush1.bf16.msra.mxu0 0
        %5640 = vmatprep.mubr.bf16.mxu0 %v5486
        %5641 = vmatmul.mubr.bf16.gmra.mrb[0].mxu0 %v5100
        %v5642 = vpop.f32.mrb[0].mxu0
        %v5643 = vadd.f32 %v5603, %v5642
        %v5644 = vpop.f32.mrb[0].mxu0
        %v5645 = vpop.f32.mrb[0].mxu0
        %v5646 = vpop.f32.mrb[0].mxu0
        %5647 = vdwg.mxu0
        %v5648 = vmax.f32 %v5643, 0.0
        %v5649 = vmin.f32 %v5648, 20.0
        %5650 = vst [vmem:[%s215] sm:$0xff] %v5649
        %s5651 = sand.u32 %s137, 1
        %s5652 = scalar_lea.sflag [#allocation4], %s5651
        %s5653 = sand.u32 %s137, 1
        %s5654 = smul.addr %s5653, 8
        %s5655 = scalar_lea.vmem [#allocation3], %s5654
        // Predicated region
        $region41: #{conv2d_extractor_forward.1} parent=39 // pred_check
          %p5656 = pneg %p147
        $region42: #{conv2d_extractor_forward.1} parent=39 // pred_check_branch
          %5658 = sbr.rel (%p5656) target = $region44
        $region43: #{conv2d_extractor_forward.1} parent=39 // pred_region
          %s5660 = ssub.s32 128, 128
          %5661 = vsyncadd %s5652, %s5660
          %s5662 = smul.addr %s19, 128
          %s5663 = scalar_lea.hbm %s5, %s5662
          %s5665 = sshll.u32 %s5655, 4
          %s5666 = int_to_ptr.vmem [resolvable:$true] %s5665
          %5668 = dma.vmem_to_hbm [thread:$0]  %s5666, 128, %s5663, %s5652
        $region44: #{conv2d_extractor_forward.1} parent=39 // pred_fallthru
          _
      $region40: #{conv2d_extractor_forward.1} parent=5 // pred_fallthru
        _
      %p5669 = scmp.le.s32.totalorder 2, %s14
      // Predicated region
      $region45: #{conv2d_extractor_forward.1} parent=5 // pred_check
        %p5670 = pneg %p5669
      $region46: #{conv2d_extractor_forward.1} parent=5 // pred_check_branch
        %5672 = sbr.rel (%p5670) target = $region48
      $region47: #{conv2d_extractor_forward.1} parent=5 // pred_region
        %s5673 = ssub.s32 %s14, 2
        // Predicated region
        $region49: #{conv2d_extractor_forward.1} parent=47 // pred_check
          %p5674 = pneg %p153
        $region50: #{conv2d_extractor_forward.1} parent=47 // pred_check_branch
          %5676 = sbr.rel (%p5674) target = $region52
        $region51: #{conv2d_extractor_forward.1} parent=47 // pred_region
          %s5677 = sand.u32 %s138, 1
          %s5678 = scalar_lea.sflag [#allocation4], %s5677
          %s5679 = sand.u32 %s138, 1
          %s5680 = smul.addr %s5679, 8
          %s5681 = scalar_lea.vmem [#allocation3], %s5680
          %5682 = dma.done %s5678, 128
        $region52: #{conv2d_extractor_forward.1} parent=47 // pred_fallthru
          _
      $region48: #{conv2d_extractor_forward.1} parent=5 // pred_fallthru
        _
    $region6: #{conv2d_extractor_forward.1} parent=1 // loop_footer
      %s18 = sadd.s32 1, %s14
    $region7: #{conv2d_extractor_forward.1} parent=1 // loop_footer_branch
      %13 = sbr.rel target = $region3
    $region8: #{conv2d_extractor_forward.1} parent=1 // loop_exit
      _
    %5683 = vsyncpa [#allocation4], 1
    %s5684 = scalar_lea.sflag [#allocation4], 1
    %5685 = vsyncpa %s5684, 1

</llo_original>
